<compile_context>
chip_gen: v7x
topology: tpu7x:2x2x1
jax: 0.10.0
libtpu: 0.0.40
codegen_flags: <defaults>
</compile_context>

<pallas_src>
import functools
import numpy as np
import jax
import jax.numpy as jnp
from jax import lax
from jax.experimental import pallas as pl
from jax.experimental.pallas import tpu as pltpu

LEAKY_SLOPE = 0.01   # F.leaky_relu default negative_slope
BN_EPS = 1e-5


def _leaky(x):
    return jnp.where(x >= 0, x, LEAKY_SLOPE * x)


# ------------------------------ fused kernel -------------------------------

def _bottleneck_kernel(xp_ref, mask_ref, w1_ref, b1_ref, w2_ref, b2_ref,
                       w3_ref, b3_ref, wsc_ref, o_ref, y1_scr,
                       *, stride, n_phase, n_rows, wo, margin):
    """One batch element per grid step.  All intermediates stay in VMEM.

    xp_ref : (1, P, Lp, Cin) bf16  phase-decomposed, spatially zero-padded,
                                   flattened input (Lp = (Ho+2)*(Wo+2)).
    y1_scr : (P, Lp + 2*margin, planes) f32 scratch holding the conv1 output
             per phase with zero margins, so every 3x3 tap is a contiguous
             Lp-row slice.
    o_ref  : (1, Lp, out_c) f32 output in the same padded-flat layout
             (wrapper strips the pad ring).
    """
    f32 = jnp.float32
    mask = mask_ref[...]                                   # (Lp, 1) f32
    w1 = w1_ref[...]                                       # (Cin, planes) bf16
    b1 = b1_ref[...]                                       # (1, planes) f32
    planes = w1.shape[1]

    # Margins + spatial pad rows must read back as exact zeros.
    y1_scr[...] = jnp.zeros_like(y1_scr)

    # ---- conv1 (1x1) + bn1 + leaky, per phase; also sum phases for shortcut.
    xsum = jnp.zeros((n_rows, xp_ref.shape[-1]), f32)
    for p in range(n_phase):
        xp = xp_ref[0, p]                                  # (Lp, Cin) bf16
        xsum = xsum + xp.astype(f32)
        y1 = jnp.dot(xp, w1, preferred_element_type=f32) + b1
        # mask zeroes the structural pad rows (bias + leaky would otherwise
        # make them non-zero and corrupt the 3x3 taps).
        y1_scr[p, pl.ds(margin, n_rows), :] = _leaky(y1) * mask

    # ---- conv2 (3x3, stride) + bn2 + leaky: 9 shifted matmuls on VMEM data.
    acc = jnp.zeros((n_rows, planes), f32)
    row_pitch = wo + 2                                     # padded row pitch
    for ky in range(3):
        for kx in range(3):
            dy, dx = ky - 1, kx - 1
            ay, ax = dy % stride, dx % stride
            qy, qx = (dy - ay) // stride, (dx - ax) // stride
            pidx = ay * stride + ax                        # which phase buffer
            src = margin + qy * row_pitch + qx             # static offset
            tap = y1_scr[pidx, pl.ds(src, n_rows), :].astype(jnp.bfloat16)
            acc = acc + jnp.dot(tap, w2_ref[ky * 3 + kx],
                                preferred_element_type=f32)
    y2 = _leaky(acc + b2_ref[...]).astype(jnp.bfloat16)

    # ---- conv3 (1x1) + bn3, shortcut (avg pool + channel pad) and final leaky.
    main = jnp.dot(y2, w3_ref[...], preferred_element_type=f32) + b3_ref[...]
    main = main + jnp.dot(xsum, wsc_ref[...], preferred_element_type=f32)
    o_ref[0] = _leaky(main).astype(o_ref.dtype)


# ------------------------------- JAX wrapper --------------------------------

def _fold_bn(gamma, beta, mean, var):
    scale = gamma / jnp.sqrt(var + BN_EPS)
    bias = beta - mean * scale
    return scale, bias


def bottleneck_forward(x_nchw, p, stride):
    N, Cin, H, W = x_nchw.shape
    planes = p["w1"].shape[0]
    out_c = p["w3"].shape[0]
    s = int(stride)
    # TODO(synk): stride>1 with odd spatial size (avg_pool2d(x,1,stride) path)
    # is not supported by the phase decomposition.
    assert H % s == 0 and W % s == 0
    Ho, Wo = H // s, W // s
    Lp = (Ho + 2) * (Wo + 2)                  # padded-flat rows per phase
    margin = ((Wo + 3 + 7) // 8) * 8          # 8-aligned, >= max |tap shift|
    Lm = Lp + 2 * margin
    P = s * s

    # One pass over the input: NHWC + phase decomposition + 1-pixel zero pad,
    # flattened per phase.  This tensor doubles as conv1 input and shortcut
    # source inside the kernel.
    x = jnp.transpose(x_nchw, (0, 2, 3, 1)).astype(jnp.float32)       # NHWC
    xp = x.reshape(N, Ho, s, Wo, s, Cin)
    xp = jnp.transpose(xp, (0, 2, 4, 1, 3, 5))                        # (N,s,s,Ho,Wo,C)
    xp = jnp.pad(xp, ((0, 0), (0, 0), (0, 0), (1, 1), (1, 1), (0, 0)))
    xp = xp.reshape(N, P, Lp, Cin).astype(jnp.bfloat16)

    # Interior-row mask in the padded-flat layout.
    mask = jnp.pad(jnp.ones((Ho, Wo), jnp.float32),
                   ((1, 1), (1, 1))).reshape(Lp, 1)

    # Fold BN scales into the conv weights; keep only a bias in the epilogue.
    s1, b1 = _fold_bn(p["g1"], p["b1"], p["m1"], p["v1"])
    s2, b2 = _fold_bn(p["g2"], p["b2"], p["m2"], p["v2"])
    s3, b3 = _fold_bn(p["g3"], p["b3"], p["m3"], p["v3"])

    w1 = (p["w1"][:, :, 0, 0].T * s1[None, :]).astype(jnp.bfloat16)   # (Cin, planes)
    w2 = jnp.transpose(p["w2"], (2, 3, 1, 0)).reshape(9, planes, planes)
    w2 = (w2 * s2[None, None, :]).astype(jnp.bfloat16)                # (9, I, O)
    w3 = (p["w3"][:, :, 0, 0].T * s3[None, :]).astype(jnp.bfloat16)   # (planes, out_c)

    # Shortcut folded into a (Cin, out_c) matmul on the per-phase sum of x:
    # diag = 1/P realizes the stride-s average pool (identity when stride==1),
    # zero columns realize the channel zero-pad.
    wsc = jnp.zeros((Cin, out_c), jnp.float32)
    wsc = wsc.at[jnp.arange(Cin), jnp.arange(Cin)].set(1.0 / P)

    kernel = functools.partial(_bottleneck_kernel, stride=s, n_phase=P,
                               n_rows=Lp, wo=Wo, margin=margin)

    y = pl.pallas_call(
        kernel,
        out_shape=jax.ShapeDtypeStruct((N, Lp, out_c), jnp.float32),
        grid=(N,),
        in_specs=[
            pl.BlockSpec((1, P, Lp, Cin), lambda n: (n, 0, 0, 0)),
            pl.BlockSpec((Lp, 1), lambda n: (0, 0)),
            pl.BlockSpec((Cin, planes), lambda n: (0, 0)),
            pl.BlockSpec((1, planes), lambda n: (0, 0)),
            pl.BlockSpec((9, planes, planes), lambda n: (0, 0, 0)),
            pl.BlockSpec((1, planes), lambda n: (0, 0)),
            pl.BlockSpec((planes, out_c), lambda n: (0, 0)),
            pl.BlockSpec((1, out_c), lambda n: (0, 0)),
            pl.BlockSpec((Cin, out_c), lambda n: (0, 0)),
        ],
        out_specs=pl.BlockSpec((1, Lp, out_c), lambda n: (n, 0, 0)),
        scratch_shapes=[pltpu.VMEM((P, Lm, planes), jnp.float32)],
        compiler_params=pltpu.CompilerParams(
            dimension_semantics=("parallel",)),
    )(xp, mask, w1, b1.reshape(1, planes), w2, b2.reshape(1, planes),
      w3, b3.reshape(1, out_c), wsc)

    # Strip the pad ring and go back to NCHW (final-output-only XLA glue).
    y = y.reshape(N, Ho + 2, Wo + 2, out_c)[:, 1:-1, 1:-1, :]
    return jnp.transpose(y, (0, 3, 1, 2))


# ------------------------- pure-JAX reference check -------------------------

def bottleneck_reference(x_nchw, p, stride):
    x = jnp.transpose(x_nchw, (0, 2, 3, 1)).astype(jnp.float32)

    def conv(xh, w_oihw, s, pad):
        w = jnp.transpose(w_oihw, (2, 3, 1, 0))                   # HWIO
        return lax.conv_general_dilated(
            xh, w, (s, s), [(pad, pad), (pad, pad)],
            dimension_numbers=("NHWC", "HWIO", "NHWC"))

    def bn(xh, g, b, m, v):
        return (xh - m) / jnp.sqrt(v + BN_EPS) * g + b

    out = _leaky(bn(conv(x, p["w1"], 1, 0), p["g1"], p["b1"], p["m1"], p["v1"]))
    out = _leaky(bn(conv(out, p["w2"], stride, 1), p["g2"], p["b2"], p["m2"], p["v2"]))
    out = bn(conv(out, p["w3"], 1, 0), p["g3"], p["b3"], p["m3"], p["v3"])

    H = x.shape[1]
    Cin = x.shape[-1]
    out_c = p["w3"].shape[0]
    if stride != 1 or Cin != out_c:
        k = 1 if H % 2 != 0 else stride
        pooled = lax.reduce_window(x, 0.0, lax.add, (1, k, k, 1),
                                   (1, stride, stride, 1), "VALID") / float(k * k)
        sc = jnp.pad(pooled, ((0, 0), (0, 0), (0, 0), (0, out_c - Cin)))
    else:
        sc = x
    out = _leaky(out + sc)
    return jnp.transpose(out, (0, 3, 1, 2))


# ----------------------------------- main -----------------------------------

if __name__ == "__main__":
    N, in_planes, H, W = 2, 16, 16, 16
    planes, stride = 8, 2
    out_c = 4 * planes

    key = jax.random.PRNGKey(0)
    ks = jax.random.split(key, 8)

    def bn_params(k, c):
        k1, k2, k3, k4 = jax.random.split(k, 4)
        return (1.0 + 0.1 * jax.random.normal(k1, (c,), jnp.float32),
                0.05 * jax.random.normal(k2, (c,), jnp.float32),
                0.01 * jax.random.normal(k3, (c,), jnp.float32),
                jax.random.uniform(k4, (c,), jnp.float32, 0.5, 1.5))

    g1, b1, m1, v1 = bn_params(ks[0], planes)
    g2, b2, m2, v2 = bn_params(ks[1], planes)
    g3, b3, m3, v3 = bn_params(ks[2], out_c)

    params = dict(
        w1=0.1 * jax.random.normal(ks[3], (planes, in_planes, 1, 1), jnp.float32),
        w2=0.1 * jax.random.normal(ks[4], (planes, planes, 3, 3), jnp.float32),
        w3=0.1 * jax.random.normal(ks[5], (out_c, planes, 1, 1), jnp.float32),
        g1=g1, b1=b1, m1=m1, v1=v1,
        g2=g2, b2=b2, m2=m2, v2=v2,
        g3=g3, b3=b3, m3=m3, v3=v3,
    )

    x = jax.random.normal(ks[6], (N, in_planes, H, W), jnp.float32)

    y = bottleneck_forward(x, params, stride)
    y = jax.block_until_ready(y)

    y_ref = bottleneck_reference(x, params, stride)
    # Tolerance reflects bf16 matmul inputs (f32 accumulation) in the kernel
    # vs. the all-f32 reference.
    np.testing.assert_allclose(np.asarray(y), np.asarray(y_ref),
                               atol=3e-2, rtol=3e-2)
    print("KERNEL_OK")
</pallas_src>

<mosaic_0001>
module attributes {stable_mosaic.version = 11 : i64} {
  func.func @_bottleneck_kernel(%arg0: i32, %arg1: memref<1x4x100x16xbf16, #tpu.memory_space<vmem>>, %arg2: memref<100x1xf32, #tpu.memory_space<vmem>>, %arg3: memref<16x8xbf16, #tpu.memory_space<vmem>>, %arg4: memref<1x8xf32, #tpu.memory_space<vmem>>, %arg5: memref<9x8x8xbf16, #tpu.memory_space<vmem>>, %arg6: memref<1x8xf32, #tpu.memory_space<vmem>>, %arg7: memref<8x32xbf16, #tpu.memory_space<vmem>>, %arg8: memref<1x32xf32, #tpu.memory_space<vmem>>, %arg9: memref<16x32xf32, #tpu.memory_space<vmem>>, %arg10: memref<1x100x32xf32, #tpu.memory_space<vmem>>, %arg11: memref<4x132x8xf32, #tpu.memory_space<vmem>>) attributes {dimension_semantics = [#tpu.dimension_semantics<parallel>], iteration_bounds = array<i64: 2>, scalar_prefetch = 0 : i64, scratch_operands = 1 : i64, tpu.core_type = #tpu.core_type<tc>, window_params = [{transform_indices = @transform_0, window_bounds = array<i64: 1, 4, 100, 16>}, {pipeline_mode = #tpu.pipeline_mode<synchronous>, transform_indices = @transform_1, window_bounds = array<i64: 100, 1>}, {pipeline_mode = #tpu.pipeline_mode<synchronous>, transform_indices = @transform_2, window_bounds = array<i64: 16, 8>}, {pipeline_mode = #tpu.pipeline_mode<synchronous>, transform_indices = @transform_3, window_bounds = array<i64: 1, 8>}, {pipeline_mode = #tpu.pipeline_mode<synchronous>, transform_indices = @transform_4, window_bounds = array<i64: 9, 8, 8>}, {pipeline_mode = #tpu.pipeline_mode<synchronous>, transform_indices = @transform_5, window_bounds = array<i64: 1, 8>}, {pipeline_mode = #tpu.pipeline_mode<synchronous>, transform_indices = @transform_6, window_bounds = array<i64: 8, 32>}, {pipeline_mode = #tpu.pipeline_mode<synchronous>, transform_indices = @transform_7, window_bounds = array<i64: 1, 32>}, {pipeline_mode = #tpu.pipeline_mode<synchronous>, transform_indices = @transform_8, window_bounds = array<i64: 16, 32>}, {transform_indices = @transform_9, window_bounds = array<i64: 1, 100, 32>}]} {
    %c0 = arith.constant 0 : index
    %c0_0 = arith.constant 0 : index
    %0 = vector.load %arg2[%c0, %c0_0] : memref<100x1xf32, #tpu.memory_space<vmem>>, vector<100x1xf32>
    %c0_1 = arith.constant 0 : index
    %c0_2 = arith.constant 0 : index
    %1 = vector.load %arg3[%c0_1, %c0_2] : memref<16x8xbf16, #tpu.memory_space<vmem>>, vector<16x8xbf16>
    %c0_3 = arith.constant 0 : index
    %c0_4 = arith.constant 0 : index
    %2 = vector.load %arg4[%c0_3, %c0_4] : memref<1x8xf32, #tpu.memory_space<vmem>>, vector<1x8xf32>
    %cst = arith.constant 0.000000e+00 : f32
    %3 = vector.broadcast %cst : f32 to vector<4x132x8xf32>
    %c0_5 = arith.constant 0 : index
    %c0_6 = arith.constant 0 : index
    %c0_7 = arith.constant 0 : index
    %4 = vector.load %arg11[%c0_5, %c0_6, %c0_7] : memref<4x132x8xf32, #tpu.memory_space<vmem>>, vector<4x132x8xf32>
    tpu.vector_store %arg11[%c0_5, %c0_6, %c0_7], %3 {strides = array<i32>} : memref<4x132x8xf32, #tpu.memory_space<vmem>>, vector<4x132x8xf32>,
    %cst_8 = arith.constant 0.000000e+00 : f32
    %5 = vector.broadcast %cst_8 : f32 to vector<100x16xf32>
    %c0_9 = arith.constant 0 : index
    %c0_10 = arith.constant 0 : index
    %c0_11 = arith.constant 0 : index
    %c0_12 = arith.constant 0 : index
    %6 = vector.load %arg1[%c0_9, %c0_10, %c0_11, %c0_12] : memref<1x4x100x16xbf16, #tpu.memory_space<vmem>>, vector<1x1x100x16xbf16>
    %7 = vector.shape_cast %6 : vector<1x1x100x16xbf16> to vector<100x16xbf16>
    %8 = arith.extf %7 : vector<100x16xbf16> to vector<100x16xf32>
    %9 = arith.addf %5, %8 : vector<100x16xf32>
    %cst_13 = arith.constant dense<0.000000e+00> : vector<100x8xf32>
    %10 = tpu.matmul %7, %1, %cst_13 {dimension_numbers = #tpu.dot_dimension_numbers<[1], [0], [0], [1], [0, 0, 1, 1], [], []>} : vector<100x16xbf16>, vector<16x8xbf16>, vector<100x8xf32> -> vector<100x8xf32>
    %11 = vector.broadcast %2 : vector<1x8xf32> to vector<100x8xf32>
    %12 = arith.addf %10, %11 : vector<100x8xf32>
    %cst_14 = arith.constant 0.000000e+00 : f32
    %13 = vector.broadcast %cst_14 : f32 to vector<100x8xf32>
    %14 = arith.cmpf oge, %12, %13 : vector<100x8xf32>
    %cst_15 = arith.constant 0.00999999977 : f32
    %15 = vector.broadcast %cst_15 : f32 to vector<100x8xf32>
    %16 = arith.mulf %15, %12 : vector<100x8xf32>
    %17 = arith.select %14, %12, %16 : vector<100x8xi1>, vector<100x8xf32>
    %18 = vector.broadcast %0 : vector<100x1xf32> to vector<100x8xf32>
    %19 = arith.mulf %17, %18 : vector<100x8xf32>
    %c0_16 = arith.constant 0 : index
    %c16 = arith.constant 16 : index
    %c0_17 = arith.constant 0 : index
    %20 = vector.load %arg11[%c0_16, %c16, %c0_17] : memref<4x132x8xf32, #tpu.memory_space<vmem>>, vector<1x100x8xf32>
    %21 = vector.shape_cast %20 : vector<1x100x8xf32> to vector<100x8xf32>
    %22 = vector.shape_cast %19 : vector<100x8xf32> to vector<1x100x8xf32>
    tpu.vector_store %arg11[%c0_16, %c16, %c0_17], %22 {strides = array<i32>} : memref<4x132x8xf32, #tpu.memory_space<vmem>>, vector<1x100x8xf32>,
    %c0_18 = arith.constant 0 : index
    %c1 = arith.constant 1 : index
    %c0_19 = arith.constant 0 : index
    %c0_20 = arith.constant 0 : index
    %23 = vector.load %arg1[%c0_18, %c1, %c0_19, %c0_20] : memref<1x4x100x16xbf16, #tpu.memory_space<vmem>>, vector<1x1x100x16xbf16>
    %24 = vector.shape_cast %23 : vector<1x1x100x16xbf16> to vector<100x16xbf16>
    %25 = arith.extf %24 : vector<100x16xbf16> to vector<100x16xf32>
    %26 = arith.addf %9, %25 : vector<100x16xf32>
    %cst_21 = arith.constant dense<0.000000e+00> : vector<100x8xf32>
    %27 = tpu.matmul %24, %1, %cst_21 {dimension_numbers = #tpu.dot_dimension_numbers<[1], [0], [0], [1], [0, 0, 1, 1], [], []>} : vector<100x16xbf16>, vector<16x8xbf16>, vector<100x8xf32> -> vector<100x8xf32>
    %28 = vector.broadcast %2 : vector<1x8xf32> to vector<100x8xf32>
    %29 = arith.addf %27, %28 : vector<100x8xf32>
    %cst_22 = arith.constant 0.000000e+00 : f32
    %30 = vector.broadcast %cst_22 : f32 to vector<100x8xf32>
    %31 = arith.cmpf oge, %29, %30 : vector<100x8xf32>
    %cst_23 = arith.constant 0.00999999977 : f32
    %32 = vector.broadcast %cst_23 : f32 to vector<100x8xf32>
    %33 = arith.mulf %32, %29 : vector<100x8xf32>
    %34 = arith.select %31, %29, %33 : vector<100x8xi1>, vector<100x8xf32>
    %35 = vector.broadcast %0 : vector<100x1xf32> to vector<100x8xf32>
    %36 = arith.mulf %34, %35 : vector<100x8xf32>
    %c1_24 = arith.constant 1 : index
    %c16_25 = arith.constant 16 : index
    %c0_26 = arith.constant 0 : index
    %37 = vector.load %arg11[%c1_24, %c16_25, %c0_26] : memref<4x132x8xf32, #tpu.memory_space<vmem>>, vector<1x100x8xf32>
    %38 = vector.shape_cast %37 : vector<1x100x8xf32> to vector<100x8xf32>
    %39 = vector.shape_cast %36 : vector<100x8xf32> to vector<1x100x8xf32>
    tpu.vector_store %arg11[%c1_24, %c16_25, %c0_26], %39 {strides = array<i32>} : memref<4x132x8xf32, #tpu.memory_space<vmem>>, vector<1x100x8xf32>,
    %c0_27 = arith.constant 0 : index
    %c2 = arith.constant 2 : index
    %c0_28 = arith.constant 0 : index
    %c0_29 = arith.constant 0 : index
    %40 = vector.load %arg1[%c0_27, %c2, %c0_28, %c0_29] : memref<1x4x100x16xbf16, #tpu.memory_space<vmem>>, vector<1x1x100x16xbf16>
    %41 = vector.shape_cast %40 : vector<1x1x100x16xbf16> to vector<100x16xbf16>
    %42 = arith.extf %41 : vector<100x16xbf16> to vector<100x16xf32>
    %43 = arith.addf %26, %42 : vector<100x16xf32>
    %cst_30 = arith.constant dense<0.000000e+00> : vector<100x8xf32>
    %44 = tpu.matmul %41, %1, %cst_30 {dimension_numbers = #tpu.dot_dimension_numbers<[1], [0], [0], [1], [0, 0, 1, 1], [], []>} : vector<100x16xbf16>, vector<16x8xbf16>, vector<100x8xf32> -> vector<100x8xf32>
    %45 = vector.broadcast %2 : vector<1x8xf32> to vector<100x8xf32>
    %46 = arith.addf %44, %45 : vector<100x8xf32>
    %cst_31 = arith.constant 0.000000e+00 : f32
    %47 = vector.broadcast %cst_31 : f32 to vector<100x8xf32>
    %48 = arith.cmpf oge, %46, %47 : vector<100x8xf32>
    %cst_32 = arith.constant 0.00999999977 : f32
    %49 = vector.broadcast %cst_32 : f32 to vector<100x8xf32>
    %50 = arith.mulf %49, %46 : vector<100x8xf32>
    %51 = arith.select %48, %46, %50 : vector<100x8xi1>, vector<100x8xf32>
    %52 = vector.broadcast %0 : vector<100x1xf32> to vector<100x8xf32>
    %53 = arith.mulf %51, %52 : vector<100x8xf32>
    %c2_33 = arith.constant 2 : index
    %c16_34 = arith.constant 16 : index
    %c0_35 = arith.constant 0 : index
    %54 = vector.load %arg11[%c2_33, %c16_34, %c0_35] : memref<4x132x8xf32, #tpu.memory_space<vmem>>, vector<1x100x8xf32>
    %55 = vector.shape_cast %54 : vector<1x100x8xf32> to vector<100x8xf32>
    %56 = vector.shape_cast %53 : vector<100x8xf32> to vector<1x100x8xf32>
    tpu.vector_store %arg11[%c2_33, %c16_34, %c0_35], %56 {strides = array<i32>} : memref<4x132x8xf32, #tpu.memory_space<vmem>>, vector<1x100x8xf32>,
    %c0_36 = arith.constant 0 : index
    %c3 = arith.constant 3 : index
    %c0_37 = arith.constant 0 : index
    %c0_38 = arith.constant 0 : index
    %57 = vector.load %arg1[%c0_36, %c3, %c0_37, %c0_38] : memref<1x4x100x16xbf16, #tpu.memory_space<vmem>>, vector<1x1x100x16xbf16>
    %58 = vector.shape_cast %57 : vector<1x1x100x16xbf16> to vector<100x16xbf16>
    %59 = arith.extf %58 : vector<100x16xbf16> to vector<100x16xf32>
    %60 = arith.addf %43, %59 : vector<100x16xf32>
    %cst_39 = arith.constant dense<0.000000e+00> : vector<100x8xf32>
    %61 = tpu.matmul %58, %1, %cst_39 {dimension_numbers = #tpu.dot_dimension_numbers<[1], [0], [0], [1], [0, 0, 1, 1], [], []>} : vector<100x16xbf16>, vector<16x8xbf16>, vector<100x8xf32> -> vector<100x8xf32>
    %62 = vector.broadcast %2 : vector<1x8xf32> to vector<100x8xf32>
    %63 = arith.addf %61, %62 : vector<100x8xf32>
    %cst_40 = arith.constant 0.000000e+00 : f32
    %64 = vector.broadcast %cst_40 : f32 to vector<100x8xf32>
    %65 = arith.cmpf oge, %63, %64 : vector<100x8xf32>
    %cst_41 = arith.constant 0.00999999977 : f32
    %66 = vector.broadcast %cst_41 : f32 to vector<100x8xf32>
    %67 = arith.mulf %66, %63 : vector<100x8xf32>
    %68 = arith.select %65, %63, %67 : vector<100x8xi1>, vector<100x8xf32>
    %69 = vector.broadcast %0 : vector<100x1xf32> to vector<100x8xf32>
    %70 = arith.mulf %68, %69 : vector<100x8xf32>
    %c3_42 = arith.constant 3 : index
    %c16_43 = arith.constant 16 : index
    %c0_44 = arith.constant 0 : index
    %71 = vector.load %arg11[%c3_42, %c16_43, %c0_44] : memref<4x132x8xf32, #tpu.memory_space<vmem>>, vector<1x100x8xf32>
    %72 = vector.shape_cast %71 : vector<1x100x8xf32> to vector<100x8xf32>
    %73 = vector.shape_cast %70 : vector<100x8xf32> to vector<1x100x8xf32>
    tpu.vector_store %arg11[%c3_42, %c16_43, %c0_44], %73 {strides = array<i32>} : memref<4x132x8xf32, #tpu.memory_space<vmem>>, vector<1x100x8xf32>,
    %cst_45 = arith.constant 0.000000e+00 : f32
    %74 = vector.broadcast %cst_45 : f32 to vector<100x8xf32>
    %c3_46 = arith.constant 3 : index
    %c5 = arith.constant 5 : index
    %c0_47 = arith.constant 0 : index
    %75 = vector.load %arg11[%c3_46, %c5, %c0_47] : memref<4x132x8xf32, #tpu.memory_space<vmem>>, vector<1x100x8xf32>
    %76 = vector.shape_cast %75 : vector<1x100x8xf32> to vector<100x8xf32>
    %77 = arith.truncf %76 : vector<100x8xf32> to vector<100x8xbf16>
    %c0_48 = arith.constant 0 : index
    %c0_49 = arith.constant 0 : index
    %c0_50 = arith.constant 0 : index
    %78 = vector.load %arg5[%c0_48, %c0_49, %c0_50] : memref<9x8x8xbf16, #tpu.memory_space<vmem>>, vector<1x8x8xbf16>
    %79 = vector.shape_cast %78 : vector<1x8x8xbf16> to vector<8x8xbf16>
    %cst_51 = arith.constant dense<0.000000e+00> : vector<100x8xf32>
    %80 = tpu.matmul %77, %79, %cst_51 {dimension_numbers = #tpu.dot_dimension_numbers<[1], [0], [0], [1], [0, 0, 1, 1], [], []>} : vector<100x8xbf16>, vector<8x8xbf16>, vector<100x8xf32> -> vector<100x8xf32>
    %81 = arith.addf %74, %80 : vector<100x8xf32>
    %c2_52 = arith.constant 2 : index
    %c6 = arith.constant 6 : index
    %c0_53 = arith.constant 0 : index
    %82 = vector.load %arg11[%c2_52, %c6, %c0_53] : memref<4x132x8xf32, #tpu.memory_space<vmem>>, vector<1x100x8xf32>
    %83 = vector.shape_cast %82 : vector<1x100x8xf32> to vector<100x8xf32>
    %84 = arith.truncf %83 : vector<100x8xf32> to vector<100x8xbf16>
    %c1_54 = arith.constant 1 : index
    %c0_55 = arith.constant 0 : index
    %c0_56 = arith.constant 0 : index
    %85 = vector.load %arg5[%c1_54, %c0_55, %c0_56] : memref<9x8x8xbf16, #tpu.memory_space<vmem>>, vector<1x8x8xbf16>
    %86 = vector.shape_cast %85 : vector<1x8x8xbf16> to vector<8x8xbf16>
    %cst_57 = arith.constant dense<0.000000e+00> : vector<100x8xf32>
    %87 = tpu.matmul %84, %86, %cst_57 {dimension_numbers = #tpu.dot_dimension_numbers<[1], [0], [0], [1], [0, 0, 1, 1], [], []>} : vector<100x8xbf16>, vector<8x8xbf16>, vector<100x8xf32> -> vector<100x8xf32>
    %88 = arith.addf %81, %87 : vector<100x8xf32>
    %c3_58 = arith.constant 3 : index
    %c6_59 = arith.constant 6 : index
    %c0_60 = arith.constant 0 : index
    %89 = vector.load %arg11[%c3_58, %c6_59, %c0_60] : memref<4x132x8xf32, #tpu.memory_space<vmem>>, vector<1x100x8xf32>
    %90 = vector.shape_cast %89 : vector<1x100x8xf32> to vector<100x8xf32>
    %91 = arith.truncf %90 : vector<100x8xf32> to vector<100x8xbf16>
    %c2_61 = arith.constant 2 : index
    %c0_62 = arith.constant 0 : index
    %c0_63 = arith.constant 0 : index
    %92 = vector.load %arg5[%c2_61, %c0_62, %c0_63] : memref<9x8x8xbf16, #tpu.memory_space<vmem>>, vector<1x8x8xbf16>
    %93 = vector.shape_cast %92 : vector<1x8x8xbf16> to vector<8x8xbf16>
    %cst_64 = arith.constant dense<0.000000e+00> : vector<100x8xf32>
    %94 = tpu.matmul %91, %93, %cst_64 {dimension_numbers = #tpu.dot_dimension_numbers<[1], [0], [0], [1], [0, 0, 1, 1], [], []>} : vector<100x8xbf16>, vector<8x8xbf16>, vector<100x8xf32> -> vector<100x8xf32>
    %95 = arith.addf %88, %94 : vector<100x8xf32>
    %c1_65 = arith.constant 1 : index
    %c15 = arith.constant 15 : index
    %c0_66 = arith.constant 0 : index
    %96 = vector.load %arg11[%c1_65, %c15, %c0_66] : memref<4x132x8xf32, #tpu.memory_space<vmem>>, vector<1x100x8xf32>
    %97 = vector.shape_cast %96 : vector<1x100x8xf32> to vector<100x8xf32>
    %98 = arith.truncf %97 : vector<100x8xf32> to vector<100x8xbf16>
    %c3_67 = arith.constant 3 : index
    %c0_68 = arith.constant 0 : index
    %c0_69 = arith.constant 0 : index
    %99 = vector.load %arg5[%c3_67, %c0_68, %c0_69] : memref<9x8x8xbf16, #tpu.memory_space<vmem>>, vector<1x8x8xbf16>
    %100 = vector.shape_cast %99 : vector<1x8x8xbf16> to vector<8x8xbf16>
    %cst_70 = arith.constant dense<0.000000e+00> : vector<100x8xf32>
    %101 = tpu.matmul %98, %100, %cst_70 {dimension_numbers = #tpu.dot_dimension_numbers<[1], [0], [0], [1], [0, 0, 1, 1], [], []>} : vector<100x8xbf16>, vector<8x8xbf16>, vector<100x8xf32> -> vector<100x8xf32>
    %102 = arith.addf %95, %101 : vector<100x8xf32>
    %c0_71 = arith.constant 0 : index
    %c16_72 = arith.constant 16 : index
    %c0_73 = arith.constant 0 : index
    %103 = vector.load %arg11[%c0_71, %c16_72, %c0_73] : memref<4x132x8xf32, #tpu.memory_space<vmem>>, vector<1x100x8xf32>
    %104 = vector.shape_cast %103 : vector<1x100x8xf32> to vector<100x8xf32>
    %105 = arith.truncf %104 : vector<100x8xf32> to vector<100x8xbf16>
    %c4 = arith.constant 4 : index
    %c0_74 = arith.constant 0 : index
    %c0_75 = arith.constant 0 : index
    %106 = vector.load %arg5[%c4, %c0_74, %c0_75] : memref<9x8x8xbf16, #tpu.memory_space<vmem>>, vector<1x8x8xbf16>
    %107 = vector.shape_cast %106 : vector<1x8x8xbf16> to vector<8x8xbf16>
    %cst_76 = arith.constant dense<0.000000e+00> : vector<100x8xf32>
    %108 = tpu.matmul %105, %107, %cst_76 {dimension_numbers = #tpu.dot_dimension_numbers<[1], [0], [0], [1], [0, 0, 1, 1], [], []>} : vector<100x8xbf16>, vector<8x8xbf16>, vector<100x8xf32> -> vector<100x8xf32>
    %109 = arith.addf %102, %108 : vector<100x8xf32>
    %c1_77 = arith.constant 1 : index
    %c16_78 = arith.constant 16 : index
    %c0_79 = arith.constant 0 : index
    %110 = vector.load %arg11[%c1_77, %c16_78, %c0_79] : memref<4x132x8xf32, #tpu.memory_space<vmem>>, vector<1x100x8xf32>
    %111 = vector.shape_cast %110 : vector<1x100x8xf32> to vector<100x8xf32>
    %112 = arith.truncf %111 : vector<100x8xf32> to vector<100x8xbf16>
    %c5_80 = arith.constant 5 : index
    %c0_81 = arith.constant 0 : index
    %c0_82 = arith.constant 0 : index
    %113 = vector.load %arg5[%c5_80, %c0_81, %c0_82] : memref<9x8x8xbf16, #tpu.memory_space<vmem>>, vector<1x8x8xbf16>
    %114 = vector.shape_cast %113 : vector<1x8x8xbf16> to vector<8x8xbf16>
    %cst_83 = arith.constant dense<0.000000e+00> : vector<100x8xf32>
    %115 = tpu.matmul %112, %114, %cst_83 {dimension_numbers = #tpu.dot_dimension_numbers<[1], [0], [0], [1], [0, 0, 1, 1], [], []>} : vector<100x8xbf16>, vector<8x8xbf16>, vector<100x8xf32> -> vector<100x8xf32>
    %116 = arith.addf %109, %115 : vector<100x8xf32>
    %c3_84 = arith.constant 3 : index
    %c15_85 = arith.constant 15 : index
    %c0_86 = arith.constant 0 : index
    %117 = vector.load %arg11[%c3_84, %c15_85, %c0_86] : memref<4x132x8xf32, #tpu.memory_space<vmem>>, vector<1x100x8xf32>
    %118 = vector.shape_cast %117 : vector<1x100x8xf32> to vector<100x8xf32>
    %119 = arith.truncf %118 : vector<100x8xf32> to vector<100x8xbf16>
    %c6_87 = arith.constant 6 : index
    %c0_88 = arith.constant 0 : index
    %c0_89 = arith.constant 0 : index
    %120 = vector.load %arg5[%c6_87, %c0_88, %c0_89] : memref<9x8x8xbf16, #tpu.memory_space<vmem>>, vector<1x8x8xbf16>
    %121 = vector.shape_cast %120 : vector<1x8x8xbf16> to vector<8x8xbf16>
    %cst_90 = arith.constant dense<0.000000e+00> : vector<100x8xf32>
    %122 = tpu.matmul %119, %121, %cst_90 {dimension_numbers = #tpu.dot_dimension_numbers<[1], [0], [0], [1], [0, 0, 1, 1], [], []>} : vector<100x8xbf16>, vector<8x8xbf16>, vector<100x8xf32> -> vector<100x8xf32>
    %123 = arith.addf %116, %122 : vector<100x8xf32>
    %c2_91 = arith.constant 2 : index
    %c16_92 = arith.constant 16 : index
    %c0_93 = arith.constant 0 : index
    %124 = vector.load %arg11[%c2_91, %c16_92, %c0_93] : memref<4x132x8xf32, #tpu.memory_space<vmem>>, vector<1x100x8xf32>
    %125 = vector.shape_cast %124 : vector<1x100x8xf32> to vector<100x8xf32>
    %126 = arith.truncf %125 : vector<100x8xf32> to vector<100x8xbf16>
    %c7 = arith.constant 7 : index
    %c0_94 = arith.constant 0 : index
    %c0_95 = arith.constant 0 : index
    %127 = vector.load %arg5[%c7, %c0_94, %c0_95] : memref<9x8x8xbf16, #tpu.memory_space<vmem>>, vector<1x8x8xbf16>
    %128 = vector.shape_cast %127 : vector<1x8x8xbf16> to vector<8x8xbf16>
    %cst_96 = arith.constant dense<0.000000e+00> : vector<100x8xf32>
    %129 = tpu.matmul %126, %128, %cst_96 {dimension_numbers = #tpu.dot_dimension_numbers<[1], [0], [0], [1], [0, 0, 1, 1], [], []>} : vector<100x8xbf16>, vector<8x8xbf16>, vector<100x8xf32> -> vector<100x8xf32>
    %130 = arith.addf %123, %129 : vector<100x8xf32>
    %c3_97 = arith.constant 3 : index
    %c16_98 = arith.constant 16 : index
    %c0_99 = arith.constant 0 : index
    %131 = vector.load %arg11[%c3_97, %c16_98, %c0_99] : memref<4x132x8xf32, #tpu.memory_space<vmem>>, vector<1x100x8xf32>
    %132 = vector.shape_cast %131 : vector<1x100x8xf32> to vector<100x8xf32>
    %133 = arith.truncf %132 : vector<100x8xf32> to vector<100x8xbf16>
    %c8 = arith.constant 8 : index
    %c0_100 = arith.constant 0 : index
    %c0_101 = arith.constant 0 : index
    %134 = vector.load %arg5[%c8, %c0_100, %c0_101] : memref<9x8x8xbf16, #tpu.memory_space<vmem>>, vector<1x8x8xbf16>
    %135 = vector.shape_cast %134 : vector<1x8x8xbf16> to vector<8x8xbf16>
    %cst_102 = arith.constant dense<0.000000e+00> : vector<100x8xf32>
    %136 = tpu.matmul %133, %135, %cst_102 {dimension_numbers = #tpu.dot_dimension_numbers<[1], [0], [0], [1], [0, 0, 1, 1], [], []>} : vector<100x8xbf16>, vector<8x8xbf16>, vector<100x8xf32> -> vector<100x8xf32>
    %137 = arith.addf %130, %136 : vector<100x8xf32>
    %c0_103 = arith.constant 0 : index
    %c0_104 = arith.constant 0 : index
    %138 = vector.load %arg6[%c0_103, %c0_104] : memref<1x8xf32, #tpu.memory_space<vmem>>, vector<1x8xf32>
    %139 = vector.broadcast %138 : vector<1x8xf32> to vector<100x8xf32>
    %140 = arith.addf %137, %139 : vector<100x8xf32>
    %cst_105 = arith.constant 0.000000e+00 : f32
    %141 = vector.broadcast %cst_105 : f32 to vector<100x8xf32>
    %142 = arith.cmpf oge, %140, %141 : vector<100x8xf32>
    %cst_106 = arith.constant 0.00999999977 : f32
    %143 = vector.broadcast %cst_106 : f32 to vector<100x8xf32>
    %144 = arith.mulf %143, %140 : vector<100x8xf32>
    %145 = arith.select %142, %140, %144 : vector<100x8xi1>, vector<100x8xf32>
    %146 = arith.truncf %145 : vector<100x8xf32> to vector<100x8xbf16>
    %c0_107 = arith.constant 0 : index
    %c0_108 = arith.constant 0 : index
    %147 = vector.load %arg7[%c0_107, %c0_108] : memref<8x32xbf16, #tpu.memory_space<vmem>>, vector<8x32xbf16>
    %cst_109 = arith.constant dense<0.000000e+00> : vector<100x32xf32>
    %148 = tpu.matmul %146, %147, %cst_109 {dimension_numbers = #tpu.dot_dimension_numbers<[1], [0], [0], [1], [0, 0, 1, 1], [], []>} : vector<100x8xbf16>, vector<8x32xbf16>, vector<100x32xf32> -> vector<100x32xf32>
    %c0_110 = arith.constant 0 : index
    %c0_111 = arith.constant 0 : index
    %149 = vector.load %arg8[%c0_110, %c0_111] : memref<1x32xf32, #tpu.memory_space<vmem>>, vector<1x32xf32>
    %150 = vector.broadcast %149 : vector<1x32xf32> to vector<100x32xf32>
    %151 = arith.addf %148, %150 : vector<100x32xf32>
    %c0_112 = arith.constant 0 : index
    %c0_113 = arith.constant 0 : index
    %152 = vector.load %arg9[%c0_112, %c0_113] : memref<16x32xf32, #tpu.memory_space<vmem>>, vector<16x32xf32>
    %cst_114 = arith.constant dense<0.000000e+00> : vector<100x32xf32>
    %153 = tpu.matmul %60, %152, %cst_114 {dimension_numbers = #tpu.dot_dimension_numbers<[1], [0], [0], [1], [0, 0, 1, 1], [], []>} : vector<100x16xf32>, vector<16x32xf32>, vector<100x32xf32> -> vector<100x32xf32>
    %154 = arith.addf %151, %153 : vector<100x32xf32>
    %cst_115 = arith.constant 0.000000e+00 : f32
    %155 = vector.broadcast %cst_115 : f32 to vector<100x32xf32>
    %156 = arith.cmpf oge, %154, %155 : vector<100x32xf32>
    %cst_116 = arith.constant 0.00999999977 : f32
    %157 = vector.broadcast %cst_116 : f32 to vector<100x32xf32>
    %158 = arith.mulf %157, %154 : vector<100x32xf32>
    %159 = arith.select %156, %154, %158 : vector<100x32xi1>, vector<100x32xf32>
    %c0_117 = arith.constant 0 : index
    %c0_118 = arith.constant 0 : index
    %c0_119 = arith.constant 0 : index
    %160 = vector.load %arg10[%c0_117, %c0_118, %c0_119] : memref<1x100x32xf32, #tpu.memory_space<vmem>>, vector<1x100x32xf32>
    %161 = vector.shape_cast %160 : vector<1x100x32xf32> to vector<100x32xf32>
    %162 = vector.shape_cast %159 : vector<100x32xf32> to vector<1x100x32xf32>
    tpu.vector_store %arg10[%c0_117, %c0_118, %c0_119], %162 {strides = array<i32>} : memref<1x100x32xf32, #tpu.memory_space<vmem>>, vector<1x100x32xf32>,
    return
  }
  func.func @transform_0(%arg0: i32) -> (i32, i32, i32, i32) {
    %c0_i32 = arith.constant 0 : i32
    %c0_i32_0 = arith.constant 0 : i32
    %c0_i32_1 = arith.constant 0 : i32
    %c0_i32_2 = arith.constant 0 : i32
    return %arg0, %c0_i32, %c0_i32_0, %c0_i32_1 : i32, i32, i32, i32
  }
  func.func @transform_1(%arg0: i32) -> (i32, i32) {
    %c0_i32 = arith.constant 0 : i32
    %c0_i32_0 = arith.constant 0 : i32
    %c0_i32_1 = arith.constant 0 : i32
    return %c0_i32, %c0_i32_0 : i32, i32
  }
  func.func @transform_2(%arg0: i32) -> (i32, i32) {
    %c0_i32 = arith.constant 0 : i32
    %c0_i32_0 = arith.constant 0 : i32
    %c0_i32_1 = arith.constant 0 : i32
    return %c0_i32, %c0_i32_0 : i32, i32
  }
  func.func @transform_3(%arg0: i32) -> (i32, i32) {
    %c0_i32 = arith.constant 0 : i32
    %c0_i32_0 = arith.constant 0 : i32
    %c0_i32_1 = arith.constant 0 : i32
    return %c0_i32, %c0_i32_0 : i32, i32
  }
  func.func @transform_4(%arg0: i32) -> (i32, i32, i32) {
    %c0_i32 = arith.constant 0 : i32
    %c0_i32_0 = arith.constant 0 : i32
    %c0_i32_1 = arith.constant 0 : i32
    %c0_i32_2 = arith.constant 0 : i32
    return %c0_i32, %c0_i32_0, %c0_i32_1 : i32, i32, i32
  }
  func.func @transform_5(%arg0: i32) -> (i32, i32) {
    %c0_i32 = arith.constant 0 : i32
    %c0_i32_0 = arith.constant 0 : i32
    %c0_i32_1 = arith.constant 0 : i32
    return %c0_i32, %c0_i32_0 : i32, i32
  }
  func.func @transform_6(%arg0: i32) -> (i32, i32) {
    %c0_i32 = arith.constant 0 : i32
    %c0_i32_0 = arith.constant 0 : i32
    %c0_i32_1 = arith.constant 0 : i32
    return %c0_i32, %c0_i32_0 : i32, i32
  }
  func.func @transform_7(%arg0: i32) -> (i32, i32) {
    %c0_i32 = arith.constant 0 : i32
    %c0_i32_0 = arith.constant 0 : i32
    %c0_i32_1 = arith.constant 0 : i32
    return %c0_i32, %c0_i32_0 : i32, i32
  }
  func.func @transform_8(%arg0: i32) -> (i32, i32) {
    %c0_i32 = arith.constant 0 : i32
    %c0_i32_0 = arith.constant 0 : i32
    %c0_i32_1 = arith.constant 0 : i32
    return %c0_i32, %c0_i32_0 : i32, i32
  }
  func.func @transform_9(%arg0: i32) -> (i32, i32, i32) {
    %c0_i32 = arith.constant 0 : i32
    %c0_i32_0 = arith.constant 0 : i32
    %c0_i32_1 = arith.constant 0 : i32
    return %arg0, %c0_i32, %c0_i32_0 : i32, i32, i32
  }
}

</mosaic_0001>

<llo_original>
// kernel: tpu_custom_call.1
$region0: #{tpu_custom_call.1}
  #allocation0 [shape = 'u32[]', space=smem, size = 0x4, offset = 0x4, fixed_abs, tag = 'smem constant byte address 0x4 - core index']
  #allocation1 [shape = 'u32[144,128]{1,0:T(1,128)}', space=vmem, size = 0x12000, scoped, tag = 'internal scratch']
  #allocation2 [shape = 'f32[4,132,8]{2,1,0:T(8,128)}', space=vmem, size = 0x44000, scoped, tag = 'scratch operand']
  %s0 = inlined_call_operand.vmem [shape: bf16[2,4,100,16], index: 0, kind: input, shape index: {}]
  %s1 = inlined_call_operand.vmem [shape: f32[100,1], index: 1, kind: input, shape index: {}]
  %s2 = inlined_call_operand.vmem [shape: bf16[16,8], index: 2, kind: input, shape index: {}]
  %s3 = inlined_call_operand.vmem [shape: f32[1,8], index: 3, kind: input, shape index: {}]
  %s4 = inlined_call_operand.vmem [shape: bf16[9,8,8], index: 4, kind: input, shape index: {}]
  %s5 = inlined_call_operand.vmem [shape: f32[1,8], index: 5, kind: input, shape index: {}]
  %s6 = inlined_call_operand.vmem [shape: bf16[8,32], index: 6, kind: input, shape index: {}]
  %s7 = inlined_call_operand.vmem [shape: f32[1,32], index: 7, kind: input, shape index: {}]
  %s8 = inlined_call_operand.vmem [shape: f32[16,32], index: 8, kind: input, shape index: {}]
  %s9 = inlined_call_operand.vmem [shape: f32[2,100,32], index: 9, kind: output, shape index: {}]
  %s10 = sld [smem:[#allocation0]]
  $region69: #{tpu_custom_call.1} parent=0
    _
  %s12 = ssub.s32 1, %s10
  %s13 = scalar_select 0, %s12, %s10
  loop: start=0, step=1, limit=4
  $region2: #{tpu_custom_call.1} parent=0 // loop_pre_header
    _
  $region3: #{tpu_custom_call.1} parent=0 // loop_header
    %s15 = sphi 0, %s19
    %p16 = scmp.ge.s32.totalorder %s15, 4
    %s25 = sphi 0, %s27
    %s28 = sphi 0, %s25
    %s29 = sphi 0, %s28
    %s45 = sphi 0, %s29
    %s49 = sphi 0, %s49
    %s51 = sphi 0, %s49
    %s52 = sphi 0, %s51
    %s66 = sphi 0, %s52
    %s70 = sphi 0, %s70
    %s72 = sphi 0, %s70
    %s73 = sphi 0, %s72
    %s87 = sphi 0, %s73
    %s91 = sphi 0, %s91
    %s93 = sphi 0, %s91
    %s94 = sphi 0, %s93
    %s108 = sphi 0, %s94
    %s112 = sphi 0, %s112
    %s114 = sphi 0, %s112
    %s115 = sphi 0, %s114
    %s129 = sphi 0, %s115
    %s133 = sphi 0, %s133
    %s135 = sphi 0, %s133
    %s136 = sphi 0, %s135
    %s150 = sphi 0, %s136
    %s154 = sphi 0, %s154
    %s156 = sphi 0, %s154
    %s157 = sphi 0, %s156
    %s171 = sphi 0, %s157
    %s175 = sphi 0, %s175
    %s177 = sphi 0, %s175
    %s178 = sphi 0, %s177
    %s192 = sphi 0, %s178
    %s196 = sphi 0, %s196
    %s198 = sphi 0, %s196
    %s199 = sphi 0, %s198
    %s213 = sphi 0, %s199
    %s219 = sphi 0, %s221
    %s222 = sphi 0, %s219
    %s223 = sphi 0, %s222
    %s239 = sphi 0, %s223
  $region4: #{tpu_custom_call.1} parent=0 // loop_header_branch
    %18 = sbr.rel (%p16) target = $region8
  $region5: #{tpu_custom_call.1} parent=0 // loop_body
    %s20 = ssub.s32 %s15, 1
    %s21 = ssub.s32 %s15, 2
    %s22 = sadd.s32 %s15, 1
    %s23 = ssub.s32 %s15, %s22
    %p24 = scmp.eq.s32.totalorder %s23, 0
    %s26 = sadd.s32 %s25, 1
    %s27 = scalar_select %p24, %s25, %s26
    %p30 = pneg %p24
    %p31 = scmp.eq.s32.totalorder %s15, 1
    %p32 = por %p30, %p31
    %p33 = scmp.ne.s32.totalorder %s25, %s28
    %p34 = scmp.eq.s32.totalorder %s15, 0
    %p35 = por %p33, %p34
    %p36 = scmp.ne.s32.totalorder %s25, %s28
    %p37 = scmp.eq.s32.totalorder %s20, 1
    %p38 = por %p36, %p37
    %p39 = scmp.ne.s32.totalorder %s28, %s29
    %p40 = scmp.eq.s32.totalorder %s20, 0
    %p41 = por %p39, %p40
    %p42 = scmp.ne.s32.totalorder %s28, %s29
    %p43 = scmp.eq.s32.totalorder %s21, 1
    %p44 = por %p42, %p43
    %p46 = scmp.ne.s32.totalorder %s29, %s45
    %p47 = scmp.eq.s32.totalorder %s21, 0
    %p48 = por %p46, %p47
    %s50 = sadd.s32 %s49, 1
    %p53 = scmp.eq.s32.totalorder %s15, 1
    %p54 = scmp.ne.s32.totalorder %s49, %s51
    %p55 = scmp.eq.s32.totalorder %s15, 0
    %p56 = por %p54, %p55
    %p57 = scmp.ne.s32.totalorder %s49, %s51
    %p58 = scmp.eq.s32.totalorder %s20, 1
    %p59 = por %p57, %p58
    %p60 = scmp.ne.s32.totalorder %s51, %s52
    %p61 = scmp.eq.s32.totalorder %s20, 0
    %p62 = por %p60, %p61
    %p63 = scmp.ne.s32.totalorder %s51, %s52
    %p64 = scmp.eq.s32.totalorder %s21, 1
    %p65 = por %p63, %p64
    %p67 = scmp.ne.s32.totalorder %s52, %s66
    %p68 = scmp.eq.s32.totalorder %s21, 0
    %p69 = por %p67, %p68
    %s71 = sadd.s32 %s70, 1
    %p74 = scmp.eq.s32.totalorder %s15, 1
    %p75 = scmp.ne.s32.totalorder %s70, %s72
    %p76 = scmp.eq.s32.totalorder %s15, 0
    %p77 = por %p75, %p76
    %p78 = scmp.ne.s32.totalorder %s70, %s72
    %p79 = scmp.eq.s32.totalorder %s20, 1
    %p80 = por %p78, %p79
    %p81 = scmp.ne.s32.totalorder %s72, %s73
    %p82 = scmp.eq.s32.totalorder %s20, 0
    %p83 = por %p81, %p82
    %p84 = scmp.ne.s32.totalorder %s72, %s73
    %p85 = scmp.eq.s32.totalorder %s21, 1
    %p86 = por %p84, %p85
    %p88 = scmp.ne.s32.totalorder %s73, %s87
    %p89 = scmp.eq.s32.totalorder %s21, 0
    %p90 = por %p88, %p89
    %s92 = sadd.s32 %s91, 1
    %p95 = scmp.eq.s32.totalorder %s15, 1
    %p96 = scmp.ne.s32.totalorder %s91, %s93
    %p97 = scmp.eq.s32.totalorder %s15, 0
    %p98 = por %p96, %p97
    %p99 = scmp.ne.s32.totalorder %s91, %s93
    %p100 = scmp.eq.s32.totalorder %s20, 1
    %p101 = por %p99, %p100
    %p102 = scmp.ne.s32.totalorder %s93, %s94
    %p103 = scmp.eq.s32.totalorder %s20, 0
    %p104 = por %p102, %p103
    %p105 = scmp.ne.s32.totalorder %s93, %s94
    %p106 = scmp.eq.s32.totalorder %s21, 1
    %p107 = por %p105, %p106
    %p109 = scmp.ne.s32.totalorder %s94, %s108
    %p110 = scmp.eq.s32.totalorder %s21, 0
    %p111 = por %p109, %p110
    %s113 = sadd.s32 %s112, 1
    %p116 = scmp.eq.s32.totalorder %s15, 1
    %p117 = scmp.ne.s32.totalorder %s112, %s114
    %p118 = scmp.eq.s32.totalorder %s15, 0
    %p119 = por %p117, %p118
    %p120 = scmp.ne.s32.totalorder %s112, %s114
    %p121 = scmp.eq.s32.totalorder %s20, 1
    %p122 = por %p120, %p121
    %p123 = scmp.ne.s32.totalorder %s114, %s115
    %p124 = scmp.eq.s32.totalorder %s20, 0
    %p125 = por %p123, %p124
    %p126 = scmp.ne.s32.totalorder %s114, %s115
    %p127 = scmp.eq.s32.totalorder %s21, 1
    %p128 = por %p126, %p127
    %p130 = scmp.ne.s32.totalorder %s115, %s129
    %p131 = scmp.eq.s32.totalorder %s21, 0
    %p132 = por %p130, %p131
    %s134 = sadd.s32 %s133, 1
    %p137 = scmp.eq.s32.totalorder %s15, 1
    %p138 = scmp.ne.s32.totalorder %s133, %s135
    %p139 = scmp.eq.s32.totalorder %s15, 0
    %p140 = por %p138, %p139
    %p141 = scmp.ne.s32.totalorder %s133, %s135
    %p142 = scmp.eq.s32.totalorder %s20, 1
    %p143 = por %p141, %p142
    %p144 = scmp.ne.s32.totalorder %s135, %s136
    %p145 = scmp.eq.s32.totalorder %s20, 0
    %p146 = por %p144, %p145
    %p147 = scmp.ne.s32.totalorder %s135, %s136
    %p148 = scmp.eq.s32.totalorder %s21, 1
    %p149 = por %p147, %p148
    %p151 = scmp.ne.s32.totalorder %s136, %s150
    %p152 = scmp.eq.s32.totalorder %s21, 0
    %p153 = por %p151, %p152
    %s155 = sadd.s32 %s154, 1
    %p158 = scmp.eq.s32.totalorder %s15, 1
    %p159 = scmp.ne.s32.totalorder %s154, %s156
    %p160 = scmp.eq.s32.totalorder %s15, 0
    %p161 = por %p159, %p160
    %p162 = scmp.ne.s32.totalorder %s154, %s156
    %p163 = scmp.eq.s32.totalorder %s20, 1
    %p164 = por %p162, %p163
    %p165 = scmp.ne.s32.totalorder %s156, %s157
    %p166 = scmp.eq.s32.totalorder %s20, 0
    %p167 = por %p165, %p166
    %p168 = scmp.ne.s32.totalorder %s156, %s157
    %p169 = scmp.eq.s32.totalorder %s21, 1
    %p170 = por %p168, %p169
    %p172 = scmp.ne.s32.totalorder %s157, %s171
    %p173 = scmp.eq.s32.totalorder %s21, 0
    %p174 = por %p172, %p173
    %s176 = sadd.s32 %s175, 1
    %p179 = scmp.eq.s32.totalorder %s15, 1
    %p180 = scmp.ne.s32.totalorder %s175, %s177
    %p181 = scmp.eq.s32.totalorder %s15, 0
    %p182 = por %p180, %p181
    %p183 = scmp.ne.s32.totalorder %s175, %s177
    %p184 = scmp.eq.s32.totalorder %s20, 1
    %p185 = por %p183, %p184
    %p186 = scmp.ne.s32.totalorder %s177, %s178
    %p187 = scmp.eq.s32.totalorder %s20, 0
    %p188 = por %p186, %p187
    %p189 = scmp.ne.s32.totalorder %s177, %s178
    %p190 = scmp.eq.s32.totalorder %s21, 1
    %p191 = por %p189, %p190
    %p193 = scmp.ne.s32.totalorder %s178, %s192
    %p194 = scmp.eq.s32.totalorder %s21, 0
    %p195 = por %p193, %p194
    %s197 = sadd.s32 %s196, 1
    %p200 = scmp.eq.s32.totalorder %s15, 1
    %p201 = scmp.ne.s32.totalorder %s196, %s198
    %p202 = scmp.eq.s32.totalorder %s15, 0
    %p203 = por %p201, %p202
    %p204 = scmp.ne.s32.totalorder %s196, %s198
    %p205 = scmp.eq.s32.totalorder %s20, 1
    %p206 = por %p204, %p205
    %p207 = scmp.ne.s32.totalorder %s198, %s199
    %p208 = scmp.eq.s32.totalorder %s20, 0
    %p209 = por %p207, %p208
    %p210 = scmp.ne.s32.totalorder %s198, %s199
    %p211 = scmp.eq.s32.totalorder %s21, 1
    %p212 = por %p210, %p211
    %p214 = scmp.ne.s32.totalorder %s199, %s213
    %p215 = scmp.eq.s32.totalorder %s21, 0
    %p216 = por %p214, %p215
    %s217 = ssub.s32 %s15, %s22
    %p218 = scmp.eq.s32.totalorder %s217, 0
    %s220 = sadd.s32 %s219, 1
    %s221 = scalar_select %p218, %s219, %s220
    %p224 = pneg %p218
    %p225 = scmp.eq.s32.totalorder %s15, 1
    %p226 = por %p224, %p225
    %p227 = scmp.ne.s32.totalorder %s219, %s222
    %p228 = scmp.eq.s32.totalorder %s15, 0
    %p229 = por %p227, %p228
    %p230 = scmp.ne.s32.totalorder %s219, %s222
    %p231 = scmp.eq.s32.totalorder %s20, 1
    %p232 = por %p230, %p231
    %p233 = scmp.ne.s32.totalorder %s222, %s223
    %p234 = scmp.eq.s32.totalorder %s20, 0
    %p235 = por %p233, %p234
    %p236 = scmp.ne.s32.totalorder %s222, %s223
    %p237 = scmp.eq.s32.totalorder %s21, 1
    %p238 = por %p236, %p237
    %p240 = scmp.ne.s32.totalorder %s223, %s239
    %p241 = scmp.eq.s32.totalorder %s21, 0
    %p242 = por %p240, %p241
    %p243 = scmp.le.s32.totalorder 1, %s15
    %p244 = scmp.lt.s32.totalorder %s15, 3
    %p245 = pnand %p243, %p244
    %p246 = pneg %p245
    // Predicated region
    $region9: #{tpu_custom_call.1} parent=5 // pred_check
      _
    $region10: #{tpu_custom_call.1} parent=5 // pred_check_branch
      %248 = sbr.rel (%p245) target = $region12
    $region11: #{tpu_custom_call.1} parent=5 // pred_region
      %s249 = ssub.s32 %s15, 1
      // Predicated region
      $region13: #{tpu_custom_call.1} parent=11 // pred_check
        %p250 = pneg %p62
      $region14: #{tpu_custom_call.1} parent=11 // pred_check_branch
        %252 = sbr.rel (%p250) target = $region16
      $region15: #{tpu_custom_call.1} parent=11 // pred_region
        _
      $region16: #{tpu_custom_call.1} parent=11 // pred_fallthru
        _
      // Predicated region
      $region17: #{tpu_custom_call.1} parent=11 // pred_check
        %p253 = pneg %p83
      $region18: #{tpu_custom_call.1} parent=11 // pred_check_branch
        %255 = sbr.rel (%p253) target = $region20
      $region19: #{tpu_custom_call.1} parent=11 // pred_region
        _
      $region20: #{tpu_custom_call.1} parent=11 // pred_fallthru
        _
      // Predicated region
      $region21: #{tpu_custom_call.1} parent=11 // pred_check
        %p256 = pneg %p104
      $region22: #{tpu_custom_call.1} parent=11 // pred_check_branch
        %258 = sbr.rel (%p256) target = $region24
      $region23: #{tpu_custom_call.1} parent=11 // pred_region
        _
      $region24: #{tpu_custom_call.1} parent=11 // pred_fallthru
        _
      // Predicated region
      $region25: #{tpu_custom_call.1} parent=11 // pred_check
        %p259 = pneg %p125
      $region26: #{tpu_custom_call.1} parent=11 // pred_check_branch
        %261 = sbr.rel (%p259) target = $region28
      $region27: #{tpu_custom_call.1} parent=11 // pred_region
        _
      $region28: #{tpu_custom_call.1} parent=11 // pred_fallthru
        _
      // Predicated region
      $region29: #{tpu_custom_call.1} parent=11 // pred_check
        %p262 = pneg %p146
      $region30: #{tpu_custom_call.1} parent=11 // pred_check_branch
        %264 = sbr.rel (%p262) target = $region32
      $region31: #{tpu_custom_call.1} parent=11 // pred_region
        _
      $region32: #{tpu_custom_call.1} parent=11 // pred_fallthru
        _
      // Predicated region
      $region33: #{tpu_custom_call.1} parent=11 // pred_check
        %p265 = pneg %p167
      $region34: #{tpu_custom_call.1} parent=11 // pred_check_branch
        %267 = sbr.rel (%p265) target = $region36
      $region35: #{tpu_custom_call.1} parent=11 // pred_region
        _
      $region36: #{tpu_custom_call.1} parent=11 // pred_fallthru
        _
      // Predicated region
      $region37: #{tpu_custom_call.1} parent=11 // pred_check
        %p268 = pneg %p188
      $region38: #{tpu_custom_call.1} parent=11 // pred_check_branch
        %270 = sbr.rel (%p268) target = $region40
      $region39: #{tpu_custom_call.1} parent=11 // pred_region
        _
      $region40: #{tpu_custom_call.1} parent=11 // pred_fallthru
        _
      // Predicated region
      $region41: #{tpu_custom_call.1} parent=11 // pred_check
        %p271 = pneg %p209
      $region42: #{tpu_custom_call.1} parent=11 // pred_check_branch
        %273 = sbr.rel (%p271) target = $region44
      $region43: #{tpu_custom_call.1} parent=11 // pred_region
        _
      $region44: #{tpu_custom_call.1} parent=11 // pred_fallthru
        _
    $region12: #{tpu_custom_call.1} parent=5 // pred_fallthru
      _
    %p274 = scmp.lt.s32.totalorder %s15, 2
    // Predicated region
    $region45: #{tpu_custom_call.1} parent=5 // pred_check
      %p275 = pneg %p274
    $region46: #{tpu_custom_call.1} parent=5 // pred_check_branch
      %277 = sbr.rel (%p275) target = $region48
    $region47: #{tpu_custom_call.1} parent=5 // pred_region
      // Predicated region
      $region49: #{tpu_custom_call.1} parent=47 // pred_check
        %p278 = pneg %p35
      $region50: #{tpu_custom_call.1} parent=47 // pred_check_branch
        %280 = sbr.rel (%p278) target = $region52
      $region51: #{tpu_custom_call.1} parent=47 // pred_region
        %p281 = scmp.lt.s32.totalorder %s15, 1
        %s282 = scalar_select %p281, %s15, 1
        %s283 = smul.addr %s282, 52
        %s284 = smul.addr %s283, 4
        %s285 = scalar_lea.vmem %s0, %s284
      $region52: #{tpu_custom_call.1} parent=47 // pred_fallthru
        _
    $region48: #{tpu_custom_call.1} parent=5 // pred_fallthru
      _
    %p286 = scmp.le.s32.totalorder 1, %s15
    %p287 = scmp.lt.s32.totalorder %s15, 3
    %p288 = pnand %p286, %p287
    %p289 = pneg %p288
    // Predicated region
    $region53: #{tpu_custom_call.1} parent=5 // pred_check
      _
    $region54: #{tpu_custom_call.1} parent=5 // pred_check_branch
      %291 = sbr.rel (%p288) target = $region56
    $region55: #{tpu_custom_call.1} parent=5 // pred_region
      %s292 = ssub.s32 %s15, 1
      %p293 = scmp.lt.s32.totalorder %s20, 1
      %s294 = scalar_select %p293, %s20, 1
      %s295 = smul.addr %s294, 52
      %s296 = smul.addr %s295, 4
      %s297 = scalar_lea.vmem %s0, %s296
      %p298 = pneg %p41
      %p299 = pneg %p38
      %p300 = pneg %p62
      %p301 = pneg %p59
      %p302 = pneg %p83
      %p303 = pneg %p80
      %p304 = pneg %p104
      %p305 = pneg %p101
      %p306 = pneg %p125
      %p307 = pneg %p122
      %p308 = pneg %p146
      %p309 = pneg %p143
      %p310 = pneg %p167
      %p311 = pneg %p164
      %p312 = pneg %p188
      %p313 = pneg %p185
      %p314 = pneg %p209
      %p315 = pneg %p206
      %p316 = pneg %p235
      %p317 = pneg %p232
      %p318 = scmp.lt.s32.totalorder %s20, 1
      %s319 = scalar_select %p318, %s20, 1
      %s320 = smul.addr %s319, 13
      %s321 = smul.addr %s320, 8
      %s322 = scalar_lea.vmem %s9, %s321
      %p323 = scmp.lt.s32.totalorder %s20, 1
      %s324 = scalar_select %p323, %s20, 1
      %s325 = smul.addr %s324, 52
      %s326 = smul.addr %s325, 4
      %s327 = scalar_lea.vmem %s0, %s326
      %p328 = scmp.lt.s32.totalorder %s20, 1
      %s329 = scalar_select %p328, %s20, 1
      %s330 = smul.addr %s329, 13
      %s331 = smul.addr %s330, 8
      %s332 = scalar_lea.vmem %s9, %s331
      %v334 = vld [vmem:[%s1] sm:$0xff]
      %v335 = vld [vmem:[%s1 + $0x8] sm:$0xff]
      %v336 = vld [vmem:[%s1 + $0x10] sm:$0xff]
      %v337 = vld [vmem:[%s1 + $0x18] sm:$0xff]
      %v338 = vld [vmem:[%s1 + $0x20] sm:$0xff]
      %v339 = vld [vmem:[%s1 + $0x28] sm:$0xff]
      %v340 = vld [vmem:[%s1 + $0x30] sm:$0xff]
      %v341 = vld [vmem:[%s1 + $0x38] sm:$0xff]
      %v342 = vld [vmem:[%s1 + $0x40] sm:$0xff]
      %v343 = vld [vmem:[%s1 + $0x48] sm:$0xff]
      %v344 = vld [vmem:[%s1 + $0x50] sm:$0xff]
      %v345 = vld [vmem:[%s1 + $0x58] sm:$0xff]
      %v346 = vld [vmem:[%s1 + $0x60] sm:$0xf]
      %v347 = vld [vmem:[%s2] sm:$0xf]
      %v348 = vld [vmem:[%s2 + $0x4] sm:$0xf]
      %v349 = vld [vmem:[%s3] sm:$0x1]
      %vm350 = vcmask 64512
      %351 = vst.msk [vmem:[#allocation2] sm:$0xff] %vm350, 0.0
      %352 = vst.msk [vmem:[#allocation2 + $0x8] sm:$0xff] %vm350, 0.0
      %353 = vst.msk [vmem:[#allocation2 + $0x10] sm:$0xff] %vm350, 0.0
      %354 = vst.msk [vmem:[#allocation2 + $0x18] sm:$0xff] %vm350, 0.0
      %355 = vst.msk [vmem:[#allocation2 + $0x20] sm:$0xff] %vm350, 0.0
      %356 = vst.msk [vmem:[#allocation2 + $0x28] sm:$0xff] %vm350, 0.0
      %357 = vst.msk [vmem:[#allocation2 + $0x30] sm:$0xff] %vm350, 0.0
      %358 = vst.msk [vmem:[#allocation2 + $0x38] sm:$0xff] %vm350, 0.0
      %359 = vst.msk [vmem:[#allocation2 + $0x40] sm:$0xff] %vm350, 0.0
      %360 = vst.msk [vmem:[#allocation2 + $0x48] sm:$0xff] %vm350, 0.0
      %361 = vst.msk [vmem:[#allocation2 + $0x50] sm:$0xff] %vm350, 0.0
      %362 = vst.msk [vmem:[#allocation2 + $0x58] sm:$0xff] %vm350, 0.0
      %363 = vst.msk [vmem:[#allocation2 + $0x60] sm:$0xff] %vm350, 0.0
      %364 = vst.msk [vmem:[#allocation2 + $0x68] sm:$0xff] %vm350, 0.0
      %365 = vst.msk [vmem:[#allocation2 + $0x70] sm:$0xff] %vm350, 0.0
      %366 = vst.msk [vmem:[#allocation2 + $0x78] sm:$0xff] %vm350, 0.0
      %vm367 = vcmask 60416
      %368 = vst.msk [vmem:[#allocation2 + $0x80] sm:$0xf] %vm367, 0.0
      %369 = vst.msk [vmem:[#allocation2 + $0x88] sm:$0xff] %vm350, 0.0
      %370 = vst.msk [vmem:[#allocation2 + $0x90] sm:$0xff] %vm350, 0.0
      %371 = vst.msk [vmem:[#allocation2 + $0x98] sm:$0xff] %vm350, 0.0
      %372 = vst.msk [vmem:[#allocation2 + $0xa0] sm:$0xff] %vm350, 0.0
      %373 = vst.msk [vmem:[#allocation2 + $0xa8] sm:$0xff] %vm350, 0.0
      %374 = vst.msk [vmem:[#allocation2 + $0xb0] sm:$0xff] %vm350, 0.0
      %375 = vst.msk [vmem:[#allocation2 + $0xb8] sm:$0xff] %vm350, 0.0
      %376 = vst.msk [vmem:[#allocation2 + $0xc0] sm:$0xff] %vm350, 0.0
      %377 = vst.msk [vmem:[#allocation2 + $0xc8] sm:$0xff] %vm350, 0.0
      %378 = vst.msk [vmem:[#allocation2 + $0xd0] sm:$0xff] %vm350, 0.0
      %379 = vst.msk [vmem:[#allocation2 + $0xd8] sm:$0xff] %vm350, 0.0
      %380 = vst.msk [vmem:[#allocation2 + $0xe0] sm:$0xff] %vm350, 0.0
      %381 = vst.msk [vmem:[#allocation2 + $0xe8] sm:$0xff] %vm350, 0.0
      %382 = vst.msk [vmem:[#allocation2 + $0xf0] sm:$0xff] %vm350, 0.0
      %383 = vst.msk [vmem:[#allocation2 + $0xf8] sm:$0xff] %vm350, 0.0
      %384 = vst.msk [vmem:[#allocation2 + $0x100] sm:$0xff] %vm350, 0.0
      %385 = vst.msk [vmem:[#allocation2 + $0x108] sm:$0xf] %vm367, 0.0
      %386 = vst.msk [vmem:[#allocation2 + $0x110] sm:$0xff] %vm350, 0.0
      %387 = vst.msk [vmem:[#allocation2 + $0x118] sm:$0xff] %vm350, 0.0
      %388 = vst.msk [vmem:[#allocation2 + $0x120] sm:$0xff] %vm350, 0.0
      %389 = vst.msk [vmem:[#allocation2 + $0x128] sm:$0xff] %vm350, 0.0
      %390 = vst.msk [vmem:[#allocation2 + $0x130] sm:$0xff] %vm350, 0.0
      %391 = vst.msk [vmem:[#allocation2 + $0x138] sm:$0xff] %vm350, 0.0
      %392 = vst.msk [vmem:[#allocation2 + $0x140] sm:$0xff] %vm350, 0.0
      %393 = vst.msk [vmem:[#allocation2 + $0x148] sm:$0xff] %vm350, 0.0
      %394 = vst.msk [vmem:[#allocation2 + $0x150] sm:$0xff] %vm350, 0.0
      %395 = vst.msk [vmem:[#allocation2 + $0x158] sm:$0xff] %vm350, 0.0
      %396 = vst.msk [vmem:[#allocation2 + $0x160] sm:$0xff] %vm350, 0.0
      %397 = vst.msk [vmem:[#allocation2 + $0x168] sm:$0xff] %vm350, 0.0
      %398 = vst.msk [vmem:[#allocation2 + $0x170] sm:$0xff] %vm350, 0.0
      %399 = vst.msk [vmem:[#allocation2 + $0x178] sm:$0xff] %vm350, 0.0
      %400 = vst.msk [vmem:[#allocation2 + $0x180] sm:$0xff] %vm350, 0.0
      %401 = vst.msk [vmem:[#allocation2 + $0x188] sm:$0xff] %vm350, 0.0
      %402 = vst.msk [vmem:[#allocation2 + $0x190] sm:$0xf] %vm367, 0.0
      %403 = vst.msk [vmem:[#allocation2 + $0x198] sm:$0xff] %vm350, 0.0
      %404 = vst.msk [vmem:[#allocation2 + $0x1a0] sm:$0xff] %vm350, 0.0
      %405 = vst.msk [vmem:[#allocation2 + $0x1a8] sm:$0xff] %vm350, 0.0
      %406 = vst.msk [vmem:[#allocation2 + $0x1b0] sm:$0xff] %vm350, 0.0
      %407 = vst.msk [vmem:[#allocation2 + $0x1b8] sm:$0xff] %vm350, 0.0
      %408 = vst.msk [vmem:[#allocation2 + $0x1c0] sm:$0xff] %vm350, 0.0
      %409 = vst.msk [vmem:[#allocation2 + $0x1c8] sm:$0xff] %vm350, 0.0
      %410 = vst.msk [vmem:[#allocation2 + $0x1d0] sm:$0xff] %vm350, 0.0
      %411 = vst.msk [vmem:[#allocation2 + $0x1d8] sm:$0xff] %vm350, 0.0
      %412 = vst.msk [vmem:[#allocation2 + $0x1e0] sm:$0xff] %vm350, 0.0
      %413 = vst.msk [vmem:[#allocation2 + $0x1e8] sm:$0xff] %vm350, 0.0
      %414 = vst.msk [vmem:[#allocation2 + $0x1f0] sm:$0xff] %vm350, 0.0
      %415 = vst.msk [vmem:[#allocation2 + $0x1f8] sm:$0xff] %vm350, 0.0
      %416 = vst.msk [vmem:[#allocation2 + $0x200] sm:$0xff] %vm350, 0.0
      %417 = vst.msk [vmem:[#allocation2 + $0x208] sm:$0xff] %vm350, 0.0
      %418 = vst.msk [vmem:[#allocation2 + $0x210] sm:$0xff] %vm350, 0.0
      %419 = vst.msk [vmem:[#allocation2 + $0x218] sm:$0xf] %vm367, 0.0
      %v420 = vld [vmem:[%s327] sm:$0xf]
      %v421 = vld [vmem:[%s327 + $0x4] sm:$0xf]
      %v422 = vld [vmem:[%s327 + $0x8] sm:$0xf]
      %v423 = vld [vmem:[%s327 + $0xc] sm:$0xf]
      %v424 = vld [vmem:[%s327 + $0x10] sm:$0xf]
      %v425 = vld [vmem:[%s327 + $0x14] sm:$0xf]
      %v426 = vld [vmem:[%s327 + $0x18] sm:$0xf]
      %v427 = vld [vmem:[%s327 + $0x1c] sm:$0xf]
      %v428 = vld [vmem:[%s327 + $0x20] sm:$0xf]
      %v429 = vld [vmem:[%s327 + $0x24] sm:$0xf]
      %v430 = vld [vmem:[%s327 + $0x28] sm:$0xf]
      %v431 = vld [vmem:[%s327 + $0x2c] sm:$0xf]
      %v432 = vld [vmem:[%s327 + $0x30] sm:$0x3]
      %v433 = vunpack.c.l.bf16 %v420
      %v434 = vunpack.c.l.bf16 %v421
      %v435 = vunpack.c.l.bf16 %v422
      %v436 = vunpack.c.l.bf16 %v423
      %v437 = vunpack.c.l.bf16 %v424
      %v438 = vunpack.c.l.bf16 %v425
      %v439 = vunpack.c.l.bf16 %v426
      %v440 = vunpack.c.l.bf16 %v427
      %v441 = vunpack.c.l.bf16 %v428
      %v442 = vunpack.c.l.bf16 %v429
      %v443 = vunpack.c.l.bf16 %v430
      %v444 = vunpack.c.l.bf16 %v431
      %v445 = vunpack.c.l.bf16 %v432
      %v446 = vadd.f32 %v433, 0.0
      %v447 = vadd.f32 %v434, 0.0
      %v448 = vadd.f32 %v435, 0.0
      %v449 = vadd.f32 %v436, 0.0
      %v450 = vadd.f32 %v437, 0.0
      %v451 = vadd.f32 %v438, 0.0
      %v452 = vadd.f32 %v439, 0.0
      %v453 = vadd.f32 %v440, 0.0
      %v454 = vadd.f32 %v441, 0.0
      %v455 = vadd.f32 %v442, 0.0
      %v456 = vadd.f32 %v443, 0.0
      %v457 = vadd.f32 %v444, 0.0
      %v458 = vadd.f32 %v445, 0.0
      %v460 = vlaneseq
      %v461 = vshrl.u32 %v460, 7
      %v462 = vsub.s32 0, %v461
      %v463 = vrot.slane %v349, %v462
      %v478 = vunpack.c.l.b16 %v420
      %v479 = vunpack.c.l.b16 %v421
      %v480 = vunpack.c.l.b16 %v422
      %v481 = vunpack.c.l.b16 %v423
      %v482 = vunpack.c.l.b16 %v424
      %v483 = vunpack.c.l.b16 %v425
      %v484 = vunpack.c.l.b16 %v426
      %v485 = vunpack.c.l.b16 %v427
      %v486 = vunpack.c.l.b16 %v428
      %v487 = vunpack.c.l.b16 %v429
      %v488 = vunpack.c.l.b16 %v430
      %v489 = vunpack.c.l.b16 %v431
      %v490 = vunpack.c.l.b16 %v432
      %v491 = vpack.c.b16 %v479, %v478
      %v492 = vpack.c.b16 %v481, %v480
      %v493 = vpack.c.b16 %v483, %v482
      %v494 = vpack.c.b16 %v485, %v484
      %v495 = vpack.c.b16 %v487, %v486
      %v496 = vpack.c.b16 %v489, %v488
      %v497 = vpack.c.b16 %v490, %v490
      %v500 = vunpack.c.l.b16 %v347
      %v501 = vunpack.c.l.b16 %v348
      %v502 = vpack.c.b16 %v501, %v500
      %vm504 = vcmask 130048
      %v506 = vsel %vm504, %v491, 0
      %v509 = vsel %vm504, %v492, 0
      %v512 = vsel %vm504, %v493, 0
      %v515 = vsel %vm504, %v494, 0
      %v518 = vsel %vm504, %v495, 0
      %v521 = vsel %vm504, %v496, 0
      %v524 = vsel %vm504, %v497, 0
      %526 = vmatprep.subr.bf16.mxu0 0
      %527 = vmatpush1.bf16.msra.mxu0 %v502
      %528 = vmatprep.subr.bf16.mxu0 0
      %529 = vmatpush1.bf16.msra.mxu0 0
      %530 = vmatprep.subr.bf16.mxu0 0
      %531 = vmatpush1.bf16.msra.mxu0 0
      %532 = vmatprep.subr.bf16.mxu0 0
      %533 = vmatpush1.bf16.msra.mxu0 0
      %534 = vmatprep.subr.bf16.mxu0 0
      %535 = vmatpush1.bf16.msra.mxu0 0
      %536 = vmatprep.subr.bf16.mxu0 0
      %537 = vmatpush1.bf16.msra.mxu0 0
      %538 = vmatprep.subr.bf16.mxu0 0
      %539 = vmatpush1.bf16.msra.mxu0 0
      %540 = vmatprep.subr.bf16.mxu0 0
      %541 = vmatpush1.bf16.msra.mxu0 0
      %542 = vmatprep.subr.bf16.mxu0 0
      %543 = vmatpush1.bf16.msra.mxu0 0
      %544 = vmatprep.subr.bf16.mxu0 0
      %545 = vmatpush1.bf16.msra.mxu0 0
      %546 = vmatprep.subr.bf16.mxu0 0
      %547 = vmatpush1.bf16.msra.mxu0 0
      %548 = vmatprep.subr.bf16.mxu0 0
      %549 = vmatpush1.bf16.msra.mxu0 0
      %550 = vmatprep.subr.bf16.mxu0 0
      %551 = vmatpush1.bf16.msra.mxu0 0
      %552 = vmatprep.subr.bf16.mxu0 0
      %553 = vmatpush1.bf16.msra.mxu0 0
      %554 = vmatprep.subr.bf16.mxu0 0
      %555 = vmatpush1.bf16.msra.mxu0 0
      %556 = vmatprep.subr.bf16.mxu0 0
      %557 = vmatpush1.bf16.msra.mxu0 0
      %558 = vmatprep.mubr.bf16.mxu0 0
      %559 = vmatmul.mubr.bf16.gmra.mrb[0].mxu0 %v506
      %v560 = vpop.f32.mrb[0].mxu0
      %v561 = vadd.f32 %v463, %v560
      %v562 = vpop.f32.mrb[0].mxu0
      %v563 = vpop.f32.mrb[0].mxu0
      %v564 = vadd.f32 %v463, %v563
      %v565 = vpop.f32.mrb[0].mxu0
      %566 = vmatprep.mubr.bf16.mxu0 0
      %567 = vmatmul.mubr.bf16.gmra.mrb[0].mxu0 %v509
      %v568 = vpop.f32.mrb[0].mxu0
      %v569 = vadd.f32 %v463, %v568
      %v570 = vpop.f32.mrb[0].mxu0
      %v571 = vpop.f32.mrb[0].mxu0
      %v572 = vadd.f32 %v463, %v571
      %v573 = vpop.f32.mrb[0].mxu0
      %574 = vmatprep.mubr.bf16.mxu0 0
      %575 = vmatmul.mubr.bf16.gmra.mrb[0].mxu0 %v512
      %v576 = vpop.f32.mrb[0].mxu0
      %v577 = vadd.f32 %v463, %v576
      %v578 = vpop.f32.mrb[0].mxu0
      %v579 = vpop.f32.mrb[0].mxu0
      %v580 = vadd.f32 %v463, %v579
      %v581 = vpop.f32.mrb[0].mxu0
      %582 = vmatprep.mubr.bf16.mxu0 0
      %583 = vmatmul.mubr.bf16.gmra.mrb[0].mxu0 %v515
      %v584 = vpop.f32.mrb[0].mxu0
      %v585 = vadd.f32 %v463, %v584
      %v586 = vpop.f32.mrb[0].mxu0
      %v587 = vpop.f32.mrb[0].mxu0
      %v588 = vadd.f32 %v463, %v587
      %v589 = vpop.f32.mrb[0].mxu0
      %590 = vmatprep.mubr.bf16.mxu0 0
      %591 = vmatmul.mubr.bf16.gmra.mrb[0].mxu0 %v518
      %v592 = vpop.f32.mrb[0].mxu0
      %v593 = vadd.f32 %v463, %v592
      %v594 = vpop.f32.mrb[0].mxu0
      %v595 = vpop.f32.mrb[0].mxu0
      %v596 = vadd.f32 %v463, %v595
      %v597 = vpop.f32.mrb[0].mxu0
      %598 = vmatprep.mubr.bf16.mxu0 0
      %599 = vmatmul.mubr.bf16.gmra.mrb[0].mxu0 %v521
      %v600 = vpop.f32.mrb[0].mxu0
      %v601 = vadd.f32 %v463, %v600
      %v602 = vpop.f32.mrb[0].mxu0
      %v603 = vpop.f32.mrb[0].mxu0
      %v604 = vadd.f32 %v463, %v603
      %v605 = vpop.f32.mrb[0].mxu0
      %606 = vmatprep.mubr.bf16.mxu0 0
      %607 = vmatmul.mubr.bf16.gmra.mrb[0].mxu0 %v524
      %v608 = vpop.f32.mrb[0].mxu0
      %v609 = vadd.f32 %v463, %v608
      %v610 = vpop.f32.mrb[0].mxu0
      %v611 = vpop.f32.mrb[0].mxu0
      %v612 = vpop.f32.mrb[0].mxu0
      %613 = vdwg.mxu0
      %vm614 = vcmp.ge.f32.partialorder %v561, 0.0
      %vm615 = vcmp.ge.f32.partialorder %v564, 0.0
      %vm616 = vcmp.ge.f32.partialorder %v569, 0.0
      %vm617 = vcmp.ge.f32.partialorder %v572, 0.0
      %vm618 = vcmp.ge.f32.partialorder %v577, 0.0
      %vm619 = vcmp.ge.f32.partialorder %v580, 0.0
      %vm620 = vcmp.ge.f32.partialorder %v585, 0.0
      %vm621 = vcmp.ge.f32.partialorder %v588, 0.0
      %vm622 = vcmp.ge.f32.partialorder %v593, 0.0
      %vm623 = vcmp.ge.f32.partialorder %v596, 0.0
      %vm624 = vcmp.ge.f32.partialorder %v601, 0.0
      %vm625 = vcmp.ge.f32.partialorder %v604, 0.0
      %vm626 = vcmp.ge.f32.partialorder %v609, 0.0
      %v627 = vmul.f32 %v561, 0.01
      %v628 = vmul.f32 %v564, 0.01
      %v629 = vmul.f32 %v569, 0.01
      %v630 = vmul.f32 %v572, 0.01
      %v631 = vmul.f32 %v577, 0.01
      %v632 = vmul.f32 %v580, 0.01
      %v633 = vmul.f32 %v585, 0.01
      %v634 = vmul.f32 %v588, 0.01
      %v635 = vmul.f32 %v593, 0.01
      %v636 = vmul.f32 %v596, 0.01
      %v637 = vmul.f32 %v601, 0.01
      %v638 = vmul.f32 %v604, 0.01
      %v639 = vmul.f32 %v609, 0.01
      %v640 = vsel %vm614, %v561, %v627
      %v641 = vsel %vm615, %v564, %v628
      %v642 = vsel %vm616, %v569, %v629
      %v643 = vsel %vm617, %v572, %v630
      %v644 = vsel %vm618, %v577, %v631
      %v645 = vsel %vm619, %v580, %v632
      %v646 = vsel %vm620, %v585, %v633
      %v647 = vsel %vm621, %v588, %v634
      %v648 = vsel %vm622, %v593, %v635
      %v649 = vsel %vm623, %v596, %v636
      %v650 = vsel %vm624, %v601, %v637
      %v651 = vsel %vm625, %v604, %v638
      %v652 = vsel %vm626, %v609, %v639
      %654 = vset.pattern.permute.xlu0 0
      %655 = vperm.xlu0 %654, %v334
      %v656 = vpop.permute.xlu0 %655
      %659 = vset.pattern.permute.xlu0 0
      %660 = vperm.xlu0 %659, %v335
      %v661 = vpop.permute.xlu0 %660
      %664 = vset.pattern.permute.xlu0 0
      %665 = vperm.xlu0 %664, %v336
      %v666 = vpop.permute.xlu0 %665
      %669 = vset.pattern.permute.xlu0 0
      %670 = vperm.xlu0 %669, %v337
      %v671 = vpop.permute.xlu0 %670
      %674 = vset.pattern.permute.xlu0 0
      %675 = vperm.xlu0 %674, %v338
      %v676 = vpop.permute.xlu0 %675
      %679 = vset.pattern.permute.xlu0 0
      %680 = vperm.xlu0 %679, %v339
      %v681 = vpop.permute.xlu0 %680
      %684 = vset.pattern.permute.xlu0 0
      %685 = vperm.xlu0 %684, %v340
      %v686 = vpop.permute.xlu0 %685
      %689 = vset.pattern.permute.xlu0 0
      %690 = vperm.xlu0 %689, %v341
      %v691 = vpop.permute.xlu0 %690
      %694 = vset.pattern.permute.xlu0 0
      %695 = vperm.xlu0 %694, %v342
      %v696 = vpop.permute.xlu0 %695
      %699 = vset.pattern.permute.xlu0 0
      %700 = vperm.xlu0 %699, %v343
      %v701 = vpop.permute.xlu0 %700
      %704 = vset.pattern.permute.xlu0 0
      %705 = vperm.xlu0 %704, %v344
      %v706 = vpop.permute.xlu0 %705
      %709 = vset.pattern.permute.xlu0 0
      %710 = vperm.xlu0 %709, %v345
      %v711 = vpop.permute.xlu0 %710
      %714 = vset.pattern.permute.xlu0 0
      %715 = vperm.xlu0 %714, %v346
      %v716 = vpop.permute.xlu0 %715
      %v718 = vmul.f32 %v640, %v656
      %v719 = vmul.f32 %v641, %v661
      %v720 = vmul.f32 %v642, %v666
      %v721 = vmul.f32 %v643, %v671
      %v722 = vmul.f32 %v644, %v676
      %v723 = vmul.f32 %v645, %v681
      %v724 = vmul.f32 %v646, %v686
      %v725 = vmul.f32 %v647, %v691
      %v726 = vmul.f32 %v648, %v696
      %v727 = vmul.f32 %v649, %v701
      %v728 = vmul.f32 %v650, %v706
      %v729 = vmul.f32 %v651, %v711
      %v730 = vmul.f32 %v652, %v716
      %731 = vst.msk [vmem:[#allocation2 + $0x10] sm:$0xff] %vm350, %v718
      %732 = vst.msk [vmem:[#allocation2 + $0x18] sm:$0xff] %vm350, %v719
      %733 = vst.msk [vmem:[#allocation2 + $0x20] sm:$0xff] %vm350, %v720
      %734 = vst.msk [vmem:[#allocation2 + $0x28] sm:$0xff] %vm350, %v721
      %735 = vst.msk [vmem:[#allocation2 + $0x30] sm:$0xff] %vm350, %v722
      %736 = vst.msk [vmem:[#allocation2 + $0x38] sm:$0xff] %vm350, %v723
      %737 = vst.msk [vmem:[#allocation2 + $0x40] sm:$0xff] %vm350, %v724
      %738 = vst.msk [vmem:[#allocation2 + $0x48] sm:$0xff] %vm350, %v725
      %739 = vst.msk [vmem:[#allocation2 + $0x50] sm:$0xff] %vm350, %v726
      %740 = vst.msk [vmem:[#allocation2 + $0x58] sm:$0xff] %vm350, %v727
      %741 = vst.msk [vmem:[#allocation2 + $0x60] sm:$0xff] %vm350, %v728
      %742 = vst.msk [vmem:[#allocation2 + $0x68] sm:$0xff] %vm350, %v729
      %743 = vst.msk [vmem:[#allocation2 + $0x70] sm:$0xf] %vm367, %v730
      %s744 = scalar_lea.vmem %s327, 52
      %v745 = vld [vmem:[%s744] sm:$0xf]
      %v746 = vld [vmem:[%s744 + $0x4] sm:$0xf]
      %v747 = vld [vmem:[%s744 + $0x8] sm:$0xf]
      %v748 = vld [vmem:[%s744 + $0xc] sm:$0xf]
      %v749 = vld [vmem:[%s744 + $0x10] sm:$0xf]
      %v750 = vld [vmem:[%s744 + $0x14] sm:$0xf]
      %v751 = vld [vmem:[%s744 + $0x18] sm:$0xf]
      %v752 = vld [vmem:[%s744 + $0x1c] sm:$0xf]
      %v753 = vld [vmem:[%s744 + $0x20] sm:$0xf]
      %v754 = vld [vmem:[%s744 + $0x24] sm:$0xf]
      %v755 = vld [vmem:[%s744 + $0x28] sm:$0xf]
      %v756 = vld [vmem:[%s744 + $0x2c] sm:$0xf]
      %v757 = vld [vmem:[%s744 + $0x30] sm:$0x3]
      %v758 = vunpack.c.l.bf16 %v745
      %v759 = vunpack.c.l.bf16 %v746
      %v760 = vunpack.c.l.bf16 %v747
      %v761 = vunpack.c.l.bf16 %v748
      %v762 = vunpack.c.l.bf16 %v749
      %v763 = vunpack.c.l.bf16 %v750
      %v764 = vunpack.c.l.bf16 %v751
      %v765 = vunpack.c.l.bf16 %v752
      %v766 = vunpack.c.l.bf16 %v753
      %v767 = vunpack.c.l.bf16 %v754
      %v768 = vunpack.c.l.bf16 %v755
      %v769 = vunpack.c.l.bf16 %v756
      %v770 = vunpack.c.l.bf16 %v757
      %v771 = vadd.f32 %v446, %v758
      %v772 = vadd.f32 %v447, %v759
      %v773 = vadd.f32 %v448, %v760
      %v774 = vadd.f32 %v449, %v761
      %v775 = vadd.f32 %v450, %v762
      %v776 = vadd.f32 %v451, %v763
      %v777 = vadd.f32 %v452, %v764
      %v778 = vadd.f32 %v453, %v765
      %v779 = vadd.f32 %v454, %v766
      %v780 = vadd.f32 %v455, %v767
      %v781 = vadd.f32 %v456, %v768
      %v782 = vadd.f32 %v457, %v769
      %v783 = vadd.f32 %v458, %v770
      %v797 = vunpack.c.l.b16 %v745
      %v798 = vunpack.c.l.b16 %v746
      %v799 = vunpack.c.l.b16 %v747
      %v800 = vunpack.c.l.b16 %v748
      %v801 = vunpack.c.l.b16 %v749
      %v802 = vunpack.c.l.b16 %v750
      %v803 = vunpack.c.l.b16 %v751
      %v804 = vunpack.c.l.b16 %v752
      %v805 = vunpack.c.l.b16 %v753
      %v806 = vunpack.c.l.b16 %v754
      %v807 = vunpack.c.l.b16 %v755
      %v808 = vunpack.c.l.b16 %v756
      %v809 = vunpack.c.l.b16 %v757
      %v810 = vpack.c.b16 %v798, %v797
      %v811 = vpack.c.b16 %v800, %v799
      %v812 = vpack.c.b16 %v802, %v801
      %v813 = vpack.c.b16 %v804, %v803
      %v814 = vpack.c.b16 %v806, %v805
      %v815 = vpack.c.b16 %v808, %v807
      %v816 = vpack.c.b16 %v809, %v809
      %v818 = vsel %vm504, %v810, 0
      %v821 = vsel %vm504, %v811, 0
      %v824 = vsel %vm504, %v812, 0
      %v827 = vsel %vm504, %v813, 0
      %v830 = vsel %vm504, %v814, 0
      %v833 = vsel %vm504, %v815, 0
      %v836 = vsel %vm504, %v816, 0
      %838 = vmatprep.subr.bf16.mxu0 0
      %839 = vmatpush1.bf16.msra.mxu0 %v502
      %840 = vmatprep.subr.bf16.mxu0 0
      %841 = vmatpush1.bf16.msra.mxu0 0
      %842 = vmatprep.subr.bf16.mxu0 0
      %843 = vmatpush1.bf16.msra.mxu0 0
      %844 = vmatprep.subr.bf16.mxu0 0
      %845 = vmatpush1.bf16.msra.mxu0 0
      %846 = vmatprep.subr.bf16.mxu0 0
      %847 = vmatpush1.bf16.msra.mxu0 0
      %848 = vmatprep.subr.bf16.mxu0 0
      %849 = vmatpush1.bf16.msra.mxu0 0
      %850 = vmatprep.subr.bf16.mxu0 0
      %851 = vmatpush1.bf16.msra.mxu0 0
      %852 = vmatprep.subr.bf16.mxu0 0
      %853 = vmatpush1.bf16.msra.mxu0 0
      %854 = vmatprep.subr.bf16.mxu0 0
      %855 = vmatpush1.bf16.msra.mxu0 0
      %856 = vmatprep.subr.bf16.mxu0 0
      %857 = vmatpush1.bf16.msra.mxu0 0
      %858 = vmatprep.subr.bf16.mxu0 0
      %859 = vmatpush1.bf16.msra.mxu0 0
      %860 = vmatprep.subr.bf16.mxu0 0
      %861 = vmatpush1.bf16.msra.mxu0 0
      %862 = vmatprep.subr.bf16.mxu0 0
      %863 = vmatpush1.bf16.msra.mxu0 0
      %864 = vmatprep.subr.bf16.mxu0 0
      %865 = vmatpush1.bf16.msra.mxu0 0
      %866 = vmatprep.subr.bf16.mxu0 0
      %867 = vmatpush1.bf16.msra.mxu0 0
      %868 = vmatprep.subr.bf16.mxu0 0
      %869 = vmatpush1.bf16.msra.mxu0 0
      %870 = vmatprep.mubr.bf16.mxu0 0
      %871 = vmatmul.mubr.bf16.gmra.mrb[0].mxu0 %v818
      %v872 = vpop.f32.mrb[0].mxu0
      %v873 = vadd.f32 %v463, %v872
      %v874 = vpop.f32.mrb[0].mxu0
      %v875 = vpop.f32.mrb[0].mxu0
      %v876 = vadd.f32 %v463, %v875
      %v877 = vpop.f32.mrb[0].mxu0
      %878 = vmatprep.mubr.bf16.mxu0 0
      %879 = vmatmul.mubr.bf16.gmra.mrb[0].mxu0 %v821
      %v880 = vpop.f32.mrb[0].mxu0
      %v881 = vadd.f32 %v463, %v880
      %v882 = vpop.f32.mrb[0].mxu0
      %v883 = vpop.f32.mrb[0].mxu0
      %v884 = vadd.f32 %v463, %v883
      %v885 = vpop.f32.mrb[0].mxu0
      %886 = vmatprep.mubr.bf16.mxu0 0
      %887 = vmatmul.mubr.bf16.gmra.mrb[0].mxu0 %v824
      %v888 = vpop.f32.mrb[0].mxu0
      %v889 = vadd.f32 %v463, %v888
      %v890 = vpop.f32.mrb[0].mxu0
      %v891 = vpop.f32.mrb[0].mxu0
      %v892 = vadd.f32 %v463, %v891
      %v893 = vpop.f32.mrb[0].mxu0
      %894 = vmatprep.mubr.bf16.mxu0 0
      %895 = vmatmul.mubr.bf16.gmra.mrb[0].mxu0 %v827
      %v896 = vpop.f32.mrb[0].mxu0
      %v897 = vadd.f32 %v463, %v896
      %v898 = vpop.f32.mrb[0].mxu0
      %v899 = vpop.f32.mrb[0].mxu0
      %v900 = vadd.f32 %v463, %v899
      %v901 = vpop.f32.mrb[0].mxu0
      %902 = vmatprep.mubr.bf16.mxu0 0
      %903 = vmatmul.mubr.bf16.gmra.mrb[0].mxu0 %v830
      %v904 = vpop.f32.mrb[0].mxu0
      %v905 = vadd.f32 %v463, %v904
      %v906 = vpop.f32.mrb[0].mxu0
      %v907 = vpop.f32.mrb[0].mxu0
      %v908 = vadd.f32 %v463, %v907
      %v909 = vpop.f32.mrb[0].mxu0
      %910 = vmatprep.mubr.bf16.mxu0 0
      %911 = vmatmul.mubr.bf16.gmra.mrb[0].mxu0 %v833
      %v912 = vpop.f32.mrb[0].mxu0
      %v913 = vadd.f32 %v463, %v912
      %v914 = vpop.f32.mrb[0].mxu0
      %v915 = vpop.f32.mrb[0].mxu0
      %v916 = vadd.f32 %v463, %v915
      %v917 = vpop.f32.mrb[0].mxu0
      %918 = vmatprep.mubr.bf16.mxu0 0
      %919 = vmatmul.mubr.bf16.gmra.mrb[0].mxu0 %v836
      %v920 = vpop.f32.mrb[0].mxu0
      %v921 = vadd.f32 %v463, %v920
      %v922 = vpop.f32.mrb[0].mxu0
      %v923 = vpop.f32.mrb[0].mxu0
      %v924 = vpop.f32.mrb[0].mxu0
      %925 = vdwg.mxu0
      %vm926 = vcmp.ge.f32.partialorder %v873, 0.0
      %vm927 = vcmp.ge.f32.partialorder %v876, 0.0
      %vm928 = vcmp.ge.f32.partialorder %v881, 0.0
      %vm929 = vcmp.ge.f32.partialorder %v884, 0.0
      %vm930 = vcmp.ge.f32.partialorder %v889, 0.0
      %vm931 = vcmp.ge.f32.partialorder %v892, 0.0
      %vm932 = vcmp.ge.f32.partialorder %v897, 0.0
      %vm933 = vcmp.ge.f32.partialorder %v900, 0.0
      %vm934 = vcmp.ge.f32.partialorder %v905, 0.0
      %vm935 = vcmp.ge.f32.partialorder %v908, 0.0
      %vm936 = vcmp.ge.f32.partialorder %v913, 0.0
      %vm937 = vcmp.ge.f32.partialorder %v916, 0.0
      %vm938 = vcmp.ge.f32.partialorder %v921, 0.0
      %v939 = vmul.f32 %v873, 0.01
      %v940 = vmul.f32 %v876, 0.01
      %v941 = vmul.f32 %v881, 0.01
      %v942 = vmul.f32 %v884, 0.01
      %v943 = vmul.f32 %v889, 0.01
      %v944 = vmul.f32 %v892, 0.01
      %v945 = vmul.f32 %v897, 0.01
      %v946 = vmul.f32 %v900, 0.01
      %v947 = vmul.f32 %v905, 0.01
      %v948 = vmul.f32 %v908, 0.01
      %v949 = vmul.f32 %v913, 0.01
      %v950 = vmul.f32 %v916, 0.01
      %v951 = vmul.f32 %v921, 0.01
      %v952 = vsel %vm926, %v873, %v939
      %v953 = vsel %vm927, %v876, %v940
      %v954 = vsel %vm928, %v881, %v941
      %v955 = vsel %vm929, %v884, %v942
      %v956 = vsel %vm930, %v889, %v943
      %v957 = vsel %vm931, %v892, %v944
      %v958 = vsel %vm932, %v897, %v945
      %v959 = vsel %vm933, %v900, %v946
      %v960 = vsel %vm934, %v905, %v947
      %v961 = vsel %vm935, %v908, %v948
      %v962 = vsel %vm936, %v913, %v949
      %v963 = vsel %vm937, %v916, %v950
      %v964 = vsel %vm938, %v921, %v951
      %v965 = vmul.f32 %v952, %v656
      %v966 = vmul.f32 %v953, %v661
      %v967 = vmul.f32 %v954, %v666
      %v968 = vmul.f32 %v955, %v671
      %v969 = vmul.f32 %v956, %v676
      %v970 = vmul.f32 %v957, %v681
      %v971 = vmul.f32 %v958, %v686
      %v972 = vmul.f32 %v959, %v691
      %v973 = vmul.f32 %v960, %v696
      %v974 = vmul.f32 %v961, %v701
      %v975 = vmul.f32 %v962, %v706
      %v976 = vmul.f32 %v963, %v711
      %v977 = vmul.f32 %v964, %v716
      %s978 = scalar_lea.vmem [#allocation2], 136
      %979 = vst.msk [vmem:[%s978 + $0x10] sm:$0xff] %vm350, %v965
      %980 = vst.msk [vmem:[%s978 + $0x18] sm:$0xff] %vm350, %v966
      %981 = vst.msk [vmem:[%s978 + $0x20] sm:$0xff] %vm350, %v967
      %982 = vst.msk [vmem:[%s978 + $0x28] sm:$0xff] %vm350, %v968
      %983 = vst.msk [vmem:[%s978 + $0x30] sm:$0xff] %vm350, %v969
      %984 = vst.msk [vmem:[%s978 + $0x38] sm:$0xff] %vm350, %v970
      %985 = vst.msk [vmem:[%s978 + $0x40] sm:$0xff] %vm350, %v971
      %986 = vst.msk [vmem:[%s978 + $0x48] sm:$0xff] %vm350, %v972
      %987 = vst.msk [vmem:[%s978 + $0x50] sm:$0xff] %vm350, %v973
      %988 = vst.msk [vmem:[%s978 + $0x58] sm:$0xff] %vm350, %v974
      %989 = vst.msk [vmem:[%s978 + $0x60] sm:$0xff] %vm350, %v975
      %990 = vst.msk [vmem:[%s978 + $0x68] sm:$0xff] %vm350, %v976
      %991 = vst.msk [vmem:[%s978 + $0x70] sm:$0xf] %vm367, %v977
      %s992 = scalar_lea.vmem %s327, 104
      %v993 = vld [vmem:[%s992] sm:$0xf]
      %v994 = vld [vmem:[%s992 + $0x4] sm:$0xf]
      %v995 = vld [vmem:[%s992 + $0x8] sm:$0xf]
      %v996 = vld [vmem:[%s992 + $0xc] sm:$0xf]
      %v997 = vld [vmem:[%s992 + $0x10] sm:$0xf]
      %v998 = vld [vmem:[%s992 + $0x14] sm:$0xf]
      %v999 = vld [vmem:[%s992 + $0x18] sm:$0xf]
      %v1000 = vld [vmem:[%s992 + $0x1c] sm:$0xf]
      %v1001 = vld [vmem:[%s992 + $0x20] sm:$0xf]
      %v1002 = vld [vmem:[%s992 + $0x24] sm:$0xf]
      %v1003 = vld [vmem:[%s992 + $0x28] sm:$0xf]
      %v1004 = vld [vmem:[%s992 + $0x2c] sm:$0xf]
      %v1005 = vld [vmem:[%s992 + $0x30] sm:$0x3]
      %v1006 = vunpack.c.l.bf16 %v993
      %v1007 = vunpack.c.l.bf16 %v994
      %v1008 = vunpack.c.l.bf16 %v995
      %v1009 = vunpack.c.l.bf16 %v996
      %v1010 = vunpack.c.l.bf16 %v997
      %v1011 = vunpack.c.l.bf16 %v998
      %v1012 = vunpack.c.l.bf16 %v999
      %v1013 = vunpack.c.l.bf16 %v1000
      %v1014 = vunpack.c.l.bf16 %v1001
      %v1015 = vunpack.c.l.bf16 %v1002
      %v1016 = vunpack.c.l.bf16 %v1003
      %v1017 = vunpack.c.l.bf16 %v1004
      %v1018 = vunpack.c.l.bf16 %v1005
      %v1019 = vadd.f32 %v771, %v1006
      %v1020 = vadd.f32 %v772, %v1007
      %v1021 = vadd.f32 %v773, %v1008
      %v1022 = vadd.f32 %v774, %v1009
      %v1023 = vadd.f32 %v775, %v1010
      %v1024 = vadd.f32 %v776, %v1011
      %v1025 = vadd.f32 %v777, %v1012
      %v1026 = vadd.f32 %v778, %v1013
      %v1027 = vadd.f32 %v779, %v1014
      %v1028 = vadd.f32 %v780, %v1015
      %v1029 = vadd.f32 %v781, %v1016
      %v1030 = vadd.f32 %v782, %v1017
      %v1031 = vadd.f32 %v783, %v1018
      %v1045 = vunpack.c.l.b16 %v993
      %v1046 = vunpack.c.l.b16 %v994
      %v1047 = vunpack.c.l.b16 %v995
      %v1048 = vunpack.c.l.b16 %v996
      %v1049 = vunpack.c.l.b16 %v997
      %v1050 = vunpack.c.l.b16 %v998
      %v1051 = vunpack.c.l.b16 %v999
      %v1052 = vunpack.c.l.b16 %v1000
      %v1053 = vunpack.c.l.b16 %v1001
      %v1054 = vunpack.c.l.b16 %v1002
      %v1055 = vunpack.c.l.b16 %v1003
      %v1056 = vunpack.c.l.b16 %v1004
      %v1057 = vunpack.c.l.b16 %v1005
      %v1058 = vpack.c.b16 %v1046, %v1045
      %v1059 = vpack.c.b16 %v1048, %v1047
      %v1060 = vpack.c.b16 %v1050, %v1049
      %v1061 = vpack.c.b16 %v1052, %v1051
      %v1062 = vpack.c.b16 %v1054, %v1053
      %v1063 = vpack.c.b16 %v1056, %v1055
      %v1064 = vpack.c.b16 %v1057, %v1057
      %v1066 = vsel %vm504, %v1058, 0
      %v1069 = vsel %vm504, %v1059, 0
      %v1072 = vsel %vm504, %v1060, 0
      %v1075 = vsel %vm504, %v1061, 0
      %v1078 = vsel %vm504, %v1062, 0
      %v1081 = vsel %vm504, %v1063, 0
      %v1084 = vsel %vm504, %v1064, 0
      %1086 = vmatprep.subr.bf16.mxu0 0
      %1087 = vmatpush1.bf16.msra.mxu0 %v502
      %1088 = vmatprep.subr.bf16.mxu0 0
      %1089 = vmatpush1.bf16.msra.mxu0 0
      %1090 = vmatprep.subr.bf16.mxu0 0
      %1091 = vmatpush1.bf16.msra.mxu0 0
      %1092 = vmatprep.subr.bf16.mxu0 0
      %1093 = vmatpush1.bf16.msra.mxu0 0
      %1094 = vmatprep.subr.bf16.mxu0 0
      %1095 = vmatpush1.bf16.msra.mxu0 0
      %1096 = vmatprep.subr.bf16.mxu0 0
      %1097 = vmatpush1.bf16.msra.mxu0 0
      %1098 = vmatprep.subr.bf16.mxu0 0
      %1099 = vmatpush1.bf16.msra.mxu0 0
      %1100 = vmatprep.subr.bf16.mxu0 0
      %1101 = vmatpush1.bf16.msra.mxu0 0
      %1102 = vmatprep.subr.bf16.mxu0 0
      %1103 = vmatpush1.bf16.msra.mxu0 0
      %1104 = vmatprep.subr.bf16.mxu0 0
      %1105 = vmatpush1.bf16.msra.mxu0 0
      %1106 = vmatprep.subr.bf16.mxu0 0
      %1107 = vmatpush1.bf16.msra.mxu0 0
      %1108 = vmatprep.subr.bf16.mxu0 0
      %1109 = vmatpush1.bf16.msra.mxu0 0
      %1110 = vmatprep.subr.bf16.mxu0 0
      %1111 = vmatpush1.bf16.msra.mxu0 0
      %1112 = vmatprep.subr.bf16.mxu0 0
      %1113 = vmatpush1.bf16.msra.mxu0 0
      %1114 = vmatprep.subr.bf16.mxu0 0
      %1115 = vmatpush1.bf16.msra.mxu0 0
      %1116 = vmatprep.subr.bf16.mxu0 0
      %1117 = vmatpush1.bf16.msra.mxu0 0
      %1118 = vmatprep.mubr.bf16.mxu0 0
      %1119 = vmatmul.mubr.bf16.gmra.mrb[0].mxu0 %v1066
      %v1120 = vpop.f32.mrb[0].mxu0
      %v1121 = vadd.f32 %v463, %v1120
      %v1122 = vpop.f32.mrb[0].mxu0
      %v1123 = vpop.f32.mrb[0].mxu0
      %v1124 = vadd.f32 %v463, %v1123
      %v1125 = vpop.f32.mrb[0].mxu0
      %1126 = vmatprep.mubr.bf16.mxu0 0
      %1127 = vmatmul.mubr.bf16.gmra.mrb[0].mxu0 %v1069
      %v1128 = vpop.f32.mrb[0].mxu0
      %v1129 = vadd.f32 %v463, %v1128
      %v1130 = vpop.f32.mrb[0].mxu0
      %v1131 = vpop.f32.mrb[0].mxu0
      %v1132 = vadd.f32 %v463, %v1131
      %v1133 = vpop.f32.mrb[0].mxu0
      %1134 = vmatprep.mubr.bf16.mxu0 0
      %1135 = vmatmul.mubr.bf16.gmra.mrb[0].mxu0 %v1072
      %v1136 = vpop.f32.mrb[0].mxu0
      %v1137 = vadd.f32 %v463, %v1136
      %v1138 = vpop.f32.mrb[0].mxu0
      %v1139 = vpop.f32.mrb[0].mxu0
      %v1140 = vadd.f32 %v463, %v1139
      %v1141 = vpop.f32.mrb[0].mxu0
      %1142 = vmatprep.mubr.bf16.mxu0 0
      %1143 = vmatmul.mubr.bf16.gmra.mrb[0].mxu0 %v1075
      %v1144 = vpop.f32.mrb[0].mxu0
      %v1145 = vadd.f32 %v463, %v1144
      %v1146 = vpop.f32.mrb[0].mxu0
      %v1147 = vpop.f32.mrb[0].mxu0
      %v1148 = vadd.f32 %v463, %v1147
      %v1149 = vpop.f32.mrb[0].mxu0
      %1150 = vmatprep.mubr.bf16.mxu0 0
      %1151 = vmatmul.mubr.bf16.gmra.mrb[0].mxu0 %v1078
      %v1152 = vpop.f32.mrb[0].mxu0
      %v1153 = vadd.f32 %v463, %v1152
      %v1154 = vpop.f32.mrb[0].mxu0
      %v1155 = vpop.f32.mrb[0].mxu0
      %v1156 = vadd.f32 %v463, %v1155
      %v1157 = vpop.f32.mrb[0].mxu0
      %1158 = vmatprep.mubr.bf16.mxu0 0
      %1159 = vmatmul.mubr.bf16.gmra.mrb[0].mxu0 %v1081
      %v1160 = vpop.f32.mrb[0].mxu0
      %v1161 = vadd.f32 %v463, %v1160
      %v1162 = vpop.f32.mrb[0].mxu0
      %v1163 = vpop.f32.mrb[0].mxu0
      %v1164 = vadd.f32 %v463, %v1163
      %v1165 = vpop.f32.mrb[0].mxu0
      %1166 = vmatprep.mubr.bf16.mxu0 0
      %1167 = vmatmul.mubr.bf16.gmra.mrb[0].mxu0 %v1084
      %v1168 = vpop.f32.mrb[0].mxu0
      %v1169 = vadd.f32 %v463, %v1168
      %v1170 = vpop.f32.mrb[0].mxu0
      %v1171 = vpop.f32.mrb[0].mxu0
      %v1172 = vpop.f32.mrb[0].mxu0
      %1173 = vdwg.mxu0
      %vm1174 = vcmp.ge.f32.partialorder %v1121, 0.0
      %vm1175 = vcmp.ge.f32.partialorder %v1124, 0.0
      %vm1176 = vcmp.ge.f32.partialorder %v1129, 0.0
      %vm1177 = vcmp.ge.f32.partialorder %v1132, 0.0
      %vm1178 = vcmp.ge.f32.partialorder %v1137, 0.0
      %vm1179 = vcmp.ge.f32.partialorder %v1140, 0.0
      %vm1180 = vcmp.ge.f32.partialorder %v1145, 0.0
      %vm1181 = vcmp.ge.f32.partialorder %v1148, 0.0
      %vm1182 = vcmp.ge.f32.partialorder %v1153, 0.0
      %vm1183 = vcmp.ge.f32.partialorder %v1156, 0.0
      %vm1184 = vcmp.ge.f32.partialorder %v1161, 0.0
      %vm1185 = vcmp.ge.f32.partialorder %v1164, 0.0
      %vm1186 = vcmp.ge.f32.partialorder %v1169, 0.0
      %v1187 = vmul.f32 %v1121, 0.01
      %v1188 = vmul.f32 %v1124, 0.01
      %v1189 = vmul.f32 %v1129, 0.01
      %v1190 = vmul.f32 %v1132, 0.01
      %v1191 = vmul.f32 %v1137, 0.01
      %v1192 = vmul.f32 %v1140, 0.01
      %v1193 = vmul.f32 %v1145, 0.01
      %v1194 = vmul.f32 %v1148, 0.01
      %v1195 = vmul.f32 %v1153, 0.01
      %v1196 = vmul.f32 %v1156, 0.01
      %v1197 = vmul.f32 %v1161, 0.01
      %v1198 = vmul.f32 %v1164, 0.01
      %v1199 = vmul.f32 %v1169, 0.01
      %v1200 = vsel %vm1174, %v1121, %v1187
      %v1201 = vsel %vm1175, %v1124, %v1188
      %v1202 = vsel %vm1176, %v1129, %v1189
      %v1203 = vsel %vm1177, %v1132, %v1190
      %v1204 = vsel %vm1178, %v1137, %v1191
      %v1205 = vsel %vm1179, %v1140, %v1192
      %v1206 = vsel %vm1180, %v1145, %v1193
      %v1207 = vsel %vm1181, %v1148, %v1194
      %v1208 = vsel %vm1182, %v1153, %v1195
      %v1209 = vsel %vm1183, %v1156, %v1196
      %v1210 = vsel %vm1184, %v1161, %v1197
      %v1211 = vsel %vm1185, %v1164, %v1198
      %v1212 = vsel %vm1186, %v1169, %v1199
      %v1213 = vmul.f32 %v1200, %v656
      %v1214 = vmul.f32 %v1201, %v661
      %v1215 = vmul.f32 %v1202, %v666
      %v1216 = vmul.f32 %v1203, %v671
      %v1217 = vmul.f32 %v1204, %v676
      %v1218 = vmul.f32 %v1205, %v681
      %v1219 = vmul.f32 %v1206, %v686
      %v1220 = vmul.f32 %v1207, %v691
      %v1221 = vmul.f32 %v1208, %v696
      %v1222 = vmul.f32 %v1209, %v701
      %v1223 = vmul.f32 %v1210, %v706
      %v1224 = vmul.f32 %v1211, %v711
      %v1225 = vmul.f32 %v1212, %v716
      %s1226 = scalar_lea.vmem [#allocation2], 272
      %1227 = vst.msk [vmem:[%s1226 + $0x10] sm:$0xff] %vm350, %v1213
      %1228 = vst.msk [vmem:[%s1226 + $0x18] sm:$0xff] %vm350, %v1214
      %1229 = vst.msk [vmem:[%s1226 + $0x20] sm:$0xff] %vm350, %v1215
      %1230 = vst.msk [vmem:[%s1226 + $0x28] sm:$0xff] %vm350, %v1216
      %1231 = vst.msk [vmem:[%s1226 + $0x30] sm:$0xff] %vm350, %v1217
      %1232 = vst.msk [vmem:[%s1226 + $0x38] sm:$0xff] %vm350, %v1218
      %1233 = vst.msk [vmem:[%s1226 + $0x40] sm:$0xff] %vm350, %v1219
      %1234 = vst.msk [vmem:[%s1226 + $0x48] sm:$0xff] %vm350, %v1220
      %1235 = vst.msk [vmem:[%s1226 + $0x50] sm:$0xff] %vm350, %v1221
      %1236 = vst.msk [vmem:[%s1226 + $0x58] sm:$0xff] %vm350, %v1222
      %1237 = vst.msk [vmem:[%s1226 + $0x60] sm:$0xff] %vm350, %v1223
      %1238 = vst.msk [vmem:[%s1226 + $0x68] sm:$0xff] %vm350, %v1224
      %1239 = vst.msk [vmem:[%s1226 + $0x70] sm:$0xf] %vm367, %v1225
      %s1240 = scalar_lea.vmem %s327, 156
      %v1241 = vld [vmem:[%s1240] sm:$0xf]
      %v1242 = vld [vmem:[%s1240 + $0x4] sm:$0xf]
      %v1243 = vld [vmem:[%s1240 + $0x8] sm:$0xf]
      %v1244 = vld [vmem:[%s1240 + $0xc] sm:$0xf]
      %v1245 = vld [vmem:[%s1240 + $0x10] sm:$0xf]
      %v1246 = vld [vmem:[%s1240 + $0x14] sm:$0xf]
      %v1247 = vld [vmem:[%s1240 + $0x18] sm:$0xf]
      %v1248 = vld [vmem:[%s1240 + $0x1c] sm:$0xf]
      %v1249 = vld [vmem:[%s1240 + $0x20] sm:$0xf]
      %v1250 = vld [vmem:[%s1240 + $0x24] sm:$0xf]
      %v1251 = vld [vmem:[%s1240 + $0x28] sm:$0xf]
      %v1252 = vld [vmem:[%s1240 + $0x2c] sm:$0xf]
      %v1253 = vld [vmem:[%s1240 + $0x30] sm:$0x3]
      %v1254 = vunpack.c.l.bf16 %v1241
      %v1255 = vunpack.c.l.bf16 %v1242
      %v1256 = vunpack.c.l.bf16 %v1243
      %v1257 = vunpack.c.l.bf16 %v1244
      %v1258 = vunpack.c.l.bf16 %v1245
      %v1259 = vunpack.c.l.bf16 %v1246
      %v1260 = vunpack.c.l.bf16 %v1247
      %v1261 = vunpack.c.l.bf16 %v1248
      %v1262 = vunpack.c.l.bf16 %v1249
      %v1263 = vunpack.c.l.bf16 %v1250
      %v1264 = vunpack.c.l.bf16 %v1251
      %v1265 = vunpack.c.l.bf16 %v1252
      %v1266 = vunpack.c.l.bf16 %v1253
      %v1267 = vadd.f32 %v1019, %v1254
      %v1268 = vadd.f32 %v1020, %v1255
      %v1269 = vadd.f32 %v1021, %v1256
      %v1270 = vadd.f32 %v1022, %v1257
      %v1271 = vadd.f32 %v1023, %v1258
      %v1272 = vadd.f32 %v1024, %v1259
      %v1273 = vadd.f32 %v1025, %v1260
      %v1274 = vadd.f32 %v1026, %v1261
      %v1275 = vadd.f32 %v1027, %v1262
      %v1276 = vadd.f32 %v1028, %v1263
      %v1277 = vadd.f32 %v1029, %v1264
      %v1278 = vadd.f32 %v1030, %v1265
      %v1279 = vadd.f32 %v1031, %v1266
      %v1293 = vunpack.c.l.b16 %v1241
      %v1294 = vunpack.c.l.b16 %v1242
      %v1295 = vunpack.c.l.b16 %v1243
      %v1296 = vunpack.c.l.b16 %v1244
      %v1297 = vunpack.c.l.b16 %v1245
      %v1298 = vunpack.c.l.b16 %v1246
      %v1299 = vunpack.c.l.b16 %v1247
      %v1300 = vunpack.c.l.b16 %v1248
      %v1301 = vunpack.c.l.b16 %v1249
      %v1302 = vunpack.c.l.b16 %v1250
      %v1303 = vunpack.c.l.b16 %v1251
      %v1304 = vunpack.c.l.b16 %v1252
      %v1305 = vunpack.c.l.b16 %v1253
      %v1306 = vpack.c.b16 %v1294, %v1293
      %v1307 = vpack.c.b16 %v1296, %v1295
      %v1308 = vpack.c.b16 %v1298, %v1297
      %v1309 = vpack.c.b16 %v1300, %v1299
      %v1310 = vpack.c.b16 %v1302, %v1301
      %v1311 = vpack.c.b16 %v1304, %v1303
      %v1312 = vpack.c.b16 %v1305, %v1305
      %v1314 = vsel %vm504, %v1306, 0
      %v1317 = vsel %vm504, %v1307, 0
      %v1320 = vsel %vm504, %v1308, 0
      %v1323 = vsel %vm504, %v1309, 0
      %v1326 = vsel %vm504, %v1310, 0
      %v1329 = vsel %vm504, %v1311, 0
      %v1332 = vsel %vm504, %v1312, 0
      %1334 = vmatprep.subr.bf16.mxu0 0
      %1335 = vmatpush1.bf16.msra.mxu0 %v502
      %1336 = vmatprep.subr.bf16.mxu0 0
      %1337 = vmatpush1.bf16.msra.mxu0 0
      %1338 = vmatprep.subr.bf16.mxu0 0
      %1339 = vmatpush1.bf16.msra.mxu0 0
      %1340 = vmatprep.subr.bf16.mxu0 0
      %1341 = vmatpush1.bf16.msra.mxu0 0
      %1342 = vmatprep.subr.bf16.mxu0 0
      %1343 = vmatpush1.bf16.msra.mxu0 0
      %1344 = vmatprep.subr.bf16.mxu0 0
      %1345 = vmatpush1.bf16.msra.mxu0 0
      %1346 = vmatprep.subr.bf16.mxu0 0
      %1347 = vmatpush1.bf16.msra.mxu0 0
      %1348 = vmatprep.subr.bf16.mxu0 0
      %1349 = vmatpush1.bf16.msra.mxu0 0
      %1350 = vmatprep.subr.bf16.mxu0 0
      %1351 = vmatpush1.bf16.msra.mxu0 0
      %1352 = vmatprep.subr.bf16.mxu0 0
      %1353 = vmatpush1.bf16.msra.mxu0 0
      %1354 = vmatprep.subr.bf16.mxu0 0
      %1355 = vmatpush1.bf16.msra.mxu0 0
      %1356 = vmatprep.subr.bf16.mxu0 0
      %1357 = vmatpush1.bf16.msra.mxu0 0
      %1358 = vmatprep.subr.bf16.mxu0 0
      %1359 = vmatpush1.bf16.msra.mxu0 0
      %1360 = vmatprep.subr.bf16.mxu0 0
      %1361 = vmatpush1.bf16.msra.mxu0 0
      %1362 = vmatprep.subr.bf16.mxu0 0
      %1363 = vmatpush1.bf16.msra.mxu0 0
      %1364 = vmatprep.subr.bf16.mxu0 0
      %1365 = vmatpush1.bf16.msra.mxu0 0
      %1366 = vmatprep.mubr.bf16.mxu0 0
      %1367 = vmatmul.mubr.bf16.gmra.mrb[0].mxu0 %v1314
      %v1368 = vpop.f32.mrb[0].mxu0
      %v1369 = vadd.f32 %v463, %v1368
      %v1370 = vpop.f32.mrb[0].mxu0
      %v1371 = vpop.f32.mrb[0].mxu0
      %v1372 = vadd.f32 %v463, %v1371
      %v1373 = vpop.f32.mrb[0].mxu0
      %1374 = vmatprep.mubr.bf16.mxu0 0
      %1375 = vmatmul.mubr.bf16.gmra.mrb[0].mxu0 %v1317
      %v1376 = vpop.f32.mrb[0].mxu0
      %v1377 = vadd.f32 %v463, %v1376
      %v1378 = vpop.f32.mrb[0].mxu0
      %v1379 = vpop.f32.mrb[0].mxu0
      %v1380 = vadd.f32 %v463, %v1379
      %v1381 = vpop.f32.mrb[0].mxu0
      %1382 = vmatprep.mubr.bf16.mxu0 0
      %1383 = vmatmul.mubr.bf16.gmra.mrb[0].mxu0 %v1320
      %v1384 = vpop.f32.mrb[0].mxu0
      %v1385 = vadd.f32 %v463, %v1384
      %v1386 = vpop.f32.mrb[0].mxu0
      %v1387 = vpop.f32.mrb[0].mxu0
      %v1388 = vadd.f32 %v463, %v1387
      %v1389 = vpop.f32.mrb[0].mxu0
      %1390 = vmatprep.mubr.bf16.mxu0 0
      %1391 = vmatmul.mubr.bf16.gmra.mrb[0].mxu0 %v1323
      %v1392 = vpop.f32.mrb[0].mxu0
      %v1393 = vadd.f32 %v463, %v1392
      %v1394 = vpop.f32.mrb[0].mxu0
      %v1395 = vpop.f32.mrb[0].mxu0
      %v1396 = vadd.f32 %v463, %v1395
      %v1397 = vpop.f32.mrb[0].mxu0
      %1398 = vmatprep.mubr.bf16.mxu0 0
      %1399 = vmatmul.mubr.bf16.gmra.mrb[0].mxu0 %v1326
      %v1400 = vpop.f32.mrb[0].mxu0
      %v1401 = vadd.f32 %v463, %v1400
      %v1402 = vpop.f32.mrb[0].mxu0
      %v1403 = vpop.f32.mrb[0].mxu0
      %v1404 = vadd.f32 %v463, %v1403
      %v1405 = vpop.f32.mrb[0].mxu0
      %1406 = vmatprep.mubr.bf16.mxu0 0
      %1407 = vmatmul.mubr.bf16.gmra.mrb[0].mxu0 %v1329
      %v1408 = vpop.f32.mrb[0].mxu0
      %v1409 = vadd.f32 %v463, %v1408
      %v1410 = vpop.f32.mrb[0].mxu0
      %v1411 = vpop.f32.mrb[0].mxu0
      %v1412 = vadd.f32 %v463, %v1411
      %v1413 = vpop.f32.mrb[0].mxu0
      %1414 = vmatprep.mubr.bf16.mxu0 0
      %1415 = vmatmul.mubr.bf16.gmra.mrb[0].mxu0 %v1332
      %v1416 = vpop.f32.mrb[0].mxu0
      %v1417 = vadd.f32 %v463, %v1416
      %v1418 = vpop.f32.mrb[0].mxu0
      %v1419 = vpop.f32.mrb[0].mxu0
      %v1420 = vpop.f32.mrb[0].mxu0
      %1421 = vdwg.mxu0
      %vm1422 = vcmp.ge.f32.partialorder %v1369, 0.0
      %vm1423 = vcmp.ge.f32.partialorder %v1372, 0.0
      %vm1424 = vcmp.ge.f32.partialorder %v1377, 0.0
      %vm1425 = vcmp.ge.f32.partialorder %v1380, 0.0
      %vm1426 = vcmp.ge.f32.partialorder %v1385, 0.0
      %vm1427 = vcmp.ge.f32.partialorder %v1388, 0.0
      %vm1428 = vcmp.ge.f32.partialorder %v1393, 0.0
      %vm1429 = vcmp.ge.f32.partialorder %v1396, 0.0
      %vm1430 = vcmp.ge.f32.partialorder %v1401, 0.0
      %vm1431 = vcmp.ge.f32.partialorder %v1404, 0.0
      %vm1432 = vcmp.ge.f32.partialorder %v1409, 0.0
      %vm1433 = vcmp.ge.f32.partialorder %v1412, 0.0
      %vm1434 = vcmp.ge.f32.partialorder %v1417, 0.0
      %v1435 = vmul.f32 %v1369, 0.01
      %v1436 = vmul.f32 %v1372, 0.01
      %v1437 = vmul.f32 %v1377, 0.01
      %v1438 = vmul.f32 %v1380, 0.01
      %v1439 = vmul.f32 %v1385, 0.01
      %v1440 = vmul.f32 %v1388, 0.01
      %v1441 = vmul.f32 %v1393, 0.01
      %v1442 = vmul.f32 %v1396, 0.01
      %v1443 = vmul.f32 %v1401, 0.01
      %v1444 = vmul.f32 %v1404, 0.01
      %v1445 = vmul.f32 %v1409, 0.01
      %v1446 = vmul.f32 %v1412, 0.01
      %v1447 = vmul.f32 %v1417, 0.01
      %v1448 = vsel %vm1422, %v1369, %v1435
      %v1449 = vsel %vm1423, %v1372, %v1436
      %v1450 = vsel %vm1424, %v1377, %v1437
      %v1451 = vsel %vm1425, %v1380, %v1438
      %v1452 = vsel %vm1426, %v1385, %v1439
      %v1453 = vsel %vm1427, %v1388, %v1440
      %v1454 = vsel %vm1428, %v1393, %v1441
      %v1455 = vsel %vm1429, %v1396, %v1442
      %v1456 = vsel %vm1430, %v1401, %v1443
      %v1457 = vsel %vm1431, %v1404, %v1444
      %v1458 = vsel %vm1432, %v1409, %v1445
      %v1459 = vsel %vm1433, %v1412, %v1446
      %v1460 = vsel %vm1434, %v1417, %v1447
      %v1461 = vmul.f32 %v1448, %v656
      %v1462 = vmul.f32 %v1449, %v661
      %v1463 = vmul.f32 %v1450, %v666
      %v1464 = vmul.f32 %v1451, %v671
      %v1465 = vmul.f32 %v1452, %v676
      %v1466 = vmul.f32 %v1453, %v681
      %v1467 = vmul.f32 %v1454, %v686
      %v1468 = vmul.f32 %v1455, %v691
      %v1469 = vmul.f32 %v1456, %v696
      %v1470 = vmul.f32 %v1457, %v701
      %v1471 = vmul.f32 %v1458, %v706
      %v1472 = vmul.f32 %v1459, %v711
      %v1473 = vmul.f32 %v1460, %v716
      %s1474 = scalar_lea.vmem [#allocation2], 408
      %1475 = vst.msk [vmem:[%s1474 + $0x10] sm:$0xff] %vm350, %v1461
      %1476 = vst.msk [vmem:[%s1474 + $0x18] sm:$0xff] %vm350, %v1462
      %1477 = vst.msk [vmem:[%s1474 + $0x20] sm:$0xff] %vm350, %v1463
      %1478 = vst.msk [vmem:[%s1474 + $0x28] sm:$0xff] %vm350, %v1464
      %1479 = vst.msk [vmem:[%s1474 + $0x30] sm:$0xff] %vm350, %v1465
      %1480 = vst.msk [vmem:[%s1474 + $0x38] sm:$0xff] %vm350, %v1466
      %1481 = vst.msk [vmem:[%s1474 + $0x40] sm:$0xff] %vm350, %v1467
      %1482 = vst.msk [vmem:[%s1474 + $0x48] sm:$0xff] %vm350, %v1468
      %1483 = vst.msk [vmem:[%s1474 + $0x50] sm:$0xff] %vm350, %v1469
      %1484 = vst.msk [vmem:[%s1474 + $0x58] sm:$0xff] %vm350, %v1470
      %1485 = vst.msk [vmem:[%s1474 + $0x60] sm:$0xff] %vm350, %v1471
      %1486 = vst.msk [vmem:[%s1474 + $0x68] sm:$0xff] %vm350, %v1472
      %1487 = vst.msk [vmem:[%s1474 + $0x70] sm:$0xf] %vm367, %v1473
      %v1488 = vld [vmem:[%s1474 + $0x5] sm:$0xff]
      %v1489 = vld [vmem:[%s1474 + $0xd] sm:$0xff]
      %v1490 = vld [vmem:[%s1474 + $0x15] sm:$0xff]
      %v1491 = vld [vmem:[%s1474 + $0x1d] sm:$0xff]
      %v1492 = vld [vmem:[%s1474 + $0x25] sm:$0xff]
      %v1493 = vld [vmem:[%s1474 + $0x2d] sm:$0xff]
      %v1494 = vld [vmem:[%s1474 + $0x35] sm:$0xff]
      %v1495 = vld [vmem:[%s1474 + $0x3d] sm:$0xff]
      %v1496 = vld [vmem:[%s1474 + $0x45] sm:$0xff]
      %v1497 = vld [vmem:[%s1474 + $0x4d] sm:$0xff]
      %v1498 = vld [vmem:[%s1474 + $0x55] sm:$0xff]
      %v1499 = vld [vmem:[%s1474 + $0x5d] sm:$0xff]
      %v1500 = vld [vmem:[%s1474 + $0x65] sm:$0xf]
      %v1501 = vpack.c.bf16 %v1489, %v1488
      %v1502 = vpack.c.bf16 %v1491, %v1490
      %v1503 = vpack.c.bf16 %v1493, %v1492
      %v1504 = vpack.c.bf16 %v1495, %v1494
      %v1505 = vpack.c.bf16 %v1497, %v1496
      %v1506 = vpack.c.bf16 %v1499, %v1498
      %v1507 = vpack.c.bf16 %v1500, %v1500
      %v1508 = vld [vmem:[%s4] sm:$0xf]
      %v1509 = vld [vmem:[%s1226 + $0x6] sm:$0xff]
      %v1510 = vld [vmem:[%s1226 + $0xe] sm:$0xff]
      %v1511 = vld [vmem:[%s1226 + $0x16] sm:$0xff]
      %v1512 = vld [vmem:[%s1226 + $0x1e] sm:$0xff]
      %v1513 = vld [vmem:[%s1226 + $0x26] sm:$0xff]
      %v1514 = vld [vmem:[%s1226 + $0x2e] sm:$0xff]
      %v1515 = vld [vmem:[%s1226 + $0x36] sm:$0xff]
      %v1516 = vld [vmem:[%s1226 + $0x3e] sm:$0xff]
      %v1517 = vld [vmem:[%s1226 + $0x46] sm:$0xff]
      %v1518 = vld [vmem:[%s1226 + $0x4e] sm:$0xff]
      %v1519 = vld [vmem:[%s1226 + $0x56] sm:$0xff]
      %v1520 = vld [vmem:[%s1226 + $0x5e] sm:$0xff]
      %v1521 = vld [vmem:[%s1226 + $0x66] sm:$0xf]
      %v1522 = vpack.c.bf16 %v1510, %v1509
      %v1523 = vpack.c.bf16 %v1512, %v1511
      %v1524 = vpack.c.bf16 %v1514, %v1513
      %v1525 = vpack.c.bf16 %v1516, %v1515
      %v1526 = vpack.c.bf16 %v1518, %v1517
      %v1527 = vpack.c.bf16 %v1520, %v1519
      %v1528 = vpack.c.bf16 %v1521, %v1521
      %s1529 = scalar_lea.vmem %s4, 4
      %v1530 = vld [vmem:[%s1529] sm:$0xf]
      %v1532 = vsel %vm350, %v1522, 0
      %v1535 = vsel %vm350, %v1523, 0
      %v1538 = vsel %vm350, %v1524, 0
      %v1541 = vsel %vm350, %v1525, 0
      %v1544 = vsel %vm350, %v1526, 0
      %v1547 = vsel %vm350, %v1527, 0
      %v1550 = vsel %vm350, %v1528, 0
      %vm1552 = vcmask 1043456
      %v1554 = vsel %vm1552, %v1530, 0
      %1556 = vmatprep.subr.bf16.mxu0 0
      %1557 = vmatpush1.bf16.msra.mxu0 %v1554
      %1558 = vmatprep.subr.bf16.mxu0 0
      %1559 = vmatpush1.bf16.msra.mxu0 0
      %1560 = vmatprep.subr.bf16.mxu0 0
      %1561 = vmatpush1.bf16.msra.mxu0 0
      %1562 = vmatprep.subr.bf16.mxu0 0
      %1563 = vmatpush1.bf16.msra.mxu0 0
      %1564 = vmatprep.subr.bf16.mxu0 0
      %1565 = vmatpush1.bf16.msra.mxu0 0
      %1566 = vmatprep.subr.bf16.mxu0 0
      %1567 = vmatpush1.bf16.msra.mxu0 0
      %1568 = vmatprep.subr.bf16.mxu0 0
      %1569 = vmatpush1.bf16.msra.mxu0 0
      %1570 = vmatprep.subr.bf16.mxu0 0
      %1571 = vmatpush1.bf16.msra.mxu0 0
      %1572 = vmatprep.subr.bf16.mxu0 0
      %1573 = vmatpush1.bf16.msra.mxu0 0
      %1574 = vmatprep.subr.bf16.mxu0 0
      %1575 = vmatpush1.bf16.msra.mxu0 0
      %1576 = vmatprep.subr.bf16.mxu0 0
      %1577 = vmatpush1.bf16.msra.mxu0 0
      %1578 = vmatprep.subr.bf16.mxu0 0
      %1579 = vmatpush1.bf16.msra.mxu0 0
      %1580 = vmatprep.subr.bf16.mxu0 0
      %1581 = vmatpush1.bf16.msra.mxu0 0
      %1582 = vmatprep.subr.bf16.mxu0 0
      %1583 = vmatpush1.bf16.msra.mxu0 0
      %1584 = vmatprep.subr.bf16.mxu0 0
      %1585 = vmatpush1.bf16.msra.mxu0 0
      %1586 = vmatprep.subr.bf16.mxu0 0
      %1587 = vmatpush1.bf16.msra.mxu0 0
      %1588 = vmatprep.mubr.bf16.mxu0 0
      %1589 = vmatmul.mubr.bf16.gmra.mrb[0].mxu0 %v1532
      %v1590 = vpop.f32.mrb[0].mxu0
      %v1591 = vadd.f32 0.0, %v1590
      %v1592 = vpop.f32.mrb[0].mxu0
      %v1593 = vpop.f32.mrb[0].mxu0
      %v1594 = vadd.f32 0.0, %v1593
      %v1595 = vpop.f32.mrb[0].mxu0
      %1596 = vmatprep.mubr.bf16.mxu0 0
      %1597 = vmatmul.mubr.bf16.gmra.mrb[0].mxu0 %v1535
      %v1598 = vpop.f32.mrb[0].mxu0
      %v1599 = vadd.f32 0.0, %v1598
      %v1600 = vpop.f32.mrb[0].mxu0
      %v1601 = vpop.f32.mrb[0].mxu0
      %v1602 = vadd.f32 0.0, %v1601
      %v1603 = vpop.f32.mrb[0].mxu0
      %1604 = vmatprep.mubr.bf16.mxu0 0
      %1605 = vmatmul.mubr.bf16.gmra.mrb[0].mxu0 %v1538
      %v1606 = vpop.f32.mrb[0].mxu0
      %v1607 = vadd.f32 0.0, %v1606
      %v1608 = vpop.f32.mrb[0].mxu0
      %v1609 = vpop.f32.mrb[0].mxu0
      %v1610 = vadd.f32 0.0, %v1609
      %v1611 = vpop.f32.mrb[0].mxu0
      %1612 = vmatprep.mubr.bf16.mxu0 0
      %1613 = vmatmul.mubr.bf16.gmra.mrb[0].mxu0 %v1541
      %v1614 = vpop.f32.mrb[0].mxu0
      %v1615 = vadd.f32 0.0, %v1614
      %v1616 = vpop.f32.mrb[0].mxu0
      %v1617 = vpop.f32.mrb[0].mxu0
      %v1618 = vadd.f32 0.0, %v1617
      %v1619 = vpop.f32.mrb[0].mxu0
      %1620 = vmatprep.mubr.bf16.mxu0 0
      %1621 = vmatmul.mubr.bf16.gmra.mrb[0].mxu0 %v1544
      %v1622 = vpop.f32.mrb[0].mxu0
      %v1623 = vadd.f32 0.0, %v1622
      %v1624 = vpop.f32.mrb[0].mxu0
      %v1625 = vpop.f32.mrb[0].mxu0
      %v1626 = vadd.f32 0.0, %v1625
      %v1627 = vpop.f32.mrb[0].mxu0
      %1628 = vmatprep.mubr.bf16.mxu0 0
      %1629 = vmatmul.mubr.bf16.gmra.mrb[0].mxu0 %v1547
      %v1630 = vpop.f32.mrb[0].mxu0
      %v1631 = vadd.f32 0.0, %v1630
      %v1632 = vpop.f32.mrb[0].mxu0
      %v1633 = vpop.f32.mrb[0].mxu0
      %v1634 = vadd.f32 0.0, %v1633
      %v1635 = vpop.f32.mrb[0].mxu0
      %1636 = vmatprep.mubr.bf16.mxu0 0
      %1637 = vmatmul.mubr.bf16.gmra.mrb[0].mxu0 %v1550
      %v1638 = vpop.f32.mrb[0].mxu0
      %v1639 = vadd.f32 0.0, %v1638
      %v1640 = vpop.f32.mrb[0].mxu0
      %v1641 = vpop.f32.mrb[0].mxu0
      %v1642 = vpop.f32.mrb[0].mxu0
      %1643 = vdwg.mxu0
      %v1645 = vsel %vm350, %v1501, 0
      %v1648 = vsel %vm350, %v1502, 0
      %v1651 = vsel %vm350, %v1503, 0
      %v1654 = vsel %vm350, %v1504, 0
      %v1657 = vsel %vm350, %v1505, 0
      %v1660 = vsel %vm350, %v1506, 0
      %v1663 = vsel %vm350, %v1507, 0
      %v1666 = vsel %vm1552, %v1508, 0
      %1668 = vmatprep.subr.bf16.mxu0 0
      %1669 = vmatpush1.bf16.msra.mxu0 %v1666
      %1670 = vmatprep.subr.bf16.mxu0 0
      %1671 = vmatpush1.bf16.msra.mxu0 0
      %1672 = vmatprep.subr.bf16.mxu0 0
      %1673 = vmatpush1.bf16.msra.mxu0 0
      %1674 = vmatprep.subr.bf16.mxu0 0
      %1675 = vmatpush1.bf16.msra.mxu0 0
      %1676 = vmatprep.subr.bf16.mxu0 0
      %1677 = vmatpush1.bf16.msra.mxu0 0
      %1678 = vmatprep.subr.bf16.mxu0 0
      %1679 = vmatpush1.bf16.msra.mxu0 0
      %1680 = vmatprep.subr.bf16.mxu0 0
      %1681 = vmatpush1.bf16.msra.mxu0 0
      %1682 = vmatprep.subr.bf16.mxu0 0
      %1683 = vmatpush1.bf16.msra.mxu0 0
      %1684 = vmatprep.subr.bf16.mxu0 0
      %1685 = vmatpush1.bf16.msra.mxu0 0
      %1686 = vmatprep.subr.bf16.mxu0 0
      %1687 = vmatpush1.bf16.msra.mxu0 0
      %1688 = vmatprep.subr.bf16.mxu0 0
      %1689 = vmatpush1.bf16.msra.mxu0 0
      %1690 = vmatprep.subr.bf16.mxu0 0
      %1691 = vmatpush1.bf16.msra.mxu0 0
      %1692 = vmatprep.subr.bf16.mxu0 0
      %1693 = vmatpush1.bf16.msra.mxu0 0
      %1694 = vmatprep.subr.bf16.mxu0 0
      %1695 = vmatpush1.bf16.msra.mxu0 0
      %1696 = vmatprep.subr.bf16.mxu0 0
      %1697 = vmatpush1.bf16.msra.mxu0 0
      %1698 = vmatprep.subr.bf16.mxu0 0
      %1699 = vmatpush1.bf16.msra.mxu0 0
      %1700 = vmatprep.mubr.bf16.mxu0 0
      %1701 = vmatmul.mubr.bf16.gmra.mrb[0].mxu0 %v1645
      %v1702 = vpop.f32.mrb[0].mxu0
      %v1703 = vadd.f32 %v1591, %v1702
      %v1704 = vpop.f32.mrb[0].mxu0
      %v1705 = vpop.f32.mrb[0].mxu0
      %v1706 = vadd.f32 %v1594, %v1705
      %v1707 = vpop.f32.mrb[0].mxu0
      %1708 = vmatprep.mubr.bf16.mxu0 0
      %1709 = vmatmul.mubr.bf16.gmra.mrb[0].mxu0 %v1648
      %v1710 = vpop.f32.mrb[0].mxu0
      %v1711 = vadd.f32 %v1599, %v1710
      %v1712 = vpop.f32.mrb[0].mxu0
      %v1713 = vpop.f32.mrb[0].mxu0
      %v1714 = vadd.f32 %v1602, %v1713
      %v1715 = vpop.f32.mrb[0].mxu0
      %1716 = vmatprep.mubr.bf16.mxu0 0
      %1717 = vmatmul.mubr.bf16.gmra.mrb[0].mxu0 %v1651
      %v1718 = vpop.f32.mrb[0].mxu0
      %v1719 = vadd.f32 %v1607, %v1718
      %v1720 = vpop.f32.mrb[0].mxu0
      %v1721 = vpop.f32.mrb[0].mxu0
      %v1722 = vadd.f32 %v1610, %v1721
      %v1723 = vpop.f32.mrb[0].mxu0
      %1724 = vmatprep.mubr.bf16.mxu0 0
      %1725 = vmatmul.mubr.bf16.gmra.mrb[0].mxu0 %v1654
      %v1726 = vpop.f32.mrb[0].mxu0
      %v1727 = vadd.f32 %v1615, %v1726
      %v1728 = vpop.f32.mrb[0].mxu0
      %v1729 = vpop.f32.mrb[0].mxu0
      %v1730 = vadd.f32 %v1618, %v1729
      %v1731 = vpop.f32.mrb[0].mxu0
      %1732 = vmatprep.mubr.bf16.mxu0 0
      %1733 = vmatmul.mubr.bf16.gmra.mrb[0].mxu0 %v1657
      %v1734 = vpop.f32.mrb[0].mxu0
      %v1735 = vadd.f32 %v1623, %v1734
      %v1736 = vpop.f32.mrb[0].mxu0
      %v1737 = vpop.f32.mrb[0].mxu0
      %v1738 = vadd.f32 %v1626, %v1737
      %v1739 = vpop.f32.mrb[0].mxu0
      %1740 = vmatprep.mubr.bf16.mxu0 0
      %1741 = vmatmul.mubr.bf16.gmra.mrb[0].mxu0 %v1660
      %v1742 = vpop.f32.mrb[0].mxu0
      %v1743 = vadd.f32 %v1631, %v1742
      %v1744 = vpop.f32.mrb[0].mxu0
      %v1745 = vpop.f32.mrb[0].mxu0
      %v1746 = vadd.f32 %v1634, %v1745
      %v1747 = vpop.f32.mrb[0].mxu0
      %1748 = vmatprep.mubr.bf16.mxu0 0
      %1749 = vmatmul.mubr.bf16.gmra.mrb[0].mxu0 %v1663
      %v1750 = vpop.f32.mrb[0].mxu0
      %v1751 = vadd.f32 %v1639, %v1750
      %v1752 = vpop.f32.mrb[0].mxu0
      %v1753 = vpop.f32.mrb[0].mxu0
      %v1754 = vpop.f32.mrb[0].mxu0
      %1755 = vdwg.mxu0
      %v1756 = vld [vmem:[%s1474 + $0x6] sm:$0xff]
      %v1757 = vld [vmem:[%s1474 + $0xe] sm:$0xff]
      %v1758 = vld [vmem:[%s1474 + $0x16] sm:$0xff]
      %v1759 = vld [vmem:[%s1474 + $0x1e] sm:$0xff]
      %v1760 = vld [vmem:[%s1474 + $0x26] sm:$0xff]
      %v1761 = vld [vmem:[%s1474 + $0x2e] sm:$0xff]
      %v1762 = vld [vmem:[%s1474 + $0x36] sm:$0xff]
      %v1763 = vld [vmem:[%s1474 + $0x3e] sm:$0xff]
      %v1764 = vld [vmem:[%s1474 + $0x46] sm:$0xff]
      %v1765 = vld [vmem:[%s1474 + $0x4e] sm:$0xff]
      %v1766 = vld [vmem:[%s1474 + $0x56] sm:$0xff]
      %v1767 = vld [vmem:[%s1474 + $0x5e] sm:$0xff]
      %v1768 = vld [vmem:[%s1474 + $0x66] sm:$0xf]
      %v1769 = vpack.c.bf16 %v1757, %v1756
      %v1770 = vpack.c.bf16 %v1759, %v1758
      %v1771 = vpack.c.bf16 %v1761, %v1760
      %v1772 = vpack.c.bf16 %v1763, %v1762
      %v1773 = vpack.c.bf16 %v1765, %v1764
      %v1774 = vpack.c.bf16 %v1767, %v1766
      %v1775 = vpack.c.bf16 %v1768, %v1768
      %s1776 = scalar_lea.vmem %s4, 8
      %v1777 = vld [vmem:[%s1776] sm:$0xf]
      %v1779 = vsel %vm350, %v1769, 0
      %v1782 = vsel %vm350, %v1770, 0
      %v1785 = vsel %vm350, %v1771, 0
      %v1788 = vsel %vm350, %v1772, 0
      %v1791 = vsel %vm350, %v1773, 0
      %v1794 = vsel %vm350, %v1774, 0
      %v1797 = vsel %vm350, %v1775, 0
      %v1800 = vsel %vm1552, %v1777, 0
      %1802 = vmatprep.subr.bf16.mxu0 0
      %1803 = vmatpush1.bf16.msra.mxu0 %v1800
      %1804 = vmatprep.subr.bf16.mxu0 0
      %1805 = vmatpush1.bf16.msra.mxu0 0
      %1806 = vmatprep.subr.bf16.mxu0 0
      %1807 = vmatpush1.bf16.msra.mxu0 0
      %1808 = vmatprep.subr.bf16.mxu0 0
      %1809 = vmatpush1.bf16.msra.mxu0 0
      %1810 = vmatprep.subr.bf16.mxu0 0
      %1811 = vmatpush1.bf16.msra.mxu0 0
      %1812 = vmatprep.subr.bf16.mxu0 0
      %1813 = vmatpush1.bf16.msra.mxu0 0
      %1814 = vmatprep.subr.bf16.mxu0 0
      %1815 = vmatpush1.bf16.msra.mxu0 0
      %1816 = vmatprep.subr.bf16.mxu0 0
      %1817 = vmatpush1.bf16.msra.mxu0 0
      %1818 = vmatprep.subr.bf16.mxu0 0
      %1819 = vmatpush1.bf16.msra.mxu0 0
      %1820 = vmatprep.subr.bf16.mxu0 0
      %1821 = vmatpush1.bf16.msra.mxu0 0
      %1822 = vmatprep.subr.bf16.mxu0 0
      %1823 = vmatpush1.bf16.msra.mxu0 0
      %1824 = vmatprep.subr.bf16.mxu0 0
      %1825 = vmatpush1.bf16.msra.mxu0 0
      %1826 = vmatprep.subr.bf16.mxu0 0
      %1827 = vmatpush1.bf16.msra.mxu0 0
      %1828 = vmatprep.subr.bf16.mxu0 0
      %1829 = vmatpush1.bf16.msra.mxu0 0
      %1830 = vmatprep.subr.bf16.mxu0 0
      %1831 = vmatpush1.bf16.msra.mxu0 0
      %1832 = vmatprep.subr.bf16.mxu0 0
      %1833 = vmatpush1.bf16.msra.mxu0 0
      %1834 = vmatprep.mubr.bf16.mxu0 0
      %1835 = vmatmul.mubr.bf16.gmra.mrb[0].mxu0 %v1779
      %v1836 = vpop.f32.mrb[0].mxu0
      %v1837 = vadd.f32 0.0, %v1836
      %v1838 = vpop.f32.mrb[0].mxu0
      %v1839 = vpop.f32.mrb[0].mxu0
      %v1840 = vadd.f32 0.0, %v1839
      %v1841 = vpop.f32.mrb[0].mxu0
      %1842 = vmatprep.mubr.bf16.mxu0 0
      %1843 = vmatmul.mubr.bf16.gmra.mrb[0].mxu0 %v1782
      %v1844 = vpop.f32.mrb[0].mxu0
      %v1845 = vadd.f32 0.0, %v1844
      %v1846 = vpop.f32.mrb[0].mxu0
      %v1847 = vpop.f32.mrb[0].mxu0
      %v1848 = vadd.f32 0.0, %v1847
      %v1849 = vpop.f32.mrb[0].mxu0
      %1850 = vmatprep.mubr.bf16.mxu0 0
      %1851 = vmatmul.mubr.bf16.gmra.mrb[0].mxu0 %v1785
      %v1852 = vpop.f32.mrb[0].mxu0
      %v1853 = vadd.f32 0.0, %v1852
      %v1854 = vpop.f32.mrb[0].mxu0
      %v1855 = vpop.f32.mrb[0].mxu0
      %v1856 = vadd.f32 0.0, %v1855
      %v1857 = vpop.f32.mrb[0].mxu0
      %1858 = vmatprep.mubr.bf16.mxu0 0
      %1859 = vmatmul.mubr.bf16.gmra.mrb[0].mxu0 %v1788
      %v1860 = vpop.f32.mrb[0].mxu0
      %v1861 = vadd.f32 0.0, %v1860
      %v1862 = vpop.f32.mrb[0].mxu0
      %v1863 = vpop.f32.mrb[0].mxu0
      %v1864 = vadd.f32 0.0, %v1863
      %v1865 = vpop.f32.mrb[0].mxu0
      %1866 = vmatprep.mubr.bf16.mxu0 0
      %1867 = vmatmul.mubr.bf16.gmra.mrb[0].mxu0 %v1791
      %v1868 = vpop.f32.mrb[0].mxu0
      %v1869 = vadd.f32 0.0, %v1868
      %v1870 = vpop.f32.mrb[0].mxu0
      %v1871 = vpop.f32.mrb[0].mxu0
      %v1872 = vadd.f32 0.0, %v1871
      %v1873 = vpop.f32.mrb[0].mxu0
      %1874 = vmatprep.mubr.bf16.mxu0 0
      %1875 = vmatmul.mubr.bf16.gmra.mrb[0].mxu0 %v1794
      %v1876 = vpop.f32.mrb[0].mxu0
      %v1877 = vadd.f32 0.0, %v1876
      %v1878 = vpop.f32.mrb[0].mxu0
      %v1879 = vpop.f32.mrb[0].mxu0
      %v1880 = vadd.f32 0.0, %v1879
      %v1881 = vpop.f32.mrb[0].mxu0
      %1882 = vmatprep.mubr.bf16.mxu0 0
      %1883 = vmatmul.mubr.bf16.gmra.mrb[0].mxu0 %v1797
      %v1884 = vpop.f32.mrb[0].mxu0
      %v1885 = vadd.f32 0.0, %v1884
      %v1886 = vpop.f32.mrb[0].mxu0
      %v1887 = vpop.f32.mrb[0].mxu0
      %v1888 = vpop.f32.mrb[0].mxu0
      %1889 = vdwg.mxu0
      %v1890 = vadd.f32 %v1703, %v1837
      %v1891 = vadd.f32 %v1706, %v1840
      %v1892 = vadd.f32 %v1711, %v1845
      %v1893 = vadd.f32 %v1714, %v1848
      %v1894 = vadd.f32 %v1719, %v1853
      %v1895 = vadd.f32 %v1722, %v1856
      %v1896 = vadd.f32 %v1727, %v1861
      %v1897 = vadd.f32 %v1730, %v1864
      %v1898 = vadd.f32 %v1735, %v1869
      %v1899 = vadd.f32 %v1738, %v1872
      %v1900 = vadd.f32 %v1743, %v1877
      %v1901 = vadd.f32 %v1746, %v1880
      %v1902 = vadd.f32 %v1751, %v1885
      %v1903 = vld [vmem:[%s978 + $0xf] sm:$0xff]
      %v1904 = vld [vmem:[%s978 + $0x17] sm:$0xff]
      %v1905 = vld [vmem:[%s978 + $0x1f] sm:$0xff]
      %v1906 = vld [vmem:[%s978 + $0x27] sm:$0xff]
      %v1907 = vld [vmem:[%s978 + $0x2f] sm:$0xff]
      %v1908 = vld [vmem:[%s978 + $0x37] sm:$0xff]
      %v1909 = vld [vmem:[%s978 + $0x3f] sm:$0xff]
      %v1910 = vld [vmem:[%s978 + $0x47] sm:$0xff]
      %v1911 = vld [vmem:[%s978 + $0x4f] sm:$0xff]
      %v1912 = vld [vmem:[%s978 + $0x57] sm:$0xff]
      %v1913 = vld [vmem:[%s978 + $0x5f] sm:$0xff]
      %v1914 = vld [vmem:[%s978 + $0x67] sm:$0xff]
      %v1915 = vld [vmem:[%s978 + $0x6f] sm:$0xf]
      %v1916 = vpack.c.bf16 %v1904, %v1903
      %v1917 = vpack.c.bf16 %v1906, %v1905
      %v1918 = vpack.c.bf16 %v1908, %v1907
      %v1919 = vpack.c.bf16 %v1910, %v1909
      %v1920 = vpack.c.bf16 %v1912, %v1911
      %v1921 = vpack.c.bf16 %v1914, %v1913
      %v1922 = vpack.c.bf16 %v1915, %v1915
      %s1923 = scalar_lea.vmem %s4, 12
      %v1924 = vld [vmem:[%s1923] sm:$0xf]
      %v1926 = vsel %vm350, %v1916, 0
      %v1929 = vsel %vm350, %v1917, 0
      %v1932 = vsel %vm350, %v1918, 0
      %v1935 = vsel %vm350, %v1919, 0
      %v1938 = vsel %vm350, %v1920, 0
      %v1941 = vsel %vm350, %v1921, 0
      %v1944 = vsel %vm350, %v1922, 0
      %v1947 = vsel %vm1552, %v1924, 0
      %1949 = vmatprep.subr.bf16.mxu0 0
      %1950 = vmatpush1.bf16.msra.mxu0 %v1947
      %1951 = vmatprep.subr.bf16.mxu0 0
      %1952 = vmatpush1.bf16.msra.mxu0 0
      %1953 = vmatprep.subr.bf16.mxu0 0
      %1954 = vmatpush1.bf16.msra.mxu0 0
      %1955 = vmatprep.subr.bf16.mxu0 0
      %1956 = vmatpush1.bf16.msra.mxu0 0
      %1957 = vmatprep.subr.bf16.mxu0 0
      %1958 = vmatpush1.bf16.msra.mxu0 0
      %1959 = vmatprep.subr.bf16.mxu0 0
      %1960 = vmatpush1.bf16.msra.mxu0 0
      %1961 = vmatprep.subr.bf16.mxu0 0
      %1962 = vmatpush1.bf16.msra.mxu0 0
      %1963 = vmatprep.subr.bf16.mxu0 0
      %1964 = vmatpush1.bf16.msra.mxu0 0
      %1965 = vmatprep.subr.bf16.mxu0 0
      %1966 = vmatpush1.bf16.msra.mxu0 0
      %1967 = vmatprep.subr.bf16.mxu0 0
      %1968 = vmatpush1.bf16.msra.mxu0 0
      %1969 = vmatprep.subr.bf16.mxu0 0
      %1970 = vmatpush1.bf16.msra.mxu0 0
      %1971 = vmatprep.subr.bf16.mxu0 0
      %1972 = vmatpush1.bf16.msra.mxu0 0
      %1973 = vmatprep.subr.bf16.mxu0 0
      %1974 = vmatpush1.bf16.msra.mxu0 0
      %1975 = vmatprep.subr.bf16.mxu0 0
      %1976 = vmatpush1.bf16.msra.mxu0 0
      %1977 = vmatprep.subr.bf16.mxu0 0
      %1978 = vmatpush1.bf16.msra.mxu0 0
      %1979 = vmatprep.subr.bf16.mxu0 0
      %1980 = vmatpush1.bf16.msra.mxu0 0
      %1981 = vmatprep.mubr.bf16.mxu0 0
      %1982 = vmatmul.mubr.bf16.gmra.mrb[0].mxu0 %v1926
      %v1983 = vpop.f32.mrb[0].mxu0
      %v1984 = vadd.f32 0.0, %v1983
      %v1985 = vpop.f32.mrb[0].mxu0
      %v1986 = vpop.f32.mrb[0].mxu0
      %v1987 = vadd.f32 0.0, %v1986
      %v1988 = vpop.f32.mrb[0].mxu0
      %1989 = vmatprep.mubr.bf16.mxu0 0
      %1990 = vmatmul.mubr.bf16.gmra.mrb[0].mxu0 %v1929
      %v1991 = vpop.f32.mrb[0].mxu0
      %v1992 = vadd.f32 0.0, %v1991
      %v1993 = vpop.f32.mrb[0].mxu0
      %v1994 = vpop.f32.mrb[0].mxu0
      %v1995 = vadd.f32 0.0, %v1994
      %v1996 = vpop.f32.mrb[0].mxu0
      %1997 = vmatprep.mubr.bf16.mxu0 0
      %1998 = vmatmul.mubr.bf16.gmra.mrb[0].mxu0 %v1932
      %v1999 = vpop.f32.mrb[0].mxu0
      %v2000 = vadd.f32 0.0, %v1999
      %v2001 = vpop.f32.mrb[0].mxu0
      %v2002 = vpop.f32.mrb[0].mxu0
      %v2003 = vadd.f32 0.0, %v2002
      %v2004 = vpop.f32.mrb[0].mxu0
      %2005 = vmatprep.mubr.bf16.mxu0 0
      %2006 = vmatmul.mubr.bf16.gmra.mrb[0].mxu0 %v1935
      %v2007 = vpop.f32.mrb[0].mxu0
      %v2008 = vadd.f32 0.0, %v2007
      %v2009 = vpop.f32.mrb[0].mxu0
      %v2010 = vpop.f32.mrb[0].mxu0
      %v2011 = vadd.f32 0.0, %v2010
      %v2012 = vpop.f32.mrb[0].mxu0
      %2013 = vmatprep.mubr.bf16.mxu0 0
      %2014 = vmatmul.mubr.bf16.gmra.mrb[0].mxu0 %v1938
      %v2015 = vpop.f32.mrb[0].mxu0
      %v2016 = vadd.f32 0.0, %v2015
      %v2017 = vpop.f32.mrb[0].mxu0
      %v2018 = vpop.f32.mrb[0].mxu0
      %v2019 = vadd.f32 0.0, %v2018
      %v2020 = vpop.f32.mrb[0].mxu0
      %2021 = vmatprep.mubr.bf16.mxu0 0
      %2022 = vmatmul.mubr.bf16.gmra.mrb[0].mxu0 %v1941
      %v2023 = vpop.f32.mrb[0].mxu0
      %v2024 = vadd.f32 0.0, %v2023
      %v2025 = vpop.f32.mrb[0].mxu0
      %v2026 = vpop.f32.mrb[0].mxu0
      %v2027 = vadd.f32 0.0, %v2026
      %v2028 = vpop.f32.mrb[0].mxu0
      %2029 = vmatprep.mubr.bf16.mxu0 0
      %2030 = vmatmul.mubr.bf16.gmra.mrb[0].mxu0 %v1944
      %v2031 = vpop.f32.mrb[0].mxu0
      %v2032 = vadd.f32 0.0, %v2031
      %v2033 = vpop.f32.mrb[0].mxu0
      %v2034 = vpop.f32.mrb[0].mxu0
      %v2035 = vpop.f32.mrb[0].mxu0
      %2036 = vdwg.mxu0
      %v2037 = vadd.f32 %v1890, %v1984
      %v2038 = vadd.f32 %v1891, %v1987
      %v2039 = vadd.f32 %v1892, %v1992
      %v2040 = vadd.f32 %v1893, %v1995
      %v2041 = vadd.f32 %v1894, %v2000
      %v2042 = vadd.f32 %v1895, %v2003
      %v2043 = vadd.f32 %v1896, %v2008
      %v2044 = vadd.f32 %v1897, %v2011
      %v2045 = vadd.f32 %v1898, %v2016
      %v2046 = vadd.f32 %v1899, %v2019
      %v2047 = vadd.f32 %v1900, %v2024
      %v2048 = vadd.f32 %v1901, %v2027
      %v2049 = vadd.f32 %v1902, %v2032
      %v2050 = vld [vmem:[#allocation2 + $0x10] sm:$0xff]
      %v2051 = vld [vmem:[#allocation2 + $0x18] sm:$0xff]
      %v2052 = vld [vmem:[#allocation2 + $0x20] sm:$0xff]
      %v2053 = vld [vmem:[#allocation2 + $0x28] sm:$0xff]
      %v2054 = vld [vmem:[#allocation2 + $0x30] sm:$0xff]
      %v2055 = vld [vmem:[#allocation2 + $0x38] sm:$0xff]
      %v2056 = vld [vmem:[#allocation2 + $0x40] sm:$0xff]
      %v2057 = vld [vmem:[#allocation2 + $0x48] sm:$0xff]
      %v2058 = vld [vmem:[#allocation2 + $0x50] sm:$0xff]
      %v2059 = vld [vmem:[#allocation2 + $0x58] sm:$0xff]
      %v2060 = vld [vmem:[#allocation2 + $0x60] sm:$0xff]
      %v2061 = vld [vmem:[#allocation2 + $0x68] sm:$0xff]
      %v2062 = vld [vmem:[#allocation2 + $0x70] sm:$0xf]
      %v2063 = vpack.c.bf16 %v2051, %v2050
      %v2064 = vpack.c.bf16 %v2053, %v2052
      %v2065 = vpack.c.bf16 %v2055, %v2054
      %v2066 = vpack.c.bf16 %v2057, %v2056
      %v2067 = vpack.c.bf16 %v2059, %v2058
      %v2068 = vpack.c.bf16 %v2061, %v2060
      %v2069 = vpack.c.bf16 %v2062, %v2062
      %s2070 = scalar_lea.vmem %s4, 16
      %v2071 = vld [vmem:[%s2070] sm:$0xf]
      %v2073 = vsel %vm350, %v2063, 0
      %v2076 = vsel %vm350, %v2064, 0
      %v2079 = vsel %vm350, %v2065, 0
      %v2082 = vsel %vm350, %v2066, 0
      %v2085 = vsel %vm350, %v2067, 0
      %v2088 = vsel %vm350, %v2068, 0
      %v2091 = vsel %vm350, %v2069, 0
      %v2094 = vsel %vm1552, %v2071, 0
      %2096 = vmatprep.subr.bf16.mxu0 0
      %2097 = vmatpush1.bf16.msra.mxu0 %v2094
      %2098 = vmatprep.subr.bf16.mxu0 0
      %2099 = vmatpush1.bf16.msra.mxu0 0
      %2100 = vmatprep.subr.bf16.mxu0 0
      %2101 = vmatpush1.bf16.msra.mxu0 0
      %2102 = vmatprep.subr.bf16.mxu0 0
      %2103 = vmatpush1.bf16.msra.mxu0 0
      %2104 = vmatprep.subr.bf16.mxu0 0
      %2105 = vmatpush1.bf16.msra.mxu0 0
      %2106 = vmatprep.subr.bf16.mxu0 0
      %2107 = vmatpush1.bf16.msra.mxu0 0
      %2108 = vmatprep.subr.bf16.mxu0 0
      %2109 = vmatpush1.bf16.msra.mxu0 0
      %2110 = vmatprep.subr.bf16.mxu0 0
      %2111 = vmatpush1.bf16.msra.mxu0 0
      %2112 = vmatprep.subr.bf16.mxu0 0
      %2113 = vmatpush1.bf16.msra.mxu0 0
      %2114 = vmatprep.subr.bf16.mxu0 0
      %2115 = vmatpush1.bf16.msra.mxu0 0
      %2116 = vmatprep.subr.bf16.mxu0 0
      %2117 = vmatpush1.bf16.msra.mxu0 0
      %2118 = vmatprep.subr.bf16.mxu0 0
      %2119 = vmatpush1.bf16.msra.mxu0 0
      %2120 = vmatprep.subr.bf16.mxu0 0
      %2121 = vmatpush1.bf16.msra.mxu0 0
      %2122 = vmatprep.subr.bf16.mxu0 0
      %2123 = vmatpush1.bf16.msra.mxu0 0
      %2124 = vmatprep.subr.bf16.mxu0 0
      %2125 = vmatpush1.bf16.msra.mxu0 0
      %2126 = vmatprep.subr.bf16.mxu0 0
      %2127 = vmatpush1.bf16.msra.mxu0 0
      %2128 = vmatprep.mubr.bf16.mxu0 0
      %2129 = vmatmul.mubr.bf16.gmra.mrb[0].mxu0 %v2073
      %v2130 = vpop.f32.mrb[0].mxu0
      %v2131 = vadd.f32 0.0, %v2130
      %v2132 = vpop.f32.mrb[0].mxu0
      %v2133 = vpop.f32.mrb[0].mxu0
      %v2134 = vadd.f32 0.0, %v2133
      %v2135 = vpop.f32.mrb[0].mxu0
      %2136 = vmatprep.mubr.bf16.mxu0 0
      %2137 = vmatmul.mubr.bf16.gmra.mrb[0].mxu0 %v2076
      %v2138 = vpop.f32.mrb[0].mxu0
      %v2139 = vadd.f32 0.0, %v2138
      %v2140 = vpop.f32.mrb[0].mxu0
      %v2141 = vpop.f32.mrb[0].mxu0
      %v2142 = vadd.f32 0.0, %v2141
      %v2143 = vpop.f32.mrb[0].mxu0
      %2144 = vmatprep.mubr.bf16.mxu0 0
      %2145 = vmatmul.mubr.bf16.gmra.mrb[0].mxu0 %v2079
      %v2146 = vpop.f32.mrb[0].mxu0
      %v2147 = vadd.f32 0.0, %v2146
      %v2148 = vpop.f32.mrb[0].mxu0
      %v2149 = vpop.f32.mrb[0].mxu0
      %v2150 = vadd.f32 0.0, %v2149
      %v2151 = vpop.f32.mrb[0].mxu0
      %2152 = vmatprep.mubr.bf16.mxu0 0
      %2153 = vmatmul.mubr.bf16.gmra.mrb[0].mxu0 %v2082
      %v2154 = vpop.f32.mrb[0].mxu0
      %v2155 = vadd.f32 0.0, %v2154
      %v2156 = vpop.f32.mrb[0].mxu0
      %v2157 = vpop.f32.mrb[0].mxu0
      %v2158 = vadd.f32 0.0, %v2157
      %v2159 = vpop.f32.mrb[0].mxu0
      %2160 = vmatprep.mubr.bf16.mxu0 0
      %2161 = vmatmul.mubr.bf16.gmra.mrb[0].mxu0 %v2085
      %v2162 = vpop.f32.mrb[0].mxu0
      %v2163 = vadd.f32 0.0, %v2162
      %v2164 = vpop.f32.mrb[0].mxu0
      %v2165 = vpop.f32.mrb[0].mxu0
      %v2166 = vadd.f32 0.0, %v2165
      %v2167 = vpop.f32.mrb[0].mxu0
      %2168 = vmatprep.mubr.bf16.mxu0 0
      %2169 = vmatmul.mubr.bf16.gmra.mrb[0].mxu0 %v2088
      %v2170 = vpop.f32.mrb[0].mxu0
      %v2171 = vadd.f32 0.0, %v2170
      %v2172 = vpop.f32.mrb[0].mxu0
      %v2173 = vpop.f32.mrb[0].mxu0
      %v2174 = vadd.f32 0.0, %v2173
      %v2175 = vpop.f32.mrb[0].mxu0
      %2176 = vmatprep.mubr.bf16.mxu0 0
      %2177 = vmatmul.mubr.bf16.gmra.mrb[0].mxu0 %v2091
      %v2178 = vpop.f32.mrb[0].mxu0
      %v2179 = vadd.f32 0.0, %v2178
      %v2180 = vpop.f32.mrb[0].mxu0
      %v2181 = vpop.f32.mrb[0].mxu0
      %v2182 = vpop.f32.mrb[0].mxu0
      %2183 = vdwg.mxu0
      %v2184 = vadd.f32 %v2037, %v2131
      %v2185 = vadd.f32 %v2038, %v2134
      %v2186 = vadd.f32 %v2039, %v2139
      %v2187 = vadd.f32 %v2040, %v2142
      %v2188 = vadd.f32 %v2041, %v2147
      %v2189 = vadd.f32 %v2042, %v2150
      %v2190 = vadd.f32 %v2043, %v2155
      %v2191 = vadd.f32 %v2044, %v2158
      %v2192 = vadd.f32 %v2045, %v2163
      %v2193 = vadd.f32 %v2046, %v2166
      %v2194 = vadd.f32 %v2047, %v2171
      %v2195 = vadd.f32 %v2048, %v2174
      %v2196 = vadd.f32 %v2049, %v2179
      %v2197 = vld [vmem:[%s978 + $0x10] sm:$0xff]
      %v2198 = vld [vmem:[%s978 + $0x18] sm:$0xff]
      %v2199 = vld [vmem:[%s978 + $0x20] sm:$0xff]
      %v2200 = vld [vmem:[%s978 + $0x28] sm:$0xff]
      %v2201 = vld [vmem:[%s978 + $0x30] sm:$0xff]
      %v2202 = vld [vmem:[%s978 + $0x38] sm:$0xff]
      %v2203 = vld [vmem:[%s978 + $0x40] sm:$0xff]
      %v2204 = vld [vmem:[%s978 + $0x48] sm:$0xff]
      %v2205 = vld [vmem:[%s978 + $0x50] sm:$0xff]
      %v2206 = vld [vmem:[%s978 + $0x58] sm:$0xff]
      %v2207 = vld [vmem:[%s978 + $0x60] sm:$0xff]
      %v2208 = vld [vmem:[%s978 + $0x68] sm:$0xff]
      %v2209 = vld [vmem:[%s978 + $0x70] sm:$0xf]
      %v2210 = vpack.c.bf16 %v2198, %v2197
      %v2211 = vpack.c.bf16 %v2200, %v2199
      %v2212 = vpack.c.bf16 %v2202, %v2201
      %v2213 = vpack.c.bf16 %v2204, %v2203
      %v2214 = vpack.c.bf16 %v2206, %v2205
      %v2215 = vpack.c.bf16 %v2208, %v2207
      %v2216 = vpack.c.bf16 %v2209, %v2209
      %s2217 = scalar_lea.vmem %s4, 20
      %v2218 = vld [vmem:[%s2217] sm:$0xf]
      %v2220 = vsel %vm350, %v2210, 0
      %v2223 = vsel %vm350, %v2211, 0
      %v2226 = vsel %vm350, %v2212, 0
      %v2229 = vsel %vm350, %v2213, 0
      %v2232 = vsel %vm350, %v2214, 0
      %v2235 = vsel %vm350, %v2215, 0
      %v2238 = vsel %vm350, %v2216, 0
      %v2241 = vsel %vm1552, %v2218, 0
      %2243 = vmatprep.subr.bf16.mxu0 0
      %2244 = vmatpush1.bf16.msra.mxu0 %v2241
      %2245 = vmatprep.subr.bf16.mxu0 0
      %2246 = vmatpush1.bf16.msra.mxu0 0
      %2247 = vmatprep.subr.bf16.mxu0 0
      %2248 = vmatpush1.bf16.msra.mxu0 0
      %2249 = vmatprep.subr.bf16.mxu0 0
      %2250 = vmatpush1.bf16.msra.mxu0 0
      %2251 = vmatprep.subr.bf16.mxu0 0
      %2252 = vmatpush1.bf16.msra.mxu0 0
      %2253 = vmatprep.subr.bf16.mxu0 0
      %2254 = vmatpush1.bf16.msra.mxu0 0
      %2255 = vmatprep.subr.bf16.mxu0 0
      %2256 = vmatpush1.bf16.msra.mxu0 0
      %2257 = vmatprep.subr.bf16.mxu0 0
      %2258 = vmatpush1.bf16.msra.mxu0 0
      %2259 = vmatprep.subr.bf16.mxu0 0
      %2260 = vmatpush1.bf16.msra.mxu0 0
      %2261 = vmatprep.subr.bf16.mxu0 0
      %2262 = vmatpush1.bf16.msra.mxu0 0
      %2263 = vmatprep.subr.bf16.mxu0 0
      %2264 = vmatpush1.bf16.msra.mxu0 0
      %2265 = vmatprep.subr.bf16.mxu0 0
      %2266 = vmatpush1.bf16.msra.mxu0 0
      %2267 = vmatprep.subr.bf16.mxu0 0
      %2268 = vmatpush1.bf16.msra.mxu0 0
      %2269 = vmatprep.subr.bf16.mxu0 0
      %2270 = vmatpush1.bf16.msra.mxu0 0
      %2271 = vmatprep.subr.bf16.mxu0 0
      %2272 = vmatpush1.bf16.msra.mxu0 0
      %2273 = vmatprep.subr.bf16.mxu0 0
      %2274 = vmatpush1.bf16.msra.mxu0 0
      %2275 = vmatprep.mubr.bf16.mxu0 0
      %2276 = vmatmul.mubr.bf16.gmra.mrb[0].mxu0 %v2220
      %v2277 = vpop.f32.mrb[0].mxu0
      %v2278 = vadd.f32 0.0, %v2277
      %v2279 = vpop.f32.mrb[0].mxu0
      %v2280 = vpop.f32.mrb[0].mxu0
      %v2281 = vadd.f32 0.0, %v2280
      %v2282 = vpop.f32.mrb[0].mxu0
      %2283 = vmatprep.mubr.bf16.mxu0 0
      %2284 = vmatmul.mubr.bf16.gmra.mrb[0].mxu0 %v2223
      %v2285 = vpop.f32.mrb[0].mxu0
      %v2286 = vadd.f32 0.0, %v2285
      %v2287 = vpop.f32.mrb[0].mxu0
      %v2288 = vpop.f32.mrb[0].mxu0
      %v2289 = vadd.f32 0.0, %v2288
      %v2290 = vpop.f32.mrb[0].mxu0
      %2291 = vmatprep.mubr.bf16.mxu0 0
      %2292 = vmatmul.mubr.bf16.gmra.mrb[0].mxu0 %v2226
      %v2293 = vpop.f32.mrb[0].mxu0
      %v2294 = vadd.f32 0.0, %v2293
      %v2295 = vpop.f32.mrb[0].mxu0
      %v2296 = vpop.f32.mrb[0].mxu0
      %v2297 = vadd.f32 0.0, %v2296
      %v2298 = vpop.f32.mrb[0].mxu0
      %2299 = vmatprep.mubr.bf16.mxu0 0
      %2300 = vmatmul.mubr.bf16.gmra.mrb[0].mxu0 %v2229
      %v2301 = vpop.f32.mrb[0].mxu0
      %v2302 = vadd.f32 0.0, %v2301
      %v2303 = vpop.f32.mrb[0].mxu0
      %v2304 = vpop.f32.mrb[0].mxu0
      %v2305 = vadd.f32 0.0, %v2304
      %v2306 = vpop.f32.mrb[0].mxu0
      %2307 = vmatprep.mubr.bf16.mxu0 0
      %2308 = vmatmul.mubr.bf16.gmra.mrb[0].mxu0 %v2232
      %v2309 = vpop.f32.mrb[0].mxu0
      %v2310 = vadd.f32 0.0, %v2309
      %v2311 = vpop.f32.mrb[0].mxu0
      %v2312 = vpop.f32.mrb[0].mxu0
      %v2313 = vadd.f32 0.0, %v2312
      %v2314 = vpop.f32.mrb[0].mxu0
      %2315 = vmatprep.mubr.bf16.mxu0 0
      %2316 = vmatmul.mubr.bf16.gmra.mrb[0].mxu0 %v2235
      %v2317 = vpop.f32.mrb[0].mxu0
      %v2318 = vadd.f32 0.0, %v2317
      %v2319 = vpop.f32.mrb[0].mxu0
      %v2320 = vpop.f32.mrb[0].mxu0
      %v2321 = vadd.f32 0.0, %v2320
      %v2322 = vpop.f32.mrb[0].mxu0
      %2323 = vmatprep.mubr.bf16.mxu0 0
      %2324 = vmatmul.mubr.bf16.gmra.mrb[0].mxu0 %v2238
      %v2325 = vpop.f32.mrb[0].mxu0
      %v2326 = vadd.f32 0.0, %v2325
      %v2327 = vpop.f32.mrb[0].mxu0
      %v2328 = vpop.f32.mrb[0].mxu0
      %v2329 = vpop.f32.mrb[0].mxu0
      %2330 = vdwg.mxu0
      %v2331 = vadd.f32 %v2184, %v2278
      %v2332 = vadd.f32 %v2185, %v2281
      %v2333 = vadd.f32 %v2186, %v2286
      %v2334 = vadd.f32 %v2187, %v2289
      %v2335 = vadd.f32 %v2188, %v2294
      %v2336 = vadd.f32 %v2189, %v2297
      %v2337 = vadd.f32 %v2190, %v2302
      %v2338 = vadd.f32 %v2191, %v2305
      %v2339 = vadd.f32 %v2192, %v2310
      %v2340 = vadd.f32 %v2193, %v2313
      %v2341 = vadd.f32 %v2194, %v2318
      %v2342 = vadd.f32 %v2195, %v2321
      %v2343 = vadd.f32 %v2196, %v2326
      %v2344 = vld [vmem:[%s1474 + $0xf] sm:$0xff]
      %v2345 = vld [vmem:[%s1474 + $0x17] sm:$0xff]
      %v2346 = vld [vmem:[%s1474 + $0x1f] sm:$0xff]
      %v2347 = vld [vmem:[%s1474 + $0x27] sm:$0xff]
      %v2348 = vld [vmem:[%s1474 + $0x2f] sm:$0xff]
      %v2349 = vld [vmem:[%s1474 + $0x37] sm:$0xff]
      %v2350 = vld [vmem:[%s1474 + $0x3f] sm:$0xff]
      %v2351 = vld [vmem:[%s1474 + $0x47] sm:$0xff]
      %v2352 = vld [vmem:[%s1474 + $0x4f] sm:$0xff]
      %v2353 = vld [vmem:[%s1474 + $0x57] sm:$0xff]
      %v2354 = vld [vmem:[%s1474 + $0x5f] sm:$0xff]
      %v2355 = vld [vmem:[%s1474 + $0x67] sm:$0xff]
      %v2356 = vld [vmem:[%s1474 + $0x6f] sm:$0xf]
      %v2357 = vpack.c.bf16 %v2345, %v2344
      %v2358 = vpack.c.bf16 %v2347, %v2346
      %v2359 = vpack.c.bf16 %v2349, %v2348
      %v2360 = vpack.c.bf16 %v2351, %v2350
      %v2361 = vpack.c.bf16 %v2353, %v2352
      %v2362 = vpack.c.bf16 %v2355, %v2354
      %v2363 = vpack.c.bf16 %v2356, %v2356
      %s2364 = scalar_lea.vmem %s4, 24
      %v2365 = vld [vmem:[%s2364] sm:$0xf]
      %v2367 = vsel %vm350, %v2357, 0
      %v2370 = vsel %vm350, %v2358, 0
      %v2373 = vsel %vm350, %v2359, 0
      %v2376 = vsel %vm350, %v2360, 0
      %v2379 = vsel %vm350, %v2361, 0
      %v2382 = vsel %vm350, %v2362, 0
      %v2385 = vsel %vm350, %v2363, 0
      %v2388 = vsel %vm1552, %v2365, 0
      %2390 = vmatprep.subr.bf16.mxu0 0
      %2391 = vmatpush1.bf16.msra.mxu0 %v2388
      %2392 = vmatprep.subr.bf16.mxu0 0
      %2393 = vmatpush1.bf16.msra.mxu0 0
      %2394 = vmatprep.subr.bf16.mxu0 0
      %2395 = vmatpush1.bf16.msra.mxu0 0
      %2396 = vmatprep.subr.bf16.mxu0 0
      %2397 = vmatpush1.bf16.msra.mxu0 0
      %2398 = vmatprep.subr.bf16.mxu0 0
      %2399 = vmatpush1.bf16.msra.mxu0 0
      %2400 = vmatprep.subr.bf16.mxu0 0
      %2401 = vmatpush1.bf16.msra.mxu0 0
      %2402 = vmatprep.subr.bf16.mxu0 0
      %2403 = vmatpush1.bf16.msra.mxu0 0
      %2404 = vmatprep.subr.bf16.mxu0 0
      %2405 = vmatpush1.bf16.msra.mxu0 0
      %2406 = vmatprep.subr.bf16.mxu0 0
      %2407 = vmatpush1.bf16.msra.mxu0 0
      %2408 = vmatprep.subr.bf16.mxu0 0
      %2409 = vmatpush1.bf16.msra.mxu0 0
      %2410 = vmatprep.subr.bf16.mxu0 0
      %2411 = vmatpush1.bf16.msra.mxu0 0
      %2412 = vmatprep.subr.bf16.mxu0 0
      %2413 = vmatpush1.bf16.msra.mxu0 0
      %2414 = vmatprep.subr.bf16.mxu0 0
      %2415 = vmatpush1.bf16.msra.mxu0 0
      %2416 = vmatprep.subr.bf16.mxu0 0
      %2417 = vmatpush1.bf16.msra.mxu0 0
      %2418 = vmatprep.subr.bf16.mxu0 0
      %2419 = vmatpush1.bf16.msra.mxu0 0
      %2420 = vmatprep.subr.bf16.mxu0 0
      %2421 = vmatpush1.bf16.msra.mxu0 0
      %2422 = vmatprep.mubr.bf16.mxu0 0
      %2423 = vmatmul.mubr.bf16.gmra.mrb[0].mxu0 %v2367
      %v2424 = vpop.f32.mrb[0].mxu0
      %v2425 = vadd.f32 0.0, %v2424
      %v2426 = vpop.f32.mrb[0].mxu0
      %v2427 = vpop.f32.mrb[0].mxu0
      %v2428 = vadd.f32 0.0, %v2427
      %v2429 = vpop.f32.mrb[0].mxu0
      %2430 = vmatprep.mubr.bf16.mxu0 0
      %2431 = vmatmul.mubr.bf16.gmra.mrb[0].mxu0 %v2370
      %v2432 = vpop.f32.mrb[0].mxu0
      %v2433 = vadd.f32 0.0, %v2432
      %v2434 = vpop.f32.mrb[0].mxu0
      %v2435 = vpop.f32.mrb[0].mxu0
      %v2436 = vadd.f32 0.0, %v2435
      %v2437 = vpop.f32.mrb[0].mxu0
      %2438 = vmatprep.mubr.bf16.mxu0 0
      %2439 = vmatmul.mubr.bf16.gmra.mrb[0].mxu0 %v2373
      %v2440 = vpop.f32.mrb[0].mxu0
      %v2441 = vadd.f32 0.0, %v2440
      %v2442 = vpop.f32.mrb[0].mxu0
      %v2443 = vpop.f32.mrb[0].mxu0
      %v2444 = vadd.f32 0.0, %v2443
      %v2445 = vpop.f32.mrb[0].mxu0
      %2446 = vmatprep.mubr.bf16.mxu0 0
      %2447 = vmatmul.mubr.bf16.gmra.mrb[0].mxu0 %v2376
      %v2448 = vpop.f32.mrb[0].mxu0
      %v2449 = vadd.f32 0.0, %v2448
      %v2450 = vpop.f32.mrb[0].mxu0
      %v2451 = vpop.f32.mrb[0].mxu0
      %v2452 = vadd.f32 0.0, %v2451
      %v2453 = vpop.f32.mrb[0].mxu0
      %2454 = vmatprep.mubr.bf16.mxu0 0
      %2455 = vmatmul.mubr.bf16.gmra.mrb[0].mxu0 %v2379
      %v2456 = vpop.f32.mrb[0].mxu0
      %v2457 = vadd.f32 0.0, %v2456
      %v2458 = vpop.f32.mrb[0].mxu0
      %v2459 = vpop.f32.mrb[0].mxu0
      %v2460 = vadd.f32 0.0, %v2459
      %v2461 = vpop.f32.mrb[0].mxu0
      %2462 = vmatprep.mubr.bf16.mxu0 0
      %2463 = vmatmul.mubr.bf16.gmra.mrb[0].mxu0 %v2382
      %v2464 = vpop.f32.mrb[0].mxu0
      %v2465 = vadd.f32 0.0, %v2464
      %v2466 = vpop.f32.mrb[0].mxu0
      %v2467 = vpop.f32.mrb[0].mxu0
      %v2468 = vadd.f32 0.0, %v2467
      %v2469 = vpop.f32.mrb[0].mxu0
      %2470 = vmatprep.mubr.bf16.mxu0 0
      %2471 = vmatmul.mubr.bf16.gmra.mrb[0].mxu0 %v2385
      %v2472 = vpop.f32.mrb[0].mxu0
      %v2473 = vadd.f32 0.0, %v2472
      %v2474 = vpop.f32.mrb[0].mxu0
      %v2475 = vpop.f32.mrb[0].mxu0
      %v2476 = vpop.f32.mrb[0].mxu0
      %2477 = vdwg.mxu0
      %v2478 = vadd.f32 %v2331, %v2425
      %v2479 = vadd.f32 %v2332, %v2428
      %v2480 = vadd.f32 %v2333, %v2433
      %v2481 = vadd.f32 %v2334, %v2436
      %v2482 = vadd.f32 %v2335, %v2441
      %v2483 = vadd.f32 %v2336, %v2444
      %v2484 = vadd.f32 %v2337, %v2449
      %v2485 = vadd.f32 %v2338, %v2452
      %v2486 = vadd.f32 %v2339, %v2457
      %v2487 = vadd.f32 %v2340, %v2460
      %v2488 = vadd.f32 %v2341, %v2465
      %v2489 = vadd.f32 %v2342, %v2468
      %v2490 = vadd.f32 %v2343, %v2473
      %v2491 = vld [vmem:[%s1226 + $0x10] sm:$0xff]
      %v2492 = vld [vmem:[%s1226 + $0x18] sm:$0xff]
      %v2493 = vld [vmem:[%s1226 + $0x20] sm:$0xff]
      %v2494 = vld [vmem:[%s1226 + $0x28] sm:$0xff]
      %v2495 = vld [vmem:[%s1226 + $0x30] sm:$0xff]
      %v2496 = vld [vmem:[%s1226 + $0x38] sm:$0xff]
      %v2497 = vld [vmem:[%s1226 + $0x40] sm:$0xff]
      %v2498 = vld [vmem:[%s1226 + $0x48] sm:$0xff]
      %v2499 = vld [vmem:[%s1226 + $0x50] sm:$0xff]
      %v2500 = vld [vmem:[%s1226 + $0x58] sm:$0xff]
      %v2501 = vld [vmem:[%s1226 + $0x60] sm:$0xff]
      %v2502 = vld [vmem:[%s1226 + $0x68] sm:$0xff]
      %v2503 = vld [vmem:[%s1226 + $0x70] sm:$0xf]
      %v2504 = vpack.c.bf16 %v2492, %v2491
      %v2505 = vpack.c.bf16 %v2494, %v2493
      %v2506 = vpack.c.bf16 %v2496, %v2495
      %v2507 = vpack.c.bf16 %v2498, %v2497
      %v2508 = vpack.c.bf16 %v2500, %v2499
      %v2509 = vpack.c.bf16 %v2502, %v2501
      %v2510 = vpack.c.bf16 %v2503, %v2503
      %s2511 = scalar_lea.vmem %s4, 28
      %v2512 = vld [vmem:[%s2511] sm:$0xf]
      %v2514 = vsel %vm350, %v2504, 0
      %v2517 = vsel %vm350, %v2505, 0
      %v2520 = vsel %vm350, %v2506, 0
      %v2523 = vsel %vm350, %v2507, 0
      %v2526 = vsel %vm350, %v2508, 0
      %v2529 = vsel %vm350, %v2509, 0
      %v2532 = vsel %vm350, %v2510, 0
      %v2535 = vsel %vm1552, %v2512, 0
      %2537 = vmatprep.subr.bf16.mxu0 0
      %2538 = vmatpush1.bf16.msra.mxu0 %v2535
      %2539 = vmatprep.subr.bf16.mxu0 0
      %2540 = vmatpush1.bf16.msra.mxu0 0
      %2541 = vmatprep.subr.bf16.mxu0 0
      %2542 = vmatpush1.bf16.msra.mxu0 0
      %2543 = vmatprep.subr.bf16.mxu0 0
      %2544 = vmatpush1.bf16.msra.mxu0 0
      %2545 = vmatprep.subr.bf16.mxu0 0
      %2546 = vmatpush1.bf16.msra.mxu0 0
      %2547 = vmatprep.subr.bf16.mxu0 0
      %2548 = vmatpush1.bf16.msra.mxu0 0
      %2549 = vmatprep.subr.bf16.mxu0 0
      %2550 = vmatpush1.bf16.msra.mxu0 0
      %2551 = vmatprep.subr.bf16.mxu0 0
      %2552 = vmatpush1.bf16.msra.mxu0 0
      %2553 = vmatprep.subr.bf16.mxu0 0
      %2554 = vmatpush1.bf16.msra.mxu0 0
      %2555 = vmatprep.subr.bf16.mxu0 0
      %2556 = vmatpush1.bf16.msra.mxu0 0
      %2557 = vmatprep.subr.bf16.mxu0 0
      %2558 = vmatpush1.bf16.msra.mxu0 0
      %2559 = vmatprep.subr.bf16.mxu0 0
      %2560 = vmatpush1.bf16.msra.mxu0 0
      %2561 = vmatprep.subr.bf16.mxu0 0
      %2562 = vmatpush1.bf16.msra.mxu0 0
      %2563 = vmatprep.subr.bf16.mxu0 0
      %2564 = vmatpush1.bf16.msra.mxu0 0
      %2565 = vmatprep.subr.bf16.mxu0 0
      %2566 = vmatpush1.bf16.msra.mxu0 0
      %2567 = vmatprep.subr.bf16.mxu0 0
      %2568 = vmatpush1.bf16.msra.mxu0 0
      %2569 = vmatprep.mubr.bf16.mxu0 0
      %2570 = vmatmul.mubr.bf16.gmra.mrb[0].mxu0 %v2514
      %v2571 = vpop.f32.mrb[0].mxu0
      %v2572 = vadd.f32 0.0, %v2571
      %v2573 = vpop.f32.mrb[0].mxu0
      %v2574 = vpop.f32.mrb[0].mxu0
      %v2575 = vadd.f32 0.0, %v2574
      %v2576 = vpop.f32.mrb[0].mxu0
      %2577 = vmatprep.mubr.bf16.mxu0 0
      %2578 = vmatmul.mubr.bf16.gmra.mrb[0].mxu0 %v2517
      %v2579 = vpop.f32.mrb[0].mxu0
      %v2580 = vadd.f32 0.0, %v2579
      %v2581 = vpop.f32.mrb[0].mxu0
      %v2582 = vpop.f32.mrb[0].mxu0
      %v2583 = vadd.f32 0.0, %v2582
      %v2584 = vpop.f32.mrb[0].mxu0
      %2585 = vmatprep.mubr.bf16.mxu0 0
      %2586 = vmatmul.mubr.bf16.gmra.mrb[0].mxu0 %v2520
      %v2587 = vpop.f32.mrb[0].mxu0
      %v2588 = vadd.f32 0.0, %v2587
      %v2589 = vpop.f32.mrb[0].mxu0
      %v2590 = vpop.f32.mrb[0].mxu0
      %v2591 = vadd.f32 0.0, %v2590
      %v2592 = vpop.f32.mrb[0].mxu0
      %2593 = vmatprep.mubr.bf16.mxu0 0
      %2594 = vmatmul.mubr.bf16.gmra.mrb[0].mxu0 %v2523
      %v2595 = vpop.f32.mrb[0].mxu0
      %v2596 = vadd.f32 0.0, %v2595
      %v2597 = vpop.f32.mrb[0].mxu0
      %v2598 = vpop.f32.mrb[0].mxu0
      %v2599 = vadd.f32 0.0, %v2598
      %v2600 = vpop.f32.mrb[0].mxu0
      %2601 = vmatprep.mubr.bf16.mxu0 0
      %2602 = vmatmul.mubr.bf16.gmra.mrb[0].mxu0 %v2526
      %v2603 = vpop.f32.mrb[0].mxu0
      %v2604 = vadd.f32 0.0, %v2603
      %v2605 = vpop.f32.mrb[0].mxu0
      %v2606 = vpop.f32.mrb[0].mxu0
      %v2607 = vadd.f32 0.0, %v2606
      %v2608 = vpop.f32.mrb[0].mxu0
      %2609 = vmatprep.mubr.bf16.mxu0 0
      %2610 = vmatmul.mubr.bf16.gmra.mrb[0].mxu0 %v2529
      %v2611 = vpop.f32.mrb[0].mxu0
      %v2612 = vadd.f32 0.0, %v2611
      %v2613 = vpop.f32.mrb[0].mxu0
      %v2614 = vpop.f32.mrb[0].mxu0
      %v2615 = vadd.f32 0.0, %v2614
      %v2616 = vpop.f32.mrb[0].mxu0
      %2617 = vmatprep.mubr.bf16.mxu0 0
      %2618 = vmatmul.mubr.bf16.gmra.mrb[0].mxu0 %v2532
      %v2619 = vpop.f32.mrb[0].mxu0
      %v2620 = vadd.f32 0.0, %v2619
      %v2621 = vpop.f32.mrb[0].mxu0
      %v2622 = vpop.f32.mrb[0].mxu0
      %v2623 = vpop.f32.mrb[0].mxu0
      %2624 = vdwg.mxu0
      %v2625 = vadd.f32 %v2478, %v2572
      %v2626 = vadd.f32 %v2479, %v2575
      %v2627 = vadd.f32 %v2480, %v2580
      %v2628 = vadd.f32 %v2481, %v2583
      %v2629 = vadd.f32 %v2482, %v2588
      %v2630 = vadd.f32 %v2483, %v2591
      %v2631 = vadd.f32 %v2484, %v2596
      %v2632 = vadd.f32 %v2485, %v2599
      %v2633 = vadd.f32 %v2486, %v2604
      %v2634 = vadd.f32 %v2487, %v2607
      %v2635 = vadd.f32 %v2488, %v2612
      %v2636 = vadd.f32 %v2489, %v2615
      %v2637 = vadd.f32 %v2490, %v2620
      %v2638 = vld [vmem:[%s1474 + $0x10] sm:$0xff]
      %v2639 = vld [vmem:[%s1474 + $0x18] sm:$0xff]
      %v2640 = vld [vmem:[%s1474 + $0x20] sm:$0xff]
      %v2641 = vld [vmem:[%s1474 + $0x28] sm:$0xff]
      %v2642 = vld [vmem:[%s1474 + $0x30] sm:$0xff]
      %v2643 = vld [vmem:[%s1474 + $0x38] sm:$0xff]
      %v2644 = vld [vmem:[%s1474 + $0x40] sm:$0xff]
      %v2645 = vld [vmem:[%s1474 + $0x48] sm:$0xff]
      %v2646 = vld [vmem:[%s1474 + $0x50] sm:$0xff]
      %v2647 = vld [vmem:[%s1474 + $0x58] sm:$0xff]
      %v2648 = vld [vmem:[%s1474 + $0x60] sm:$0xff]
      %v2649 = vld [vmem:[%s1474 + $0x68] sm:$0xff]
      %v2650 = vld [vmem:[%s1474 + $0x70] sm:$0xf]
      %v2651 = vpack.c.bf16 %v2639, %v2638
      %v2652 = vpack.c.bf16 %v2641, %v2640
      %v2653 = vpack.c.bf16 %v2643, %v2642
      %v2654 = vpack.c.bf16 %v2645, %v2644
      %v2655 = vpack.c.bf16 %v2647, %v2646
      %v2656 = vpack.c.bf16 %v2649, %v2648
      %v2657 = vpack.c.bf16 %v2650, %v2650
      %s2658 = scalar_lea.vmem %s4, 32
      %v2659 = vld [vmem:[%s2658] sm:$0xf]
      %v2661 = vsel %vm350, %v2651, 0
      %v2664 = vsel %vm350, %v2652, 0
      %v2667 = vsel %vm350, %v2653, 0
      %v2670 = vsel %vm350, %v2654, 0
      %v2673 = vsel %vm350, %v2655, 0
      %v2676 = vsel %vm350, %v2656, 0
      %v2679 = vsel %vm350, %v2657, 0
      %v2682 = vsel %vm1552, %v2659, 0
      %2684 = vmatprep.subr.bf16.mxu0 0
      %2685 = vmatpush1.bf16.msra.mxu0 %v2682
      %2686 = vmatprep.subr.bf16.mxu0 0
      %2687 = vmatpush1.bf16.msra.mxu0 0
      %2688 = vmatprep.subr.bf16.mxu0 0
      %2689 = vmatpush1.bf16.msra.mxu0 0
      %2690 = vmatprep.subr.bf16.mxu0 0
      %2691 = vmatpush1.bf16.msra.mxu0 0
      %2692 = vmatprep.subr.bf16.mxu0 0
      %2693 = vmatpush1.bf16.msra.mxu0 0
      %2694 = vmatprep.subr.bf16.mxu0 0
      %2695 = vmatpush1.bf16.msra.mxu0 0
      %2696 = vmatprep.subr.bf16.mxu0 0
      %2697 = vmatpush1.bf16.msra.mxu0 0
      %2698 = vmatprep.subr.bf16.mxu0 0
      %2699 = vmatpush1.bf16.msra.mxu0 0
      %2700 = vmatprep.subr.bf16.mxu0 0
      %2701 = vmatpush1.bf16.msra.mxu0 0
      %2702 = vmatprep.subr.bf16.mxu0 0
      %2703 = vmatpush1.bf16.msra.mxu0 0
      %2704 = vmatprep.subr.bf16.mxu0 0
      %2705 = vmatpush1.bf16.msra.mxu0 0
      %2706 = vmatprep.subr.bf16.mxu0 0
      %2707 = vmatpush1.bf16.msra.mxu0 0
      %2708 = vmatprep.subr.bf16.mxu0 0
      %2709 = vmatpush1.bf16.msra.mxu0 0
      %2710 = vmatprep.subr.bf16.mxu0 0
      %2711 = vmatpush1.bf16.msra.mxu0 0
      %2712 = vmatprep.subr.bf16.mxu0 0
      %2713 = vmatpush1.bf16.msra.mxu0 0
      %2714 = vmatprep.subr.bf16.mxu0 0
      %2715 = vmatpush1.bf16.msra.mxu0 0
      %2716 = vmatprep.mubr.bf16.mxu0 0
      %2717 = vmatmul.mubr.bf16.gmra.mrb[0].mxu0 %v2661
      %v2718 = vpop.f32.mrb[0].mxu0
      %v2719 = vadd.f32 0.0, %v2718
      %v2720 = vpop.f32.mrb[0].mxu0
      %v2721 = vpop.f32.mrb[0].mxu0
      %v2722 = vadd.f32 0.0, %v2721
      %v2723 = vpop.f32.mrb[0].mxu0
      %2724 = vmatprep.mubr.bf16.mxu0 0
      %2725 = vmatmul.mubr.bf16.gmra.mrb[0].mxu0 %v2664
      %v2726 = vpop.f32.mrb[0].mxu0
      %v2727 = vadd.f32 0.0, %v2726
      %v2728 = vpop.f32.mrb[0].mxu0
      %v2729 = vpop.f32.mrb[0].mxu0
      %v2730 = vadd.f32 0.0, %v2729
      %v2731 = vpop.f32.mrb[0].mxu0
      %2732 = vmatprep.mubr.bf16.mxu0 0
      %2733 = vmatmul.mubr.bf16.gmra.mrb[0].mxu0 %v2667
      %v2734 = vpop.f32.mrb[0].mxu0
      %v2735 = vadd.f32 0.0, %v2734
      %v2736 = vpop.f32.mrb[0].mxu0
      %v2737 = vpop.f32.mrb[0].mxu0
      %v2738 = vadd.f32 0.0, %v2737
      %v2739 = vpop.f32.mrb[0].mxu0
      %2740 = vmatprep.mubr.bf16.mxu0 0
      %2741 = vmatmul.mubr.bf16.gmra.mrb[0].mxu0 %v2670
      %v2742 = vpop.f32.mrb[0].mxu0
      %v2743 = vadd.f32 0.0, %v2742
      %v2744 = vpop.f32.mrb[0].mxu0
      %v2745 = vpop.f32.mrb[0].mxu0
      %v2746 = vadd.f32 0.0, %v2745
      %v2747 = vpop.f32.mrb[0].mxu0
      %2748 = vmatprep.mubr.bf16.mxu0 0
      %2749 = vmatmul.mubr.bf16.gmra.mrb[0].mxu0 %v2673
      %v2750 = vpop.f32.mrb[0].mxu0
      %v2751 = vadd.f32 0.0, %v2750
      %v2752 = vpop.f32.mrb[0].mxu0
      %v2753 = vpop.f32.mrb[0].mxu0
      %v2754 = vadd.f32 0.0, %v2753
      %v2755 = vpop.f32.mrb[0].mxu0
      %2756 = vmatprep.mubr.bf16.mxu0 0
      %2757 = vmatmul.mubr.bf16.gmra.mrb[0].mxu0 %v2676
      %v2758 = vpop.f32.mrb[0].mxu0
      %v2759 = vadd.f32 0.0, %v2758
      %v2760 = vpop.f32.mrb[0].mxu0
      %v2761 = vpop.f32.mrb[0].mxu0
      %v2762 = vadd.f32 0.0, %v2761
      %v2763 = vpop.f32.mrb[0].mxu0
      %2764 = vmatprep.mubr.bf16.mxu0 0
      %2765 = vmatmul.mubr.bf16.gmra.mrb[0].mxu0 %v2679
      %v2766 = vpop.f32.mrb[0].mxu0
      %v2767 = vadd.f32 0.0, %v2766
      %v2768 = vpop.f32.mrb[0].mxu0
      %v2769 = vpop.f32.mrb[0].mxu0
      %v2770 = vpop.f32.mrb[0].mxu0
      %2771 = vdwg.mxu0
      %v2772 = vadd.f32 %v2625, %v2719
      %v2773 = vadd.f32 %v2626, %v2722
      %v2774 = vadd.f32 %v2627, %v2727
      %v2775 = vadd.f32 %v2628, %v2730
      %v2776 = vadd.f32 %v2629, %v2735
      %v2777 = vadd.f32 %v2630, %v2738
      %v2778 = vadd.f32 %v2631, %v2743
      %v2779 = vadd.f32 %v2632, %v2746
      %v2780 = vadd.f32 %v2633, %v2751
      %v2781 = vadd.f32 %v2634, %v2754
      %v2782 = vadd.f32 %v2635, %v2759
      %v2783 = vadd.f32 %v2636, %v2762
      %v2784 = vadd.f32 %v2637, %v2767
      %v2785 = vld [vmem:[%s5] sm:$0x1]
      %v2787 = vlaneseq
      %v2788 = vshrl.u32 %v2787, 7
      %v2789 = vsub.s32 0, %v2788
      %v2790 = vrot.slane %v2785, %v2789
      %v2792 = vadd.f32 %v2772, %v2790
      %v2793 = vadd.f32 %v2773, %v2790
      %v2794 = vadd.f32 %v2774, %v2790
      %v2795 = vadd.f32 %v2775, %v2790
      %v2796 = vadd.f32 %v2776, %v2790
      %v2797 = vadd.f32 %v2777, %v2790
      %v2798 = vadd.f32 %v2778, %v2790
      %v2799 = vadd.f32 %v2779, %v2790
      %v2800 = vadd.f32 %v2780, %v2790
      %v2801 = vadd.f32 %v2781, %v2790
      %v2802 = vadd.f32 %v2782, %v2790
      %v2803 = vadd.f32 %v2783, %v2790
      %v2804 = vadd.f32 %v2784, %v2790
      %vm2805 = vcmp.ge.f32.partialorder %v2792, 0.0
      %vm2806 = vcmp.ge.f32.partialorder %v2793, 0.0
      %vm2807 = vcmp.ge.f32.partialorder %v2794, 0.0
      %vm2808 = vcmp.ge.f32.partialorder %v2795, 0.0
      %vm2809 = vcmp.ge.f32.partialorder %v2796, 0.0
      %vm2810 = vcmp.ge.f32.partialorder %v2797, 0.0
      %vm2811 = vcmp.ge.f32.partialorder %v2798, 0.0
      %vm2812 = vcmp.ge.f32.partialorder %v2799, 0.0
      %vm2813 = vcmp.ge.f32.partialorder %v2800, 0.0
      %vm2814 = vcmp.ge.f32.partialorder %v2801, 0.0
      %vm2815 = vcmp.ge.f32.partialorder %v2802, 0.0
      %vm2816 = vcmp.ge.f32.partialorder %v2803, 0.0
      %vm2817 = vcmp.ge.f32.partialorder %v2804, 0.0
      %v2818 = vmul.f32 %v2792, 0.01
      %v2819 = vmul.f32 %v2793, 0.01
      %v2820 = vmul.f32 %v2794, 0.01
      %v2821 = vmul.f32 %v2795, 0.01
      %v2822 = vmul.f32 %v2796, 0.01
      %v2823 = vmul.f32 %v2797, 0.01
      %v2824 = vmul.f32 %v2798, 0.01
      %v2825 = vmul.f32 %v2799, 0.01
      %v2826 = vmul.f32 %v2800, 0.01
      %v2827 = vmul.f32 %v2801, 0.01
      %v2828 = vmul.f32 %v2802, 0.01
      %v2829 = vmul.f32 %v2803, 0.01
      %v2830 = vmul.f32 %v2804, 0.01
      %v2831 = vsel %vm2805, %v2792, %v2818
      %v2832 = vsel %vm2806, %v2793, %v2819
      %v2833 = vsel %vm2807, %v2794, %v2820
      %v2834 = vsel %vm2808, %v2795, %v2821
      %v2835 = vsel %vm2809, %v2796, %v2822
      %v2836 = vsel %vm2810, %v2797, %v2823
      %v2837 = vsel %vm2811, %v2798, %v2824
      %v2838 = vsel %vm2812, %v2799, %v2825
      %v2839 = vsel %vm2813, %v2800, %v2826
      %v2840 = vsel %vm2814, %v2801, %v2827
      %v2841 = vsel %vm2815, %v2802, %v2828
      %v2842 = vsel %vm2816, %v2803, %v2829
      %v2843 = vsel %vm2817, %v2804, %v2830
      %v2844 = vpack.c.bf16 %v2832, %v2831
      %v2845 = vpack.c.bf16 %v2834, %v2833
      %v2846 = vpack.c.bf16 %v2836, %v2835
      %v2847 = vpack.c.bf16 %v2838, %v2837
      %v2848 = vpack.c.bf16 %v2840, %v2839
      %v2849 = vpack.c.bf16 %v2842, %v2841
      %v2850 = vpack.c.bf16 %v2843, %v2843
      %v2851 = vld [vmem:[%s6] sm:$0xf]
      %v2852 = vld [vmem:[%s7] sm:$0x1]
      %v2854 = vlaneseq
      %v2855 = vshrl.u32 %v2854, 7
      %v2856 = vsub.s32 0, %v2855
      %v2857 = vrot.slane %v2852, %v2856
      %v2860 = vsel %vm350, %v2844, 0
      %v2863 = vsel %vm350, %v2845, 0
      %v2866 = vsel %vm350, %v2846, 0
      %v2869 = vsel %vm350, %v2847, 0
      %v2872 = vsel %vm350, %v2848, 0
      %v2875 = vsel %vm350, %v2849, 0
      %v2878 = vsel %vm350, %v2850, 0
      %v2881 = vsel %vm1552, %v2851, 0
      %2883 = vmatprep.subr.bf16.mxu0 0
      %2884 = vmatpush1.bf16.msra.mxu0 %v2881
      %2885 = vmatprep.subr.bf16.mxu0 0
      %2886 = vmatpush1.bf16.msra.mxu0 0
      %2887 = vmatprep.subr.bf16.mxu0 0
      %2888 = vmatpush1.bf16.msra.mxu0 0
      %2889 = vmatprep.subr.bf16.mxu0 0
      %2890 = vmatpush1.bf16.msra.mxu0 0
      %2891 = vmatprep.subr.bf16.mxu0 0
      %2892 = vmatpush1.bf16.msra.mxu0 0
      %2893 = vmatprep.subr.bf16.mxu0 0
      %2894 = vmatpush1.bf16.msra.mxu0 0
      %2895 = vmatprep.subr.bf16.mxu0 0
      %2896 = vmatpush1.bf16.msra.mxu0 0
      %2897 = vmatprep.subr.bf16.mxu0 0
      %2898 = vmatpush1.bf16.msra.mxu0 0
      %2899 = vmatprep.subr.bf16.mxu0 0
      %2900 = vmatpush1.bf16.msra.mxu0 0
      %2901 = vmatprep.subr.bf16.mxu0 0
      %2902 = vmatpush1.bf16.msra.mxu0 0
      %2903 = vmatprep.subr.bf16.mxu0 0
      %2904 = vmatpush1.bf16.msra.mxu0 0
      %2905 = vmatprep.subr.bf16.mxu0 0
      %2906 = vmatpush1.bf16.msra.mxu0 0
      %2907 = vmatprep.subr.bf16.mxu0 0
      %2908 = vmatpush1.bf16.msra.mxu0 0
      %2909 = vmatprep.subr.bf16.mxu0 0
      %2910 = vmatpush1.bf16.msra.mxu0 0
      %2911 = vmatprep.subr.bf16.mxu0 0
      %2912 = vmatpush1.bf16.msra.mxu0 0
      %2913 = vmatprep.subr.bf16.mxu0 0
      %2914 = vmatpush1.bf16.msra.mxu0 0
      %2915 = vmatprep.mubr.bf16.mxu0 0
      %2916 = vmatmul.mubr.bf16.gmra.mrb[0].mxu0 %v2860
      %v2917 = vpop.f32.mrb[0].mxu0
      %v2918 = vadd.f32 %v2857, %v2917
      %v2919 = vpop.f32.mrb[0].mxu0
      %v2920 = vpop.f32.mrb[0].mxu0
      %v2921 = vadd.f32 %v2857, %v2920
      %v2922 = vpop.f32.mrb[0].mxu0
      %2923 = vmatprep.mubr.bf16.mxu0 0
      %2924 = vmatmul.mubr.bf16.gmra.mrb[0].mxu0 %v2863
      %v2925 = vpop.f32.mrb[0].mxu0
      %v2926 = vadd.f32 %v2857, %v2925
      %v2927 = vpop.f32.mrb[0].mxu0
      %v2928 = vpop.f32.mrb[0].mxu0
      %v2929 = vadd.f32 %v2857, %v2928
      %v2930 = vpop.f32.mrb[0].mxu0
      %2931 = vmatprep.mubr.bf16.mxu0 0
      %2932 = vmatmul.mubr.bf16.gmra.mrb[0].mxu0 %v2866
      %v2933 = vpop.f32.mrb[0].mxu0
      %v2934 = vadd.f32 %v2857, %v2933
      %v2935 = vpop.f32.mrb[0].mxu0
      %v2936 = vpop.f32.mrb[0].mxu0
      %v2937 = vadd.f32 %v2857, %v2936
      %v2938 = vpop.f32.mrb[0].mxu0
      %2939 = vmatprep.mubr.bf16.mxu0 0
      %2940 = vmatmul.mubr.bf16.gmra.mrb[0].mxu0 %v2869
      %v2941 = vpop.f32.mrb[0].mxu0
      %v2942 = vadd.f32 %v2857, %v2941
      %v2943 = vpop.f32.mrb[0].mxu0
      %v2944 = vpop.f32.mrb[0].mxu0
      %v2945 = vadd.f32 %v2857, %v2944
      %v2946 = vpop.f32.mrb[0].mxu0
      %2947 = vmatprep.mubr.bf16.mxu0 0
      %2948 = vmatmul.mubr.bf16.gmra.mrb[0].mxu0 %v2872
      %v2949 = vpop.f32.mrb[0].mxu0
      %v2950 = vadd.f32 %v2857, %v2949
      %v2951 = vpop.f32.mrb[0].mxu0
      %v2952 = vpop.f32.mrb[0].mxu0
      %v2953 = vadd.f32 %v2857, %v2952
      %v2954 = vpop.f32.mrb[0].mxu0
      %2955 = vmatprep.mubr.bf16.mxu0 0
      %2956 = vmatmul.mubr.bf16.gmra.mrb[0].mxu0 %v2875
      %v2957 = vpop.f32.mrb[0].mxu0
      %v2958 = vadd.f32 %v2857, %v2957
      %v2959 = vpop.f32.mrb[0].mxu0
      %v2960 = vpop.f32.mrb[0].mxu0
      %v2961 = vadd.f32 %v2857, %v2960
      %v2962 = vpop.f32.mrb[0].mxu0
      %2963 = vmatprep.mubr.bf16.mxu0 0
      %2964 = vmatmul.mubr.bf16.gmra.mrb[0].mxu0 %v2878
      %v2965 = vpop.f32.mrb[0].mxu0
      %v2966 = vadd.f32 %v2857, %v2965
      %v2967 = vpop.f32.mrb[0].mxu0
      %v2968 = vpop.f32.mrb[0].mxu0
      %v2969 = vpop.f32.mrb[0].mxu0
      %2970 = vdwg.mxu0
      %v2971 = vld [vmem:[%s8] sm:$0xff]
      %v2972 = vld [vmem:[%s8 + $0x8] sm:$0xff]
      %v2974 = vsel %vm504, %v1267, 0
      %v2977 = vsel %vm504, %v1268, 0
      %v2980 = vsel %vm504, %v1269, 0
      %v2983 = vsel %vm504, %v1270, 0
      %v2986 = vsel %vm504, %v1271, 0
      %v2989 = vsel %vm504, %v1272, 0
      %v2992 = vsel %vm504, %v1273, 0
      %v2995 = vsel %vm504, %v1274, 0
      %v2998 = vsel %vm504, %v1275, 0
      %v3001 = vsel %vm504, %v1276, 0
      %v3004 = vsel %vm504, %v1277, 0
      %v3007 = vsel %vm504, %v1278, 0
      %v3010 = vsel %vm504, %v1279, 0
      %3012 = vmatprep.subr.mxu0 0.0
      %3013 = vmatpush1.msra.mxu0 %v2971
      %3014 = vmatprep.subr.mxu0 0.0
      %3015 = vmatpush1.msra.mxu0 %v2972
      %3016 = vmatprep.subr.mxu0 0.0
      %3017 = vmatpush1.msra.mxu0 0.0
      %3018 = vmatprep.subr.mxu0 0.0
      %3019 = vmatpush1.msra.mxu0 0.0
      %3020 = vmatprep.subr.mxu0 0.0
      %3021 = vmatpush1.msra.mxu0 0.0
      %3022 = vmatprep.subr.mxu0 0.0
      %3023 = vmatpush1.msra.mxu0 0.0
      %3024 = vmatprep.subr.mxu0 0.0
      %3025 = vmatpush1.msra.mxu0 0.0
      %3026 = vmatprep.subr.mxu0 0.0
      %3027 = vmatpush1.msra.mxu0 0.0
      %3028 = vmatprep.subr.mxu0 0.0
      %3029 = vmatpush1.msra.mxu0 0.0
      %3030 = vmatprep.subr.mxu0 0.0
      %3031 = vmatpush1.msra.mxu0 0.0
      %3032 = vmatprep.subr.mxu0 0.0
      %3033 = vmatpush1.msra.mxu0 0.0
      %3034 = vmatprep.subr.mxu0 0.0
      %3035 = vmatpush1.msra.mxu0 0.0
      %3036 = vmatprep.subr.mxu0 0.0
      %3037 = vmatpush1.msra.mxu0 0.0
      %3038 = vmatprep.subr.mxu0 0.0
      %3039 = vmatpush1.msra.mxu0 0.0
      %3040 = vmatprep.subr.mxu0 0.0
      %3041 = vmatpush1.msra.mxu0 0.0
      %3042 = vmatprep.subr.mxu0 0.0
      %3043 = vmatpush1.msra.mxu0 0.0
      %3044 = vmatprep.subr.mxu0 0.0
      %3045 = vmatpush1.msra.mxu0 0.0
      %3046 = vmatprep.subr.mxu0 0.0
      %3047 = vmatpush1.msra.mxu0 0.0
      %3048 = vmatprep.subr.mxu0 0.0
      %3049 = vmatpush1.msra.mxu0 0.0
      %3050 = vmatprep.subr.mxu0 0.0
      %3051 = vmatpush1.msra.mxu0 0.0
      %3052 = vmatprep.subr.mxu0 0.0
      %3053 = vmatpush1.msra.mxu0 0.0
      %3054 = vmatprep.subr.mxu0 0.0
      %3055 = vmatpush1.msra.mxu0 0.0
      %3056 = vmatprep.subr.mxu0 0.0
      %3057 = vmatpush1.msra.mxu0 0.0
      %3058 = vmatprep.subr.mxu0 0.0
      %3059 = vmatpush1.msra.mxu0 0.0
      %3060 = vmatprep.subr.mxu0 0.0
      %3061 = vmatpush1.msra.mxu0 0.0
      %3062 = vmatprep.subr.mxu0 0.0
      %3063 = vmatpush1.msra.mxu0 0.0
      %3064 = vmatprep.subr.mxu0 0.0
      %3065 = vmatpush1.msra.mxu0 0.0
      %3066 = vmatprep.subr.mxu0 0.0
      %3067 = vmatpush1.msra.mxu0 0.0
      %3068 = vmatprep.subr.mxu0 0.0
      %3069 = vmatpush1.msra.mxu0 0.0
      %3070 = vmatprep.subr.mxu0 0.0
      %3071 = vmatpush1.msra.mxu0 0.0
      %3072 = vmatprep.subr.mxu0 0.0
      %3073 = vmatpush1.msra.mxu0 0.0
      %3074 = vmatprep.subr.mxu0 0.0
      %3075 = vmatpush1.msra.mxu0 0.0
      %3076 = vmatprep.mubr.f32.mxu0 0.0
      %3077 = vmatmul.mubr.f32.gmra.mrb[0].mxu0 %v2974
      %v3078 = vpop.f32.mrb[0].mxu0
      %v3079 = vadd.f32 0.0, %v3078
      %v3080 = vpop.f32.mrb[0].mxu0
      %3081 = vmatprep.mubr.f32.mxu0 0.0
      %3082 = vmatmul.mubr.f32.gmra.mrb[0].mxu0 %v2977
      %v3083 = vpop.f32.mrb[0].mxu0
      %v3084 = vadd.f32 0.0, %v3083
      %v3085 = vpop.f32.mrb[0].mxu0
      %3086 = vmatprep.mubr.f32.mxu0 0.0
      %3087 = vmatmul.mubr.f32.gmra.mrb[0].mxu0 %v2980
      %v3088 = vpop.f32.mrb[0].mxu0
      %v3089 = vadd.f32 0.0, %v3088
      %v3090 = vpop.f32.mrb[0].mxu0
      %3091 = vmatprep.mubr.f32.mxu0 0.0
      %3092 = vmatmul.mubr.f32.gmra.mrb[0].mxu0 %v2983
      %v3093 = vpop.f32.mrb[0].mxu0
      %v3094 = vadd.f32 0.0, %v3093
      %v3095 = vpop.f32.mrb[0].mxu0
      %3096 = vmatprep.mubr.f32.mxu0 0.0
      %3097 = vmatmul.mubr.f32.gmra.mrb[0].mxu0 %v2986
      %v3098 = vpop.f32.mrb[0].mxu0
      %v3099 = vadd.f32 0.0, %v3098
      %v3100 = vpop.f32.mrb[0].mxu0
      %3101 = vmatprep.mubr.f32.mxu0 0.0
      %3102 = vmatmul.mubr.f32.gmra.mrb[0].mxu0 %v2989
      %v3103 = vpop.f32.mrb[0].mxu0
      %v3104 = vadd.f32 0.0, %v3103
      %v3105 = vpop.f32.mrb[0].mxu0
      %3106 = vmatprep.mubr.f32.mxu0 0.0
      %3107 = vmatmul.mubr.f32.gmra.mrb[0].mxu0 %v2992
      %v3108 = vpop.f32.mrb[0].mxu0
      %v3109 = vadd.f32 0.0, %v3108
      %v3110 = vpop.f32.mrb[0].mxu0
      %3111 = vmatprep.mubr.f32.mxu0 0.0
      %3112 = vmatmul.mubr.f32.gmra.mrb[0].mxu0 %v2995
      %v3113 = vpop.f32.mrb[0].mxu0
      %v3114 = vadd.f32 0.0, %v3113
      %v3115 = vpop.f32.mrb[0].mxu0
      %3116 = vmatprep.mubr.f32.mxu0 0.0
      %3117 = vmatmul.mubr.f32.gmra.mrb[0].mxu0 %v2998
      %v3118 = vpop.f32.mrb[0].mxu0
      %v3119 = vadd.f32 0.0, %v3118
      %v3120 = vpop.f32.mrb[0].mxu0
      %3121 = vmatprep.mubr.f32.mxu0 0.0
      %3122 = vmatmul.mubr.f32.gmra.mrb[0].mxu0 %v3001
      %v3123 = vpop.f32.mrb[0].mxu0
      %v3124 = vadd.f32 0.0, %v3123
      %v3125 = vpop.f32.mrb[0].mxu0
      %3126 = vmatprep.mubr.f32.mxu0 0.0
      %3127 = vmatmul.mubr.f32.gmra.mrb[0].mxu0 %v3004
      %v3128 = vpop.f32.mrb[0].mxu0
      %v3129 = vadd.f32 0.0, %v3128
      %v3130 = vpop.f32.mrb[0].mxu0
      %3131 = vmatprep.mubr.f32.mxu0 0.0
      %3132 = vmatmul.mubr.f32.gmra.mrb[0].mxu0 %v3007
      %v3133 = vpop.f32.mrb[0].mxu0
      %v3134 = vadd.f32 0.0, %v3133
      %v3135 = vpop.f32.mrb[0].mxu0
      %3136 = vmatprep.mubr.f32.mxu0 0.0
      %3137 = vmatmul.mubr.f32.gmra.mrb[0].mxu0 %v3010
      %v3138 = vpop.f32.mrb[0].mxu0
      %v3139 = vadd.f32 0.0, %v3138
      %v3140 = vpop.f32.mrb[0].mxu0
      %3141 = vdwg.mxu0
      %v3142 = vadd.f32 %v2918, %v3079
      %v3143 = vadd.f32 %v2921, %v3084
      %v3144 = vadd.f32 %v2926, %v3089
      %v3145 = vadd.f32 %v2929, %v3094
      %v3146 = vadd.f32 %v2934, %v3099
      %v3147 = vadd.f32 %v2937, %v3104
      %v3148 = vadd.f32 %v2942, %v3109
      %v3149 = vadd.f32 %v2945, %v3114
      %v3150 = vadd.f32 %v2950, %v3119
      %v3151 = vadd.f32 %v2953, %v3124
      %v3152 = vadd.f32 %v2958, %v3129
      %v3153 = vadd.f32 %v2961, %v3134
      %v3154 = vadd.f32 %v2966, %v3139
      %vm3155 = vcmp.ge.f32.partialorder %v3142, 0.0
      %vm3156 = vcmp.ge.f32.partialorder %v3143, 0.0
      %vm3157 = vcmp.ge.f32.partialorder %v3144, 0.0
      %vm3158 = vcmp.ge.f32.partialorder %v3145, 0.0
      %vm3159 = vcmp.ge.f32.partialorder %v3146, 0.0
      %vm3160 = vcmp.ge.f32.partialorder %v3147, 0.0
      %vm3161 = vcmp.ge.f32.partialorder %v3148, 0.0
      %vm3162 = vcmp.ge.f32.partialorder %v3149, 0.0
      %vm3163 = vcmp.ge.f32.partialorder %v3150, 0.0
      %vm3164 = vcmp.ge.f32.partialorder %v3151, 0.0
      %vm3165 = vcmp.ge.f32.partialorder %v3152, 0.0
      %vm3166 = vcmp.ge.f32.partialorder %v3153, 0.0
      %vm3167 = vcmp.ge.f32.partialorder %v3154, 0.0
      %v3168 = vmul.f32 %v3142, 0.01
      %v3169 = vmul.f32 %v3143, 0.01
      %v3170 = vmul.f32 %v3144, 0.01
      %v3171 = vmul.f32 %v3145, 0.01
      %v3172 = vmul.f32 %v3146, 0.01
      %v3173 = vmul.f32 %v3147, 0.01
      %v3174 = vmul.f32 %v3148, 0.01
      %v3175 = vmul.f32 %v3149, 0.01
      %v3176 = vmul.f32 %v3150, 0.01
      %v3177 = vmul.f32 %v3151, 0.01
      %v3178 = vmul.f32 %v3152, 0.01
      %v3179 = vmul.f32 %v3153, 0.01
      %v3180 = vmul.f32 %v3154, 0.01
      %v3181 = vsel %vm3155, %v3142, %v3168
      %v3182 = vsel %vm3156, %v3143, %v3169
      %v3183 = vsel %vm3157, %v3144, %v3170
      %v3184 = vsel %vm3158, %v3145, %v3171
      %v3185 = vsel %vm3159, %v3146, %v3172
      %v3186 = vsel %vm3160, %v3147, %v3173
      %v3187 = vsel %vm3161, %v3148, %v3174
      %v3188 = vsel %vm3162, %v3149, %v3175
      %v3189 = vsel %vm3163, %v3150, %v3176
      %v3190 = vsel %vm3164, %v3151, %v3177
      %v3191 = vsel %vm3165, %v3152, %v3178
      %v3192 = vsel %vm3166, %v3153, %v3179
      %v3193 = vsel %vm3167, %v3154, %v3180
      %vm3194 = vcmask 261120
      %3195 = vst.msk [vmem:[%s332] sm:$0xff] %vm3194, %v3181
      %3196 = vst.msk [vmem:[%s332 + $0x8] sm:$0xff] %vm3194, %v3182
      %3197 = vst.msk [vmem:[%s332 + $0x10] sm:$0xff] %vm3194, %v3183
      %3198 = vst.msk [vmem:[%s332 + $0x18] sm:$0xff] %vm3194, %v3184
      %3199 = vst.msk [vmem:[%s332 + $0x20] sm:$0xff] %vm3194, %v3185
      %3200 = vst.msk [vmem:[%s332 + $0x28] sm:$0xff] %vm3194, %v3186
      %3201 = vst.msk [vmem:[%s332 + $0x30] sm:$0xff] %vm3194, %v3187
      %3202 = vst.msk [vmem:[%s332 + $0x38] sm:$0xff] %vm3194, %v3188
      %3203 = vst.msk [vmem:[%s332 + $0x40] sm:$0xff] %vm3194, %v3189
      %3204 = vst.msk [vmem:[%s332 + $0x48] sm:$0xff] %vm3194, %v3190
      %3205 = vst.msk [vmem:[%s332 + $0x50] sm:$0xff] %vm3194, %v3191
      %3206 = vst.msk [vmem:[%s332 + $0x58] sm:$0xff] %vm3194, %v3192
      %vm3207 = vcmask 257024
      %3208 = vst.msk [vmem:[%s332 + $0x60] sm:$0xf] %vm3207, %v3193
      %p3209 = scmp.lt.s32.totalorder %s20, 1
      %s3210 = scalar_select %p3209, %s20, 1
      %s3211 = smul.addr %s3210, 13
      %s3212 = smul.addr %s3211, 8
      %s3213 = scalar_lea.vmem %s9, %s3212
      // Predicated region
      $region57: #{tpu_custom_call.1} parent=55 // pred_check
        %p3214 = pneg %p232
      $region58: #{tpu_custom_call.1} parent=55 // pred_check_branch
        %3216 = sbr.rel (%p3214) target = $region60
      $region59: #{tpu_custom_call.1} parent=55 // pred_region
        _
      $region60: #{tpu_custom_call.1} parent=55 // pred_fallthru
        _
    $region56: #{tpu_custom_call.1} parent=5 // pred_fallthru
      _
    %p3217 = scmp.le.s32.totalorder 2, %s15
    // Predicated region
    $region61: #{tpu_custom_call.1} parent=5 // pred_check
      %p3218 = pneg %p3217
    $region62: #{tpu_custom_call.1} parent=5 // pred_check_branch
      %3220 = sbr.rel (%p3218) target = $region64
    $region63: #{tpu_custom_call.1} parent=5 // pred_region
      %s3221 = ssub.s32 %s15, 2
      // Predicated region
      $region65: #{tpu_custom_call.1} parent=63 // pred_check
        %p3222 = pneg %p238
      $region66: #{tpu_custom_call.1} parent=63 // pred_check_branch
        %3224 = sbr.rel (%p3222) target = $region68
      $region67: #{tpu_custom_call.1} parent=63 // pred_region
        %p3225 = scmp.lt.s32.totalorder %s21, 1
        %s3226 = scalar_select %p3225, %s21, 1
        %s3227 = smul.addr %s3226, 13
        %s3228 = smul.addr %s3227, 8
        %s3229 = scalar_lea.vmem %s9, %s3228
      $region68: #{tpu_custom_call.1} parent=63 // pred_fallthru
        _
    $region64: #{tpu_custom_call.1} parent=5 // pred_fallthru
      _
  $region6: #{tpu_custom_call.1} parent=0 // loop_footer
    %s19 = sadd.s32 1, %s15
  $region7: #{tpu_custom_call.1} parent=0 // loop_footer_branch
    %14 = sbr.rel target = $region3
  $region8: #{tpu_custom_call.1} parent=0 // loop_exit
    _

</llo_original>
